<compile_context>
chip_gen: v6e
topology: v6e:2x2x1
jax: 0.10.0
libtpu: 0.0.40
codegen_flags: <defaults>
</compile_context>

<pallas_src>
import functools

import jax
import jax.numpy as jnp
from jax import lax
from jax.experimental import pallas as pl
from jax.experimental.pallas import tpu as pltpu


def _seq2seq_lstm_kernel(xp_ref, whh_e_ref, whh_d_ref, bd_ref, out_ref,
                         h_scr, c_scr, *, t_total, enc_unroll, dec_unroll):
    """Fused encoder+decoder LSTM recurrence (one batch block, one T-chunk).

    xp_ref:    (Tc, NB, 4*Hp) bf16  precomputed x @ W_ih^T + b_enc (i,f,g,o)
    whh_e_ref: (Hp, 4*Hp)     bf16  encoder W_hh^T
    whh_d_ref: (Hp, 4*Hp)     bf16  decoder W_hh^T
    bd_ref:    (1, 4*Hp)      f32   decoder bias (b_ih + b_hh)
    out_ref:   (L, NB, Hp)    f32   decoder hidden states, time-major
    h_scr/c_scr: (NB, Hp)     f32   recurrent state carried across T-chunks
    """
    tc = pl.program_id(1)
    n_tc = pl.num_programs(1)
    Tc = xp_ref.shape[0]
    L, NB, Hp = out_ref.shape
    mask_tail = (t_total % Tc) != 0        # static Python bool

    def lstm_cell(gates, c_prev):
        # Hp is a multiple of 128 -> these slices are vreg-aligned (no XLU).
        i_g = jax.nn.sigmoid(gates[:, 0 * Hp:1 * Hp])
        f_g = jax.nn.sigmoid(gates[:, 1 * Hp:2 * Hp])
        g_g = jnp.tanh(gates[:, 2 * Hp:3 * Hp])
        o_g = jax.nn.sigmoid(gates[:, 3 * Hp:4 * Hp])
        c_new = f_g * c_prev + i_g * g_g
        h_new = o_g * jnp.tanh(c_new)
        return h_new, c_new

    @pl.when(tc == 0)
    def _():
        h_scr[...] = jnp.zeros_like(h_scr)
        c_scr[...] = jnp.zeros_like(c_scr)

    t0 = tc * Tc

    # ---- encoder: roll over this chunk's precomputed gate inputs ----
    def enc_step(t, carry):
        h, c = carry
        # W_hh^T is read from its VMEM ref inside the dot (no long-lived
        # 32-vreg value spanning both recurrences -> no spill traffic).
        gates = xp_ref[t].astype(jnp.float32) + jnp.dot(
            h.astype(jnp.bfloat16), whh_e_ref[...],
            preferred_element_type=jnp.float32)
        h_new, c_new = lstm_cell(gates, c)
        if mask_tail:
            valid = (t0 + t) < t_total
            h_new = jnp.where(valid, h_new, h)
            c_new = jnp.where(valid, c_new, c)
        return h_new, c_new

    h, c = lax.fori_loop(0, Tc, enc_step, (h_scr[...], c_scr[...]),
                         unroll=enc_unroll)
    h_scr[...] = h
    c_scr[...] = c

    # ---- decoder (only after the last encoder chunk) ----
    @pl.when(tc == n_tc - 1)
    def _():
        # Hoisted out of the unrolled loop: JAX does not CSE broadcast_in_dim.
        b_dec = jnp.broadcast_to(bd_ref[...], (NB, 4 * Hp))

        def dec_step(t, carry):
            hh, cc = carry
            gates = b_dec + jnp.dot(hh.astype(jnp.bfloat16), whh_d_ref[...],
                                    preferred_element_type=jnp.float32)
            hh, cc = lstm_cell(gates, cc)
            out_ref[t] = hh.astype(out_ref.dtype)
            return (hh, cc)

        # Decoder: input_size == 0, initial state (h_enc, zeros).
        lax.fori_loop(0, L, dec_step,
                      (h, jnp.zeros((NB, Hp), jnp.float32)),
                      unroll=dec_unroll)


def _round_up(x, m):
    return ((x + m - 1) // m) * m


def _cdiv(a, b):
    return -(-a // b)


def _pad_gate_rows(w, H, H_pad):
    """Pad a (4H, K) gate-stacked matrix to (4*H_pad, K), per gate block."""
    K = w.shape[1]
    w4 = jnp.pad(w.reshape(4, H, K), ((0, 0), (0, H_pad - H), (0, 0)))
    return w4.reshape(4 * H_pad, K)


def _pad_gate_vec(b, H, H_pad):
    return jnp.pad(b.reshape(4, H), ((0, 0), (0, H_pad - H))).reshape(4 * H_pad)


@functools.partial(jax.jit, static_argnames=("num_step",))
def seq2seq_lstm(x, enc_w_ih, enc_w_hh, enc_b_ih, enc_b_hh,
                 dec_w_hh, dec_b_ih, dec_b_hh, *, num_step):
    """Seq2seq forward (encoder LSTM over time T, decoder LSTM for num_step).

    x: (*batch, C, T) float32. Returns (*batch, H, num_step) float32.
    """
    batch_shape = x.shape[:-2]
    C, T = x.shape[-2:]
    x2 = x.reshape(-1, C, T)
    N = x2.shape[0]
    H = enc_w_hh.shape[1]
    L = int(num_step)

    H_pad = _round_up(max(H, 128), 128)    # lane granularity -> aligned gates
    Hp4 = 4 * H_pad

    # Batch padding; split across two blocks (-> two TCs on v7x) only when the
    # padded batch is large enough to make it worthwhile.
    N_pad = _round_up(max(N, 8), 8)
    if N_pad >= 16:
        NB = _round_up(_cdiv(N_pad, 2), 8)
        N_pad = 2 * NB
    else:
        NB = N_pad
    n_nb = N_pad // NB

    # T-chunking: bounds the VMEM-resident xp block and overlaps its DMA with
    # the recurrence of the previous chunk.
    T_CHUNK = 64
    Tc = min(T, T_CHUNK)
    n_tc = _cdiv(T, Tc)
    T_pad = n_tc * Tc

    # --- pad parameters into the (i,f,g,o) x H_pad layout (zero padding keeps
    #     padded hidden units identically zero, so results are unchanged) ---
    wih_p = _pad_gate_rows(enc_w_ih, H, H_pad)                         # (4Hp, C)
    whh_e_p = jnp.pad(_pad_gate_rows(enc_w_hh, H, H_pad),
                      ((0, 0), (0, H_pad - H)))                        # (4Hp, Hp)
    whh_d_p = jnp.pad(_pad_gate_rows(dec_w_hh, H, H_pad),
                      ((0, 0), (0, H_pad - H)))                        # (4Hp, Hp)
    b_enc = _pad_gate_vec(enc_b_ih + enc_b_hh, H, H_pad)               # (4Hp,)
    b_dec = _pad_gate_vec(dec_b_ih + dec_b_hh, H, H_pad)               # (4Hp,)

    # --- hoisted, time-parallel input projection: one batched MXU matmul
    #     (bf16 operands, f32 accumulation).  Stored bf16 to halve the HBM
    #     round-trip and the VMEM chunk.
    # TODO(synk): for very large T this projection could be fused in-kernel
    # per T-chunk (x is ~128x smaller than xp), removing the round-trip.
    xp = jnp.einsum("nct,ch->tnh",
                    x2.astype(jnp.bfloat16),
                    wih_p.T.astype(jnp.bfloat16),
                    preferred_element_type=jnp.float32)                # (T, N, 4Hp)
    xp = xp + b_enc[None, None, :]
    xp = jnp.pad(xp, ((0, T_pad - T), (0, N_pad - N), (0, 0)))
    xp = xp.astype(jnp.bfloat16)                                       # (Tp, Np, 4Hp)

    whh_e_t = whh_e_p.T.astype(jnp.bfloat16)                           # (Hp, 4Hp)
    whh_d_t = whh_d_p.T.astype(jnp.bfloat16)                           # (Hp, 4Hp)
    b_dec2 = b_dec.reshape(1, Hp4)                                     # (1, 4Hp)

    kernel = functools.partial(
        _seq2seq_lstm_kernel,
        t_total=T,
        enc_unroll=min(8, Tc),
        dec_unroll=min(8, L),
    )

    dec_out = pl.pallas_call(
        kernel,
        out_shape=jax.ShapeDtypeStruct((L, N_pad, H_pad), jnp.float32),
        grid_spec=pltpu.PrefetchScalarGridSpec(
            num_scalar_prefetch=0,
            grid=(n_nb, n_tc),
            in_specs=[
                pl.BlockSpec((Tc, NB, Hp4), lambda nb, tc: (tc, nb, 0)),   # xp chunk
                pl.BlockSpec((H_pad, Hp4), lambda nb, tc: (0, 0)),         # enc W_hh^T
                pl.BlockSpec((H_pad, Hp4), lambda nb, tc: (0, 0)),         # dec W_hh^T
                pl.BlockSpec((1, Hp4), lambda nb, tc: (0, 0)),             # dec bias
            ],
            out_specs=pl.BlockSpec((L, NB, H_pad), lambda nb, tc: (0, nb, 0)),
            scratch_shapes=[
                pltpu.VMEM((NB, H_pad), jnp.float32),   # h carried across chunks
                pltpu.VMEM((NB, H_pad), jnp.float32),   # c carried across chunks
            ],
        ),
        compiler_params=pltpu.CompilerParams(
            dimension_semantics=("parallel", "arbitrary"),
            vmem_limit_bytes=32 * 1024 * 1024,
        ),
    )(xp, whh_e_t, whh_d_t, b_dec2)

    # Decoder output is kept time-major / lane-dense (Hp=128) in the kernel;
    # the small (N, H, L) transpose here only exists to match the PyTorch
    # decoder's stack(..., axis=-1) layout for the (missing) TimestepDense.
    out = jnp.transpose(dec_out, (1, 2, 0))[:N, :H, :]                 # (N, H, L)
    return out.reshape(*batch_shape, H, L)


def seq2seq_ref(x, enc_w_ih, enc_w_hh, enc_b_ih, enc_b_hh,
                dec_w_hh, dec_b_ih, dec_b_hh, *, num_step):
    """Pure-JAX f32 reference matching the PyTorch Seq2seq (minus TimestepDense)."""
    batch_shape = x.shape[:-2]
    C, T = x.shape[-2:]
    x2 = x.reshape(-1, C, T)
    N = x2.shape[0]
    H = enc_w_hh.shape[1]

    def cell(gates, c):
        i_g, f_g, g_g, o_g = jnp.split(gates, 4, axis=-1)
        i_g = jax.nn.sigmoid(i_g)
        f_g = jax.nn.sigmoid(f_g)
        g_g = jnp.tanh(g_g)
        o_g = jax.nn.sigmoid(o_g)
        c_new = f_g * c + i_g * g_g
        return o_g * jnp.tanh(c_new), c_new

    h = jnp.zeros((N, H), x.dtype)
    c = jnp.zeros((N, H), x.dtype)
    for t in range(T):
        gates = x2[:, :, t] @ enc_w_ih.T + enc_b_ih + h @ enc_w_hh.T + enc_b_hh
        h, c = cell(gates, c)

    outs = []
    c = jnp.zeros((N, H), x.dtype)
    for _ in range(num_step):
        gates = dec_b_ih + h @ dec_w_hh.T + dec_b_hh
        h, c = cell(gates, c)
        outs.append(h)
    out = jnp.stack(outs, axis=-1)                                     # (N, H, L)
    return out.reshape(*batch_shape, H, num_step)


if __name__ == "__main__":
    # Shapes consistent with Seq2seq: batch N=2, in_channels C=4, seq T=8,
    # encoded_size H=32, decoder num_step L=6.
    N, C, T, H, L = 2, 4, 8, 32, 6

    key = jax.random.PRNGKey(0)
    keys = jax.random.split(key, 8)

    x = jax.random.normal(keys[0], (N, C, T), dtype=jnp.float32)

    # Deterministic init mirroring nn.LSTMCell: U(-1/sqrt(H), 1/sqrt(H)).
    bound = 1.0 / (H ** 0.5)
    u = lambda k, shape: jax.random.uniform(k, shape, jnp.float32, -bound, bound)

    enc_w_ih = u(keys[1], (4 * H, C))
    enc_w_hh = u(keys[2], (4 * H, H))
    enc_b_ih = u(keys[3], (4 * H,))
    enc_b_hh = u(keys[4], (4 * H,))

    dec_w_hh = u(keys[5], (4 * H, H))   # decoder LSTMCell has input_size=0
    dec_b_ih = u(keys[6], (4 * H,))
    dec_b_hh = u(keys[7], (4 * H,))

    out = seq2seq_lstm(x, enc_w_ih, enc_w_hh, enc_b_ih, enc_b_hh,
                       dec_w_hh, dec_b_ih, dec_b_hh, num_step=L)
    out = jax.block_until_ready(out)

    ref = seq2seq_ref(x, enc_w_ih, enc_w_hh, enc_b_ih, enc_b_hh,
                      dec_w_hh, dec_b_ih, dec_b_hh, num_step=L)

    assert out.shape == (N, H, L), out.shape
    # bf16 MXU operands + bf16-stored gate inputs (f32 accumulation / gate
    # math) -> compare against the pure-f32 reference with bf16 tolerance.
    err = float(jnp.max(jnp.abs(out - ref)))
    assert jnp.allclose(out, ref, atol=5e-2, rtol=5e-2), f"max abs err {err}"

    print("KERNEL_OK")
</pallas_src>

<mosaic_0001>
module attributes {stable_mosaic.version = 11 : i64} {
  func.func @_seq2seq_lstm_kernel(%arg0: i32, %arg1: i32, %arg2: memref<8x8x512xbf16, #tpu.memory_space<vmem>>, %arg3: memref<128x512xbf16, #tpu.memory_space<vmem>>, %arg4: memref<128x512xbf16, #tpu.memory_space<vmem>>, %arg5: memref<1x512xf32, #tpu.memory_space<vmem>>, %arg6: memref<6x8x128xf32, #tpu.memory_space<vmem>>, %arg7: memref<8x128xf32, #tpu.memory_space<vmem>>, %arg8: memref<8x128xf32, #tpu.memory_space<vmem>>) attributes {dimension_semantics = [#tpu.dimension_semantics<parallel>, #tpu.dimension_semantics<arbitrary>], iteration_bounds = array<i64: 1, 1>, scalar_prefetch = 0 : i64, scratch_operands = 2 : i64, tpu.core_type = #tpu.core_type<tc>, window_params = [{transform_indices = @transform_0, window_bounds = array<i64: 8, 8, 512>}, {pipeline_mode = #tpu.pipeline_mode<synchronous>, transform_indices = @transform_1, window_bounds = array<i64: 128, 512>}, {pipeline_mode = #tpu.pipeline_mode<synchronous>, transform_indices = @transform_2, window_bounds = array<i64: 128, 512>}, {pipeline_mode = #tpu.pipeline_mode<synchronous>, transform_indices = @transform_3, window_bounds = array<i64: 1, 512>}, {transform_indices = @transform_4, window_bounds = array<i64: 6, 8, 128>}]} {
    %c0_i32 = arith.constant 0 : i32
    %0 = arith.cmpi eq, %arg1, %c0_i32 : i32
    %1 = arith.extui %0 : i1 to i32
    %c0_i32_0 = arith.constant 0 : i32
    %2 = arith.cmpi ne, %1, %c0_i32_0 : i32
    scf.if %2 {
      %cst_74 = arith.constant 0.000000e+00 : f32
      %274 = vector.broadcast %cst_74 : f32 to vector<8x128xf32>
      %c0_75 = arith.constant 0 : index
      %c0_76 = arith.constant 0 : index
      %275 = vector.load %arg7[%c0_75, %c0_76] : memref<8x128xf32, #tpu.memory_space<vmem>>, vector<8x128xf32>
      tpu.vector_store %arg7[%c0_75, %c0_76], %274 {strides = array<i32>} : memref<8x128xf32, #tpu.memory_space<vmem>>, vector<8x128xf32>,
      %cst_77 = arith.constant 0.000000e+00 : f32
      %276 = vector.broadcast %cst_77 : f32 to vector<8x128xf32>
      %c0_78 = arith.constant 0 : index
      %c0_79 = arith.constant 0 : index
      %277 = vector.load %arg8[%c0_78, %c0_79] : memref<8x128xf32, #tpu.memory_space<vmem>>, vector<8x128xf32>
      tpu.vector_store %arg8[%c0_78, %c0_79], %276 {strides = array<i32>} : memref<8x128xf32, #tpu.memory_space<vmem>>, vector<8x128xf32>,
    } else {
    }
    %c0 = arith.constant 0 : index
    %c0_1 = arith.constant 0 : index
    %3 = vector.load %arg7[%c0, %c0_1] : memref<8x128xf32, #tpu.memory_space<vmem>>, vector<8x128xf32>
    %c0_2 = arith.constant 0 : index
    %c0_3 = arith.constant 0 : index
    %4 = vector.load %arg8[%c0_2, %c0_3] : memref<8x128xf32, #tpu.memory_space<vmem>>, vector<8x128xf32>
    %c0_i32_4 = arith.constant 0 : i32
    %5 = arith.index_cast %c0_i32_4 : i32 to index
    %c0_5 = arith.constant 0 : index
    %c0_6 = arith.constant 0 : index
    %6 = vector.load %arg2[%5, %c0_5, %c0_6] : memref<8x8x512xbf16, #tpu.memory_space<vmem>>, vector<1x8x512xbf16>
    %7 = vector.shape_cast %6 : vector<1x8x512xbf16> to vector<8x512xbf16>
    %8 = arith.extf %7 : vector<8x512xbf16> to vector<8x512xf32>
    %9 = arith.truncf %3 : vector<8x128xf32> to vector<8x128xbf16>
    %c0_7 = arith.constant 0 : index
    %c0_8 = arith.constant 0 : index
    %10 = vector.load %arg3[%c0_7, %c0_8] : memref<128x512xbf16, #tpu.memory_space<vmem>>, vector<128x512xbf16>
    %cst = arith.constant dense<0.000000e+00> : vector<8x512xf32>
    %11 = tpu.matmul %9, %10, %cst {dimension_numbers = #tpu.dot_dimension_numbers<[1], [0], [0], [1], [0, 0, 1, 1], [], []>} : vector<8x128xbf16>, vector<128x512xbf16>, vector<8x512xf32> -> vector<8x512xf32>
    %12 = arith.addf %8, %11 : vector<8x512xf32>
    %13 = vector.extract_strided_slice %12 {offsets = [0, 0], sizes = [8, 128], strides = [1, 1]} : vector<8x512xf32> to vector<8x128xf32>
    %14 = arith.negf %13 : vector<8x128xf32>
    %15 = math.exp %14 : vector<8x128xf32>
    %cst_9 = arith.constant 1.000000e+00 : f32
    %16 = vector.broadcast %cst_9 : f32 to vector<8x128xf32>
    %17 = arith.addf %16, %15 : vector<8x128xf32>
    %18 = arith.divf %16, %17 : vector<8x128xf32>
    %19 = vector.extract_strided_slice %12 {offsets = [0, 128], sizes = [8, 128], strides = [1, 1]} : vector<8x512xf32> to vector<8x128xf32>
    %20 = arith.negf %19 : vector<8x128xf32>
    %21 = math.exp %20 : vector<8x128xf32>
    %cst_10 = arith.constant 1.000000e+00 : f32
    %22 = vector.broadcast %cst_10 : f32 to vector<8x128xf32>
    %23 = arith.addf %22, %21 : vector<8x128xf32>
    %24 = arith.divf %22, %23 : vector<8x128xf32>
    %25 = vector.extract_strided_slice %12 {offsets = [0, 256], sizes = [8, 128], strides = [1, 1]} : vector<8x512xf32> to vector<8x128xf32>
    %26 = math.tanh %25 : vector<8x128xf32>
    %27 = vector.extract_strided_slice %12 {offsets = [0, 384], sizes = [8, 128], strides = [1, 1]} : vector<8x512xf32> to vector<8x128xf32>
    %28 = arith.negf %27 : vector<8x128xf32>
    %29 = math.exp %28 : vector<8x128xf32>
    %cst_11 = arith.constant 1.000000e+00 : f32
    %30 = vector.broadcast %cst_11 : f32 to vector<8x128xf32>
    %31 = arith.addf %30, %29 : vector<8x128xf32>
    %32 = arith.divf %30, %31 : vector<8x128xf32>
    %33 = arith.mulf %24, %4 : vector<8x128xf32>
    %34 = arith.mulf %18, %26 : vector<8x128xf32>
    %35 = arith.addf %33, %34 : vector<8x128xf32>
    %36 = math.tanh %35 : vector<8x128xf32>
    %37 = arith.mulf %32, %36 : vector<8x128xf32>
    %c1_i32 = arith.constant 1 : i32
    %38 = arith.index_cast %c1_i32 : i32 to index
    %c0_12 = arith.constant 0 : index
    %c0_13 = arith.constant 0 : index
    %39 = vector.load %arg2[%38, %c0_12, %c0_13] : memref<8x8x512xbf16, #tpu.memory_space<vmem>>, vector<1x8x512xbf16>
    %40 = vector.shape_cast %39 : vector<1x8x512xbf16> to vector<8x512xbf16>
    %41 = arith.extf %40 : vector<8x512xbf16> to vector<8x512xf32>
    %42 = arith.truncf %37 : vector<8x128xf32> to vector<8x128xbf16>
    %c0_14 = arith.constant 0 : index
    %c0_15 = arith.constant 0 : index
    %43 = vector.load %arg3[%c0_14, %c0_15] : memref<128x512xbf16, #tpu.memory_space<vmem>>, vector<128x512xbf16>
    %cst_16 = arith.constant dense<0.000000e+00> : vector<8x512xf32>
    %44 = tpu.matmul %42, %43, %cst_16 {dimension_numbers = #tpu.dot_dimension_numbers<[1], [0], [0], [1], [0, 0, 1, 1], [], []>} : vector<8x128xbf16>, vector<128x512xbf16>, vector<8x512xf32> -> vector<8x512xf32>
    %45 = arith.addf %41, %44 : vector<8x512xf32>
    %46 = vector.extract_strided_slice %45 {offsets = [0, 0], sizes = [8, 128], strides = [1, 1]} : vector<8x512xf32> to vector<8x128xf32>
    %47 = arith.negf %46 : vector<8x128xf32>
    %48 = math.exp %47 : vector<8x128xf32>
    %cst_17 = arith.constant 1.000000e+00 : f32
    %49 = vector.broadcast %cst_17 : f32 to vector<8x128xf32>
    %50 = arith.addf %49, %48 : vector<8x128xf32>
    %51 = arith.divf %49, %50 : vector<8x128xf32>
    %52 = vector.extract_strided_slice %45 {offsets = [0, 128], sizes = [8, 128], strides = [1, 1]} : vector<8x512xf32> to vector<8x128xf32>
    %53 = arith.negf %52 : vector<8x128xf32>
    %54 = math.exp %53 : vector<8x128xf32>
    %cst_18 = arith.constant 1.000000e+00 : f32
    %55 = vector.broadcast %cst_18 : f32 to vector<8x128xf32>
    %56 = arith.addf %55, %54 : vector<8x128xf32>
    %57 = arith.divf %55, %56 : vector<8x128xf32>
    %58 = vector.extract_strided_slice %45 {offsets = [0, 256], sizes = [8, 128], strides = [1, 1]} : vector<8x512xf32> to vector<8x128xf32>
    %59 = math.tanh %58 : vector<8x128xf32>
    %60 = vector.extract_strided_slice %45 {offsets = [0, 384], sizes = [8, 128], strides = [1, 1]} : vector<8x512xf32> to vector<8x128xf32>
    %61 = arith.negf %60 : vector<8x128xf32>
    %62 = math.exp %61 : vector<8x128xf32>
    %cst_19 = arith.constant 1.000000e+00 : f32
    %63 = vector.broadcast %cst_19 : f32 to vector<8x128xf32>
    %64 = arith.addf %63, %62 : vector<8x128xf32>
    %65 = arith.divf %63, %64 : vector<8x128xf32>
    %66 = arith.mulf %57, %35 : vector<8x128xf32>
    %67 = arith.mulf %51, %59 : vector<8x128xf32>
    %68 = arith.addf %66, %67 : vector<8x128xf32>
    %69 = math.tanh %68 : vector<8x128xf32>
    %70 = arith.mulf %65, %69 : vector<8x128xf32>
    %c2_i32 = arith.constant 2 : i32
    %71 = arith.index_cast %c2_i32 : i32 to index
    %c0_20 = arith.constant 0 : index
    %c0_21 = arith.constant 0 : index
    %72 = vector.load %arg2[%71, %c0_20, %c0_21] : memref<8x8x512xbf16, #tpu.memory_space<vmem>>, vector<1x8x512xbf16>
    %73 = vector.shape_cast %72 : vector<1x8x512xbf16> to vector<8x512xbf16>
    %74 = arith.extf %73 : vector<8x512xbf16> to vector<8x512xf32>
    %75 = arith.truncf %70 : vector<8x128xf32> to vector<8x128xbf16>
    %c0_22 = arith.constant 0 : index
    %c0_23 = arith.constant 0 : index
    %76 = vector.load %arg3[%c0_22, %c0_23] : memref<128x512xbf16, #tpu.memory_space<vmem>>, vector<128x512xbf16>
    %cst_24 = arith.constant dense<0.000000e+00> : vector<8x512xf32>
    %77 = tpu.matmul %75, %76, %cst_24 {dimension_numbers = #tpu.dot_dimension_numbers<[1], [0], [0], [1], [0, 0, 1, 1], [], []>} : vector<8x128xbf16>, vector<128x512xbf16>, vector<8x512xf32> -> vector<8x512xf32>
    %78 = arith.addf %74, %77 : vector<8x512xf32>
    %79 = vector.extract_strided_slice %78 {offsets = [0, 0], sizes = [8, 128], strides = [1, 1]} : vector<8x512xf32> to vector<8x128xf32>
    %80 = arith.negf %79 : vector<8x128xf32>
    %81 = math.exp %80 : vector<8x128xf32>
    %cst_25 = arith.constant 1.000000e+00 : f32
    %82 = vector.broadcast %cst_25 : f32 to vector<8x128xf32>
    %83 = arith.addf %82, %81 : vector<8x128xf32>
    %84 = arith.divf %82, %83 : vector<8x128xf32>
    %85 = vector.extract_strided_slice %78 {offsets = [0, 128], sizes = [8, 128], strides = [1, 1]} : vector<8x512xf32> to vector<8x128xf32>
    %86 = arith.negf %85 : vector<8x128xf32>
    %87 = math.exp %86 : vector<8x128xf32>
    %cst_26 = arith.constant 1.000000e+00 : f32
    %88 = vector.broadcast %cst_26 : f32 to vector<8x128xf32>
    %89 = arith.addf %88, %87 : vector<8x128xf32>
    %90 = arith.divf %88, %89 : vector<8x128xf32>
    %91 = vector.extract_strided_slice %78 {offsets = [0, 256], sizes = [8, 128], strides = [1, 1]} : vector<8x512xf32> to vector<8x128xf32>
    %92 = math.tanh %91 : vector<8x128xf32>
    %93 = vector.extract_strided_slice %78 {offsets = [0, 384], sizes = [8, 128], strides = [1, 1]} : vector<8x512xf32> to vector<8x128xf32>
    %94 = arith.negf %93 : vector<8x128xf32>
    %95 = math.exp %94 : vector<8x128xf32>
    %cst_27 = arith.constant 1.000000e+00 : f32
    %96 = vector.broadcast %cst_27 : f32 to vector<8x128xf32>
    %97 = arith.addf %96, %95 : vector<8x128xf32>
    %98 = arith.divf %96, %97 : vector<8x128xf32>
    %99 = arith.mulf %90, %68 : vector<8x128xf32>
    %100 = arith.mulf %84, %92 : vector<8x128xf32>
    %101 = arith.addf %99, %100 : vector<8x128xf32>
    %102 = math.tanh %101 : vector<8x128xf32>
    %103 = arith.mulf %98, %102 : vector<8x128xf32>
    %c3_i32 = arith.constant 3 : i32
    %104 = arith.index_cast %c3_i32 : i32 to index
    %c0_28 = arith.constant 0 : index
    %c0_29 = arith.constant 0 : index
    %105 = vector.load %arg2[%104, %c0_28, %c0_29] : memref<8x8x512xbf16, #tpu.memory_space<vmem>>, vector<1x8x512xbf16>
    %106 = vector.shape_cast %105 : vector<1x8x512xbf16> to vector<8x512xbf16>
    %107 = arith.extf %106 : vector<8x512xbf16> to vector<8x512xf32>
    %108 = arith.truncf %103 : vector<8x128xf32> to vector<8x128xbf16>
    %c0_30 = arith.constant 0 : index
    %c0_31 = arith.constant 0 : index
    %109 = vector.load %arg3[%c0_30, %c0_31] : memref<128x512xbf16, #tpu.memory_space<vmem>>, vector<128x512xbf16>
    %cst_32 = arith.constant dense<0.000000e+00> : vector<8x512xf32>
    %110 = tpu.matmul %108, %109, %cst_32 {dimension_numbers = #tpu.dot_dimension_numbers<[1], [0], [0], [1], [0, 0, 1, 1], [], []>} : vector<8x128xbf16>, vector<128x512xbf16>, vector<8x512xf32> -> vector<8x512xf32>
    %111 = arith.addf %107, %110 : vector<8x512xf32>
    %112 = vector.extract_strided_slice %111 {offsets = [0, 0], sizes = [8, 128], strides = [1, 1]} : vector<8x512xf32> to vector<8x128xf32>
    %113 = arith.negf %112 : vector<8x128xf32>
    %114 = math.exp %113 : vector<8x128xf32>
    %cst_33 = arith.constant 1.000000e+00 : f32
    %115 = vector.broadcast %cst_33 : f32 to vector<8x128xf32>
    %116 = arith.addf %115, %114 : vector<8x128xf32>
    %117 = arith.divf %115, %116 : vector<8x128xf32>
    %118 = vector.extract_strided_slice %111 {offsets = [0, 128], sizes = [8, 128], strides = [1, 1]} : vector<8x512xf32> to vector<8x128xf32>
    %119 = arith.negf %118 : vector<8x128xf32>
    %120 = math.exp %119 : vector<8x128xf32>
    %cst_34 = arith.constant 1.000000e+00 : f32
    %121 = vector.broadcast %cst_34 : f32 to vector<8x128xf32>
    %122 = arith.addf %121, %120 : vector<8x128xf32>
    %123 = arith.divf %121, %122 : vector<8x128xf32>
    %124 = vector.extract_strided_slice %111 {offsets = [0, 256], sizes = [8, 128], strides = [1, 1]} : vector<8x512xf32> to vector<8x128xf32>
    %125 = math.tanh %124 : vector<8x128xf32>
    %126 = vector.extract_strided_slice %111 {offsets = [0, 384], sizes = [8, 128], strides = [1, 1]} : vector<8x512xf32> to vector<8x128xf32>
    %127 = arith.negf %126 : vector<8x128xf32>
    %128 = math.exp %127 : vector<8x128xf32>
    %cst_35 = arith.constant 1.000000e+00 : f32
    %129 = vector.broadcast %cst_35 : f32 to vector<8x128xf32>
    %130 = arith.addf %129, %128 : vector<8x128xf32>
    %131 = arith.divf %129, %130 : vector<8x128xf32>
    %132 = arith.mulf %123, %101 : vector<8x128xf32>
    %133 = arith.mulf %117, %125 : vector<8x128xf32>
    %134 = arith.addf %132, %133 : vector<8x128xf32>
    %135 = math.tanh %134 : vector<8x128xf32>
    %136 = arith.mulf %131, %135 : vector<8x128xf32>
    %c4_i32 = arith.constant 4 : i32
    %137 = arith.index_cast %c4_i32 : i32 to index
    %c0_36 = arith.constant 0 : index
    %c0_37 = arith.constant 0 : index
    %138 = vector.load %arg2[%137, %c0_36, %c0_37] : memref<8x8x512xbf16, #tpu.memory_space<vmem>>, vector<1x8x512xbf16>
    %139 = vector.shape_cast %138 : vector<1x8x512xbf16> to vector<8x512xbf16>
    %140 = arith.extf %139 : vector<8x512xbf16> to vector<8x512xf32>
    %141 = arith.truncf %136 : vector<8x128xf32> to vector<8x128xbf16>
    %c0_38 = arith.constant 0 : index
    %c0_39 = arith.constant 0 : index
    %142 = vector.load %arg3[%c0_38, %c0_39] : memref<128x512xbf16, #tpu.memory_space<vmem>>, vector<128x512xbf16>
    %cst_40 = arith.constant dense<0.000000e+00> : vector<8x512xf32>
    %143 = tpu.matmul %141, %142, %cst_40 {dimension_numbers = #tpu.dot_dimension_numbers<[1], [0], [0], [1], [0, 0, 1, 1], [], []>} : vector<8x128xbf16>, vector<128x512xbf16>, vector<8x512xf32> -> vector<8x512xf32>
    %144 = arith.addf %140, %143 : vector<8x512xf32>
    %145 = vector.extract_strided_slice %144 {offsets = [0, 0], sizes = [8, 128], strides = [1, 1]} : vector<8x512xf32> to vector<8x128xf32>
    %146 = arith.negf %145 : vector<8x128xf32>
    %147 = math.exp %146 : vector<8x128xf32>
    %cst_41 = arith.constant 1.000000e+00 : f32
    %148 = vector.broadcast %cst_41 : f32 to vector<8x128xf32>
    %149 = arith.addf %148, %147 : vector<8x128xf32>
    %150 = arith.divf %148, %149 : vector<8x128xf32>
    %151 = vector.extract_strided_slice %144 {offsets = [0, 128], sizes = [8, 128], strides = [1, 1]} : vector<8x512xf32> to vector<8x128xf32>
    %152 = arith.negf %151 : vector<8x128xf32>
    %153 = math.exp %152 : vector<8x128xf32>
    %cst_42 = arith.constant 1.000000e+00 : f32
    %154 = vector.broadcast %cst_42 : f32 to vector<8x128xf32>
    %155 = arith.addf %154, %153 : vector<8x128xf32>
    %156 = arith.divf %154, %155 : vector<8x128xf32>
    %157 = vector.extract_strided_slice %144 {offsets = [0, 256], sizes = [8, 128], strides = [1, 1]} : vector<8x512xf32> to vector<8x128xf32>
    %158 = math.tanh %157 : vector<8x128xf32>
    %159 = vector.extract_strided_slice %144 {offsets = [0, 384], sizes = [8, 128], strides = [1, 1]} : vector<8x512xf32> to vector<8x128xf32>
    %160 = arith.negf %159 : vector<8x128xf32>
    %161 = math.exp %160 : vector<8x128xf32>
    %cst_43 = arith.constant 1.000000e+00 : f32
    %162 = vector.broadcast %cst_43 : f32 to vector<8x128xf32>
    %163 = arith.addf %162, %161 : vector<8x128xf32>
    %164 = arith.divf %162, %163 : vector<8x128xf32>
    %165 = arith.mulf %156, %134 : vector<8x128xf32>
    %166 = arith.mulf %150, %158 : vector<8x128xf32>
    %167 = arith.addf %165, %166 : vector<8x128xf32>
    %168 = math.tanh %167 : vector<8x128xf32>
    %169 = arith.mulf %164, %168 : vector<8x128xf32>
    %c5_i32 = arith.constant 5 : i32
    %170 = arith.index_cast %c5_i32 : i32 to index
    %c0_44 = arith.constant 0 : index
    %c0_45 = arith.constant 0 : index
    %171 = vector.load %arg2[%170, %c0_44, %c0_45] : memref<8x8x512xbf16, #tpu.memory_space<vmem>>, vector<1x8x512xbf16>
    %172 = vector.shape_cast %171 : vector<1x8x512xbf16> to vector<8x512xbf16>
    %173 = arith.extf %172 : vector<8x512xbf16> to vector<8x512xf32>
    %174 = arith.truncf %169 : vector<8x128xf32> to vector<8x128xbf16>
    %c0_46 = arith.constant 0 : index
    %c0_47 = arith.constant 0 : index
    %175 = vector.load %arg3[%c0_46, %c0_47] : memref<128x512xbf16, #tpu.memory_space<vmem>>, vector<128x512xbf16>
    %cst_48 = arith.constant dense<0.000000e+00> : vector<8x512xf32>
    %176 = tpu.matmul %174, %175, %cst_48 {dimension_numbers = #tpu.dot_dimension_numbers<[1], [0], [0], [1], [0, 0, 1, 1], [], []>} : vector<8x128xbf16>, vector<128x512xbf16>, vector<8x512xf32> -> vector<8x512xf32>
    %177 = arith.addf %173, %176 : vector<8x512xf32>
    %178 = vector.extract_strided_slice %177 {offsets = [0, 0], sizes = [8, 128], strides = [1, 1]} : vector<8x512xf32> to vector<8x128xf32>
    %179 = arith.negf %178 : vector<8x128xf32>
    %180 = math.exp %179 : vector<8x128xf32>
    %cst_49 = arith.constant 1.000000e+00 : f32
    %181 = vector.broadcast %cst_49 : f32 to vector<8x128xf32>
    %182 = arith.addf %181, %180 : vector<8x128xf32>
    %183 = arith.divf %181, %182 : vector<8x128xf32>
    %184 = vector.extract_strided_slice %177 {offsets = [0, 128], sizes = [8, 128], strides = [1, 1]} : vector<8x512xf32> to vector<8x128xf32>
    %185 = arith.negf %184 : vector<8x128xf32>
    %186 = math.exp %185 : vector<8x128xf32>
    %cst_50 = arith.constant 1.000000e+00 : f32
    %187 = vector.broadcast %cst_50 : f32 to vector<8x128xf32>
    %188 = arith.addf %187, %186 : vector<8x128xf32>
    %189 = arith.divf %187, %188 : vector<8x128xf32>
    %190 = vector.extract_strided_slice %177 {offsets = [0, 256], sizes = [8, 128], strides = [1, 1]} : vector<8x512xf32> to vector<8x128xf32>
    %191 = math.tanh %190 : vector<8x128xf32>
    %192 = vector.extract_strided_slice %177 {offsets = [0, 384], sizes = [8, 128], strides = [1, 1]} : vector<8x512xf32> to vector<8x128xf32>
    %193 = arith.negf %192 : vector<8x128xf32>
    %194 = math.exp %193 : vector<8x128xf32>
    %cst_51 = arith.constant 1.000000e+00 : f32
    %195 = vector.broadcast %cst_51 : f32 to vector<8x128xf32>
    %196 = arith.addf %195, %194 : vector<8x128xf32>
    %197 = arith.divf %195, %196 : vector<8x128xf32>
    %198 = arith.mulf %189, %167 : vector<8x128xf32>
    %199 = arith.mulf %183, %191 : vector<8x128xf32>
    %200 = arith.addf %198, %199 : vector<8x128xf32>
    %201 = math.tanh %200 : vector<8x128xf32>
    %202 = arith.mulf %197, %201 : vector<8x128xf32>
    %c6_i32 = arith.constant 6 : i32
    %203 = arith.index_cast %c6_i32 : i32 to index
    %c0_52 = arith.constant 0 : index
    %c0_53 = arith.constant 0 : index
    %204 = vector.load %arg2[%203, %c0_52, %c0_53] : memref<8x8x512xbf16, #tpu.memory_space<vmem>>, vector<1x8x512xbf16>
    %205 = vector.shape_cast %204 : vector<1x8x512xbf16> to vector<8x512xbf16>
    %206 = arith.extf %205 : vector<8x512xbf16> to vector<8x512xf32>
    %207 = arith.truncf %202 : vector<8x128xf32> to vector<8x128xbf16>
    %c0_54 = arith.constant 0 : index
    %c0_55 = arith.constant 0 : index
    %208 = vector.load %arg3[%c0_54, %c0_55] : memref<128x512xbf16, #tpu.memory_space<vmem>>, vector<128x512xbf16>
    %cst_56 = arith.constant dense<0.000000e+00> : vector<8x512xf32>
    %209 = tpu.matmul %207, %208, %cst_56 {dimension_numbers = #tpu.dot_dimension_numbers<[1], [0], [0], [1], [0, 0, 1, 1], [], []>} : vector<8x128xbf16>, vector<128x512xbf16>, vector<8x512xf32> -> vector<8x512xf32>
    %210 = arith.addf %206, %209 : vector<8x512xf32>
    %211 = vector.extract_strided_slice %210 {offsets = [0, 0], sizes = [8, 128], strides = [1, 1]} : vector<8x512xf32> to vector<8x128xf32>
    %212 = arith.negf %211 : vector<8x128xf32>
    %213 = math.exp %212 : vector<8x128xf32>
    %cst_57 = arith.constant 1.000000e+00 : f32
    %214 = vector.broadcast %cst_57 : f32 to vector<8x128xf32>
    %215 = arith.addf %214, %213 : vector<8x128xf32>
    %216 = arith.divf %214, %215 : vector<8x128xf32>
    %217 = vector.extract_strided_slice %210 {offsets = [0, 128], sizes = [8, 128], strides = [1, 1]} : vector<8x512xf32> to vector<8x128xf32>
    %218 = arith.negf %217 : vector<8x128xf32>
    %219 = math.exp %218 : vector<8x128xf32>
    %cst_58 = arith.constant 1.000000e+00 : f32
    %220 = vector.broadcast %cst_58 : f32 to vector<8x128xf32>
    %221 = arith.addf %220, %219 : vector<8x128xf32>
    %222 = arith.divf %220, %221 : vector<8x128xf32>
    %223 = vector.extract_strided_slice %210 {offsets = [0, 256], sizes = [8, 128], strides = [1, 1]} : vector<8x512xf32> to vector<8x128xf32>
    %224 = math.tanh %223 : vector<8x128xf32>
    %225 = vector.extract_strided_slice %210 {offsets = [0, 384], sizes = [8, 128], strides = [1, 1]} : vector<8x512xf32> to vector<8x128xf32>
    %226 = arith.negf %225 : vector<8x128xf32>
    %227 = math.exp %226 : vector<8x128xf32>
    %cst_59 = arith.constant 1.000000e+00 : f32
    %228 = vector.broadcast %cst_59 : f32 to vector<8x128xf32>
    %229 = arith.addf %228, %227 : vector<8x128xf32>
    %230 = arith.divf %228, %229 : vector<8x128xf32>
    %231 = arith.mulf %222, %200 : vector<8x128xf32>
    %232 = arith.mulf %216, %224 : vector<8x128xf32>
    %233 = arith.addf %231, %232 : vector<8x128xf32>
    %234 = math.tanh %233 : vector<8x128xf32>
    %235 = arith.mulf %230, %234 : vector<8x128xf32>
    %c7_i32 = arith.constant 7 : i32
    %236 = arith.index_cast %c7_i32 : i32 to index
    %c0_60 = arith.constant 0 : index
    %c0_61 = arith.constant 0 : index
    %237 = vector.load %arg2[%236, %c0_60, %c0_61] : memref<8x8x512xbf16, #tpu.memory_space<vmem>>, vector<1x8x512xbf16>
    %238 = vector.shape_cast %237 : vector<1x8x512xbf16> to vector<8x512xbf16>
    %239 = arith.extf %238 : vector<8x512xbf16> to vector<8x512xf32>
    %240 = arith.truncf %235 : vector<8x128xf32> to vector<8x128xbf16>
    %c0_62 = arith.constant 0 : index
    %c0_63 = arith.constant 0 : index
    %241 = vector.load %arg3[%c0_62, %c0_63] : memref<128x512xbf16, #tpu.memory_space<vmem>>, vector<128x512xbf16>
    %cst_64 = arith.constant dense<0.000000e+00> : vector<8x512xf32>
    %242 = tpu.matmul %240, %241, %cst_64 {dimension_numbers = #tpu.dot_dimension_numbers<[1], [0], [0], [1], [0, 0, 1, 1], [], []>} : vector<8x128xbf16>, vector<128x512xbf16>, vector<8x512xf32> -> vector<8x512xf32>
    %243 = arith.addf %239, %242 : vector<8x512xf32>
    %244 = vector.extract_strided_slice %243 {offsets = [0, 0], sizes = [8, 128], strides = [1, 1]} : vector<8x512xf32> to vector<8x128xf32>
    %245 = arith.negf %244 : vector<8x128xf32>
    %246 = math.exp %245 : vector<8x128xf32>
    %cst_65 = arith.constant 1.000000e+00 : f32
    %247 = vector.broadcast %cst_65 : f32 to vector<8x128xf32>
    %248 = arith.addf %247, %246 : vector<8x128xf32>
    %249 = arith.divf %247, %248 : vector<8x128xf32>
    %250 = vector.extract_strided_slice %243 {offsets = [0, 128], sizes = [8, 128], strides = [1, 1]} : vector<8x512xf32> to vector<8x128xf32>
    %251 = arith.negf %250 : vector<8x128xf32>
    %252 = math.exp %251 : vector<8x128xf32>
    %cst_66 = arith.constant 1.000000e+00 : f32
    %253 = vector.broadcast %cst_66 : f32 to vector<8x128xf32>
    %254 = arith.addf %253, %252 : vector<8x128xf32>
    %255 = arith.divf %253, %254 : vector<8x128xf32>
    %256 = vector.extract_strided_slice %243 {offsets = [0, 256], sizes = [8, 128], strides = [1, 1]} : vector<8x512xf32> to vector<8x128xf32>
    %257 = math.tanh %256 : vector<8x128xf32>
    %258 = vector.extract_strided_slice %243 {offsets = [0, 384], sizes = [8, 128], strides = [1, 1]} : vector<8x512xf32> to vector<8x128xf32>
    %259 = arith.negf %258 : vector<8x128xf32>
    %260 = math.exp %259 : vector<8x128xf32>
    %cst_67 = arith.constant 1.000000e+00 : f32
    %261 = vector.broadcast %cst_67 : f32 to vector<8x128xf32>
    %262 = arith.addf %261, %260 : vector<8x128xf32>
    %263 = arith.divf %261, %262 : vector<8x128xf32>
    %264 = arith.mulf %255, %233 : vector<8x128xf32>
    %265 = arith.mulf %249, %257 : vector<8x128xf32>
    %266 = arith.addf %264, %265 : vector<8x128xf32>
    %267 = math.tanh %266 : vector<8x128xf32>
    %268 = arith.mulf %263, %267 : vector<8x128xf32>
    %c8_i32 = arith.constant 8 : i32
    %c0_68 = arith.constant 0 : index
    %c0_69 = arith.constant 0 : index
    %269 = vector.load %arg7[%c0_68, %c0_69] : memref<8x128xf32, #tpu.memory_space<vmem>>, vector<8x128xf32>
    tpu.vector_store %arg7[%c0_68, %c0_69], %268 {strides = array<i32>} : memref<8x128xf32, #tpu.memory_space<vmem>>, vector<8x128xf32>,
    %c0_70 = arith.constant 0 : index
    %c0_71 = arith.constant 0 : index
    %270 = vector.load %arg8[%c0_70, %c0_71] : memref<8x128xf32, #tpu.memory_space<vmem>>, vector<8x128xf32>
    tpu.vector_store %arg8[%c0_70, %c0_71], %266 {strides = array<i32>} : memref<8x128xf32, #tpu.memory_space<vmem>>, vector<8x128xf32>,
    %c0_i32_72 = arith.constant 0 : i32
    %271 = arith.cmpi eq, %arg1, %c0_i32_72 : i32
    %272 = arith.extui %271 : i1 to i32
    %c0_i32_73 = arith.constant 0 : i32
    %273 = arith.cmpi ne, %272, %c0_i32_73 : i32
    scf.if %273 {
      %c0_74 = arith.constant 0 : index
      %c0_75 = arith.constant 0 : index
      %274 = vector.load %arg5[%c0_74, %c0_75] : memref<1x512xf32, #tpu.memory_space<vmem>>, vector<1x512xf32>
      %275 = vector.shape_cast %274 : vector<1x512xf32> to vector<1x512xf32>
      %276 = vector.broadcast %275 : vector<1x512xf32> to vector<8x512xf32>
      %cst_76 = arith.constant 0.000000e+00 : f32
      %277 = vector.broadcast %cst_76 : f32 to vector<8x128xf32>
      %c0_i32_77 = arith.constant 0 : i32
      %278 = arith.truncf %268 : vector<8x128xf32> to vector<8x128xbf16>
      %c0_78 = arith.constant 0 : index
      %c0_79 = arith.constant 0 : index
      %279 = vector.load %arg4[%c0_78, %c0_79] : memref<128x512xbf16, #tpu.memory_space<vmem>>, vector<128x512xbf16>
      %cst_80 = arith.constant dense<0.000000e+00> : vector<8x512xf32>
      %280 = tpu.matmul %278, %279, %cst_80 {dimension_numbers = #tpu.dot_dimension_numbers<[1], [0], [0], [1], [0, 0, 1, 1], [], []>} : vector<8x128xbf16>, vector<128x512xbf16>, vector<8x512xf32> -> vector<8x512xf32>
      %281 = arith.addf %276, %280 : vector<8x512xf32>
      %282 = vector.extract_strided_slice %281 {offsets = [0, 0], sizes = [8, 128], strides = [1, 1]} : vector<8x512xf32> to vector<8x128xf32>
      %283 = arith.negf %282 : vector<8x128xf32>
      %284 = math.exp %283 : vector<8x128xf32>
      %cst_81 = arith.constant 1.000000e+00 : f32
      %285 = vector.broadcast %cst_81 : f32 to vector<8x128xf32>
      %286 = arith.addf %285, %284 : vector<8x128xf32>
      %287 = arith.divf %285, %286 : vector<8x128xf32>
      %288 = vector.extract_strided_slice %281 {offsets = [0, 128], sizes = [8, 128], strides = [1, 1]} : vector<8x512xf32> to vector<8x128xf32>
      %289 = arith.negf %288 : vector<8x128xf32>
      %290 = math.exp %289 : vector<8x128xf32>
      %cst_82 = arith.constant 1.000000e+00 : f32
      %291 = vector.broadcast %cst_82 : f32 to vector<8x128xf32>
      %292 = arith.addf %291, %290 : vector<8x128xf32>
      %293 = arith.divf %291, %292 : vector<8x128xf32>
      %294 = vector.extract_strided_slice %281 {offsets = [0, 256], sizes = [8, 128], strides = [1, 1]} : vector<8x512xf32> to vector<8x128xf32>
      %295 = math.tanh %294 : vector<8x128xf32>
      %296 = vector.extract_strided_slice %281 {offsets = [0, 384], sizes = [8, 128], strides = [1, 1]} : vector<8x512xf32> to vector<8x128xf32>
      %297 = arith.negf %296 : vector<8x128xf32>
      %298 = math.exp %297 : vector<8x128xf32>
      %cst_83 = arith.constant 1.000000e+00 : f32
      %299 = vector.broadcast %cst_83 : f32 to vector<8x128xf32>
      %300 = arith.addf %299, %298 : vector<8x128xf32>
      %301 = arith.divf %299, %300 : vector<8x128xf32>
      %302 = arith.mulf %293, %277 : vector<8x128xf32>
      %303 = arith.mulf %287, %295 : vector<8x128xf32>
      %304 = arith.addf %302, %303 : vector<8x128xf32>
      %305 = math.tanh %304 : vector<8x128xf32>
      %306 = arith.mulf %301, %305 : vector<8x128xf32>
      %307 = arith.index_cast %c0_i32_77 : i32 to index
      %c0_84 = arith.constant 0 : index
      %c0_85 = arith.constant 0 : index
      %308 = vector.load %arg6[%307, %c0_84, %c0_85] : memref<6x8x128xf32, #tpu.memory_space<vmem>>, vector<1x8x128xf32>
      %309 = vector.shape_cast %308 : vector<1x8x128xf32> to vector<8x128xf32>
      %310 = vector.shape_cast %306 : vector<8x128xf32> to vector<1x8x128xf32>
      tpu.vector_store %arg6[%307, %c0_84, %c0_85], %310 {strides = array<i32>} : memref<6x8x128xf32, #tpu.memory_space<vmem>>, vector<1x8x128xf32>,
      %c1_i32_86 = arith.constant 1 : i32
      %311 = arith.truncf %306 : vector<8x128xf32> to vector<8x128xbf16>
      %c0_87 = arith.constant 0 : index
      %c0_88 = arith.constant 0 : index
      %312 = vector.load %arg4[%c0_87, %c0_88] : memref<128x512xbf16, #tpu.memory_space<vmem>>, vector<128x512xbf16>
      %cst_89 = arith.constant dense<0.000000e+00> : vector<8x512xf32>
      %313 = tpu.matmul %311, %312, %cst_89 {dimension_numbers = #tpu.dot_dimension_numbers<[1], [0], [0], [1], [0, 0, 1, 1], [], []>} : vector<8x128xbf16>, vector<128x512xbf16>, vector<8x512xf32> -> vector<8x512xf32>
      %314 = arith.addf %276, %313 : vector<8x512xf32>
      %315 = vector.extract_strided_slice %314 {offsets = [0, 0], sizes = [8, 128], strides = [1, 1]} : vector<8x512xf32> to vector<8x128xf32>
      %316 = arith.negf %315 : vector<8x128xf32>
      %317 = math.exp %316 : vector<8x128xf32>
      %cst_90 = arith.constant 1.000000e+00 : f32
      %318 = vector.broadcast %cst_90 : f32 to vector<8x128xf32>
      %319 = arith.addf %318, %317 : vector<8x128xf32>
      %320 = arith.divf %318, %319 : vector<8x128xf32>
      %321 = vector.extract_strided_slice %314 {offsets = [0, 128], sizes = [8, 128], strides = [1, 1]} : vector<8x512xf32> to vector<8x128xf32>
      %322 = arith.negf %321 : vector<8x128xf32>
      %323 = math.exp %322 : vector<8x128xf32>
      %cst_91 = arith.constant 1.000000e+00 : f32
      %324 = vector.broadcast %cst_91 : f32 to vector<8x128xf32>
      %325 = arith.addf %324, %323 : vector<8x128xf32>
      %326 = arith.divf %324, %325 : vector<8x128xf32>
      %327 = vector.extract_strided_slice %314 {offsets = [0, 256], sizes = [8, 128], strides = [1, 1]} : vector<8x512xf32> to vector<8x128xf32>
      %328 = math.tanh %327 : vector<8x128xf32>
      %329 = vector.extract_strided_slice %314 {offsets = [0, 384], sizes = [8, 128], strides = [1, 1]} : vector<8x512xf32> to vector<8x128xf32>
      %330 = arith.negf %329 : vector<8x128xf32>
      %331 = math.exp %330 : vector<8x128xf32>
      %cst_92 = arith.constant 1.000000e+00 : f32
      %332 = vector.broadcast %cst_92 : f32 to vector<8x128xf32>
      %333 = arith.addf %332, %331 : vector<8x128xf32>
      %334 = arith.divf %332, %333 : vector<8x128xf32>
      %335 = arith.mulf %326, %304 : vector<8x128xf32>
      %336 = arith.mulf %320, %328 : vector<8x128xf32>
      %337 = arith.addf %335, %336 : vector<8x128xf32>
      %338 = math.tanh %337 : vector<8x128xf32>
      %339 = arith.mulf %334, %338 : vector<8x128xf32>
      %340 = arith.index_cast %c1_i32_86 : i32 to index
      %c0_93 = arith.constant 0 : index
      %c0_94 = arith.constant 0 : index
      %341 = vector.load %arg6[%340, %c0_93, %c0_94] : memref<6x8x128xf32, #tpu.memory_space<vmem>>, vector<1x8x128xf32>
      %342 = vector.shape_cast %341 : vector<1x8x128xf32> to vector<8x128xf32>
      %343 = vector.shape_cast %339 : vector<8x128xf32> to vector<1x8x128xf32>
      tpu.vector_store %arg6[%340, %c0_93, %c0_94], %343 {strides = array<i32>} : memref<6x8x128xf32, #tpu.memory_space<vmem>>, vector<1x8x128xf32>,
      %c2_i32_95 = arith.constant 2 : i32
      %344 = arith.truncf %339 : vector<8x128xf32> to vector<8x128xbf16>
      %c0_96 = arith.constant 0 : index
      %c0_97 = arith.constant 0 : index
      %345 = vector.load %arg4[%c0_96, %c0_97] : memref<128x512xbf16, #tpu.memory_space<vmem>>, vector<128x512xbf16>
      %cst_98 = arith.constant dense<0.000000e+00> : vector<8x512xf32>
      %346 = tpu.matmul %344, %345, %cst_98 {dimension_numbers = #tpu.dot_dimension_numbers<[1], [0], [0], [1], [0, 0, 1, 1], [], []>} : vector<8x128xbf16>, vector<128x512xbf16>, vector<8x512xf32> -> vector<8x512xf32>
      %347 = arith.addf %276, %346 : vector<8x512xf32>
      %348 = vector.extract_strided_slice %347 {offsets = [0, 0], sizes = [8, 128], strides = [1, 1]} : vector<8x512xf32> to vector<8x128xf32>
      %349 = arith.negf %348 : vector<8x128xf32>
      %350 = math.exp %349 : vector<8x128xf32>
      %cst_99 = arith.constant 1.000000e+00 : f32
      %351 = vector.broadcast %cst_99 : f32 to vector<8x128xf32>
      %352 = arith.addf %351, %350 : vector<8x128xf32>
      %353 = arith.divf %351, %352 : vector<8x128xf32>
      %354 = vector.extract_strided_slice %347 {offsets = [0, 128], sizes = [8, 128], strides = [1, 1]} : vector<8x512xf32> to vector<8x128xf32>
      %355 = arith.negf %354 : vector<8x128xf32>
      %356 = math.exp %355 : vector<8x128xf32>
      %cst_100 = arith.constant 1.000000e+00 : f32
      %357 = vector.broadcast %cst_100 : f32 to vector<8x128xf32>
      %358 = arith.addf %357, %356 : vector<8x128xf32>
      %359 = arith.divf %357, %358 : vector<8x128xf32>
      %360 = vector.extract_strided_slice %347 {offsets = [0, 256], sizes = [8, 128], strides = [1, 1]} : vector<8x512xf32> to vector<8x128xf32>
      %361 = math.tanh %360 : vector<8x128xf32>
      %362 = vector.extract_strided_slice %347 {offsets = [0, 384], sizes = [8, 128], strides = [1, 1]} : vector<8x512xf32> to vector<8x128xf32>
      %363 = arith.negf %362 : vector<8x128xf32>
      %364 = math.exp %363 : vector<8x128xf32>
      %cst_101 = arith.constant 1.000000e+00 : f32
      %365 = vector.broadcast %cst_101 : f32 to vector<8x128xf32>
      %366 = arith.addf %365, %364 : vector<8x128xf32>
      %367 = arith.divf %365, %366 : vector<8x128xf32>
      %368 = arith.mulf %359, %337 : vector<8x128xf32>
      %369 = arith.mulf %353, %361 : vector<8x128xf32>
      %370 = arith.addf %368, %369 : vector<8x128xf32>
      %371 = math.tanh %370 : vector<8x128xf32>
      %372 = arith.mulf %367, %371 : vector<8x128xf32>
      %373 = arith.index_cast %c2_i32_95 : i32 to index
      %c0_102 = arith.constant 0 : index
      %c0_103 = arith.constant 0 : index
      %374 = vector.load %arg6[%373, %c0_102, %c0_103] : memref<6x8x128xf32, #tpu.memory_space<vmem>>, vector<1x8x128xf32>
      %375 = vector.shape_cast %374 : vector<1x8x128xf32> to vector<8x128xf32>
      %376 = vector.shape_cast %372 : vector<8x128xf32> to vector<1x8x128xf32>
      tpu.vector_store %arg6[%373, %c0_102, %c0_103], %376 {strides = array<i32>} : memref<6x8x128xf32, #tpu.memory_space<vmem>>, vector<1x8x128xf32>,
      %c3_i32_104 = arith.constant 3 : i32
      %377 = arith.truncf %372 : vector<8x128xf32> to vector<8x128xbf16>
      %c0_105 = arith.constant 0 : index
      %c0_106 = arith.constant 0 : index
      %378 = vector.load %arg4[%c0_105, %c0_106] : memref<128x512xbf16, #tpu.memory_space<vmem>>, vector<128x512xbf16>
      %cst_107 = arith.constant dense<0.000000e+00> : vector<8x512xf32>
      %379 = tpu.matmul %377, %378, %cst_107 {dimension_numbers = #tpu.dot_dimension_numbers<[1], [0], [0], [1], [0, 0, 1, 1], [], []>} : vector<8x128xbf16>, vector<128x512xbf16>, vector<8x512xf32> -> vector<8x512xf32>
      %380 = arith.addf %276, %379 : vector<8x512xf32>
      %381 = vector.extract_strided_slice %380 {offsets = [0, 0], sizes = [8, 128], strides = [1, 1]} : vector<8x512xf32> to vector<8x128xf32>
      %382 = arith.negf %381 : vector<8x128xf32>
      %383 = math.exp %382 : vector<8x128xf32>
      %cst_108 = arith.constant 1.000000e+00 : f32
      %384 = vector.broadcast %cst_108 : f32 to vector<8x128xf32>
      %385 = arith.addf %384, %383 : vector<8x128xf32>
      %386 = arith.divf %384, %385 : vector<8x128xf32>
      %387 = vector.extract_strided_slice %380 {offsets = [0, 128], sizes = [8, 128], strides = [1, 1]} : vector<8x512xf32> to vector<8x128xf32>
      %388 = arith.negf %387 : vector<8x128xf32>
      %389 = math.exp %388 : vector<8x128xf32>
      %cst_109 = arith.constant 1.000000e+00 : f32
      %390 = vector.broadcast %cst_109 : f32 to vector<8x128xf32>
      %391 = arith.addf %390, %389 : vector<8x128xf32>
      %392 = arith.divf %390, %391 : vector<8x128xf32>
      %393 = vector.extract_strided_slice %380 {offsets = [0, 256], sizes = [8, 128], strides = [1, 1]} : vector<8x512xf32> to vector<8x128xf32>
      %394 = math.tanh %393 : vector<8x128xf32>
      %395 = vector.extract_strided_slice %380 {offsets = [0, 384], sizes = [8, 128], strides = [1, 1]} : vector<8x512xf32> to vector<8x128xf32>
      %396 = arith.negf %395 : vector<8x128xf32>
      %397 = math.exp %396 : vector<8x128xf32>
      %cst_110 = arith.constant 1.000000e+00 : f32
      %398 = vector.broadcast %cst_110 : f32 to vector<8x128xf32>
      %399 = arith.addf %398, %397 : vector<8x128xf32>
      %400 = arith.divf %398, %399 : vector<8x128xf32>
      %401 = arith.mulf %392, %370 : vector<8x128xf32>
      %402 = arith.mulf %386, %394 : vector<8x128xf32>
      %403 = arith.addf %401, %402 : vector<8x128xf32>
      %404 = math.tanh %403 : vector<8x128xf32>
      %405 = arith.mulf %400, %404 : vector<8x128xf32>
      %406 = arith.index_cast %c3_i32_104 : i32 to index
      %c0_111 = arith.constant 0 : index
      %c0_112 = arith.constant 0 : index
      %407 = vector.load %arg6[%406, %c0_111, %c0_112] : memref<6x8x128xf32, #tpu.memory_space<vmem>>, vector<1x8x128xf32>
      %408 = vector.shape_cast %407 : vector<1x8x128xf32> to vector<8x128xf32>
      %409 = vector.shape_cast %405 : vector<8x128xf32> to vector<1x8x128xf32>
      tpu.vector_store %arg6[%406, %c0_111, %c0_112], %409 {strides = array<i32>} : memref<6x8x128xf32, #tpu.memory_space<vmem>>, vector<1x8x128xf32>,
      %c4_i32_113 = arith.constant 4 : i32
      %410 = arith.truncf %405 : vector<8x128xf32> to vector<8x128xbf16>
      %c0_114 = arith.constant 0 : index
      %c0_115 = arith.constant 0 : index
      %411 = vector.load %arg4[%c0_114, %c0_115] : memref<128x512xbf16, #tpu.memory_space<vmem>>, vector<128x512xbf16>
      %cst_116 = arith.constant dense<0.000000e+00> : vector<8x512xf32>
      %412 = tpu.matmul %410, %411, %cst_116 {dimension_numbers = #tpu.dot_dimension_numbers<[1], [0], [0], [1], [0, 0, 1, 1], [], []>} : vector<8x128xbf16>, vector<128x512xbf16>, vector<8x512xf32> -> vector<8x512xf32>
      %413 = arith.addf %276, %412 : vector<8x512xf32>
      %414 = vector.extract_strided_slice %413 {offsets = [0, 0], sizes = [8, 128], strides = [1, 1]} : vector<8x512xf32> to vector<8x128xf32>
      %415 = arith.negf %414 : vector<8x128xf32>
      %416 = math.exp %415 : vector<8x128xf32>
      %cst_117 = arith.constant 1.000000e+00 : f32
      %417 = vector.broadcast %cst_117 : f32 to vector<8x128xf32>
      %418 = arith.addf %417, %416 : vector<8x128xf32>
      %419 = arith.divf %417, %418 : vector<8x128xf32>
      %420 = vector.extract_strided_slice %413 {offsets = [0, 128], sizes = [8, 128], strides = [1, 1]} : vector<8x512xf32> to vector<8x128xf32>
      %421 = arith.negf %420 : vector<8x128xf32>
      %422 = math.exp %421 : vector<8x128xf32>
      %cst_118 = arith.constant 1.000000e+00 : f32
      %423 = vector.broadcast %cst_118 : f32 to vector<8x128xf32>
      %424 = arith.addf %423, %422 : vector<8x128xf32>
      %425 = arith.divf %423, %424 : vector<8x128xf32>
      %426 = vector.extract_strided_slice %413 {offsets = [0, 256], sizes = [8, 128], strides = [1, 1]} : vector<8x512xf32> to vector<8x128xf32>
      %427 = math.tanh %426 : vector<8x128xf32>
      %428 = vector.extract_strided_slice %413 {offsets = [0, 384], sizes = [8, 128], strides = [1, 1]} : vector<8x512xf32> to vector<8x128xf32>
      %429 = arith.negf %428 : vector<8x128xf32>
      %430 = math.exp %429 : vector<8x128xf32>
      %cst_119 = arith.constant 1.000000e+00 : f32
      %431 = vector.broadcast %cst_119 : f32 to vector<8x128xf32>
      %432 = arith.addf %431, %430 : vector<8x128xf32>
      %433 = arith.divf %431, %432 : vector<8x128xf32>
      %434 = arith.mulf %425, %403 : vector<8x128xf32>
      %435 = arith.mulf %419, %427 : vector<8x128xf32>
      %436 = arith.addf %434, %435 : vector<8x128xf32>
      %437 = math.tanh %436 : vector<8x128xf32>
      %438 = arith.mulf %433, %437 : vector<8x128xf32>
      %439 = arith.index_cast %c4_i32_113 : i32 to index
      %c0_120 = arith.constant 0 : index
      %c0_121 = arith.constant 0 : index
      %440 = vector.load %arg6[%439, %c0_120, %c0_121] : memref<6x8x128xf32, #tpu.memory_space<vmem>>, vector<1x8x128xf32>
      %441 = vector.shape_cast %440 : vector<1x8x128xf32> to vector<8x128xf32>
      %442 = vector.shape_cast %438 : vector<8x128xf32> to vector<1x8x128xf32>
      tpu.vector_store %arg6[%439, %c0_120, %c0_121], %442 {strides = array<i32>} : memref<6x8x128xf32, #tpu.memory_space<vmem>>, vector<1x8x128xf32>,
      %c5_i32_122 = arith.constant 5 : i32
      %443 = arith.truncf %438 : vector<8x128xf32> to vector<8x128xbf16>
      %c0_123 = arith.constant 0 : index
      %c0_124 = arith.constant 0 : index
      %444 = vector.load %arg4[%c0_123, %c0_124] : memref<128x512xbf16, #tpu.memory_space<vmem>>, vector<128x512xbf16>
      %cst_125 = arith.constant dense<0.000000e+00> : vector<8x512xf32>
      %445 = tpu.matmul %443, %444, %cst_125 {dimension_numbers = #tpu.dot_dimension_numbers<[1], [0], [0], [1], [0, 0, 1, 1], [], []>} : vector<8x128xbf16>, vector<128x512xbf16>, vector<8x512xf32> -> vector<8x512xf32>
      %446 = arith.addf %276, %445 : vector<8x512xf32>
      %447 = vector.extract_strided_slice %446 {offsets = [0, 0], sizes = [8, 128], strides = [1, 1]} : vector<8x512xf32> to vector<8x128xf32>
      %448 = arith.negf %447 : vector<8x128xf32>
      %449 = math.exp %448 : vector<8x128xf32>
      %cst_126 = arith.constant 1.000000e+00 : f32
      %450 = vector.broadcast %cst_126 : f32 to vector<8x128xf32>
      %451 = arith.addf %450, %449 : vector<8x128xf32>
      %452 = arith.divf %450, %451 : vector<8x128xf32>
      %453 = vector.extract_strided_slice %446 {offsets = [0, 128], sizes = [8, 128], strides = [1, 1]} : vector<8x512xf32> to vector<8x128xf32>
      %454 = arith.negf %453 : vector<8x128xf32>
      %455 = math.exp %454 : vector<8x128xf32>
      %cst_127 = arith.constant 1.000000e+00 : f32
      %456 = vector.broadcast %cst_127 : f32 to vector<8x128xf32>
      %457 = arith.addf %456, %455 : vector<8x128xf32>
      %458 = arith.divf %456, %457 : vector<8x128xf32>
      %459 = vector.extract_strided_slice %446 {offsets = [0, 256], sizes = [8, 128], strides = [1, 1]} : vector<8x512xf32> to vector<8x128xf32>
      %460 = math.tanh %459 : vector<8x128xf32>
      %461 = vector.extract_strided_slice %446 {offsets = [0, 384], sizes = [8, 128], strides = [1, 1]} : vector<8x512xf32> to vector<8x128xf32>
      %462 = arith.negf %461 : vector<8x128xf32>
      %463 = math.exp %462 : vector<8x128xf32>
      %cst_128 = arith.constant 1.000000e+00 : f32
      %464 = vector.broadcast %cst_128 : f32 to vector<8x128xf32>
      %465 = arith.addf %464, %463 : vector<8x128xf32>
      %466 = arith.divf %464, %465 : vector<8x128xf32>
      %467 = arith.mulf %458, %436 : vector<8x128xf32>
      %468 = arith.mulf %452, %460 : vector<8x128xf32>
      %469 = arith.addf %467, %468 : vector<8x128xf32>
      %470 = math.tanh %469 : vector<8x128xf32>
      %471 = arith.mulf %466, %470 : vector<8x128xf32>
      %472 = arith.index_cast %c5_i32_122 : i32 to index
      %c0_129 = arith.constant 0 : index
      %c0_130 = arith.constant 0 : index
      %473 = vector.load %arg6[%472, %c0_129, %c0_130] : memref<6x8x128xf32, #tpu.memory_space<vmem>>, vector<1x8x128xf32>
      %474 = vector.shape_cast %473 : vector<1x8x128xf32> to vector<8x128xf32>
      %475 = vector.shape_cast %471 : vector<8x128xf32> to vector<1x8x128xf32>
      tpu.vector_store %arg6[%472, %c0_129, %c0_130], %475 {strides = array<i32>} : memref<6x8x128xf32, #tpu.memory_space<vmem>>, vector<1x8x128xf32>,
      %c6_i32_131 = arith.constant 6 : i32
    } else {
    }
    return
  }
  func.func @transform_0(%arg0: i32, %arg1: i32) -> (i32, i32, i32) {
    %c0_i32 = arith.constant 0 : i32
    %c0_i32_0 = arith.constant 0 : i32
    return %arg1, %arg0, %c0_i32 : i32, i32, i32
  }
  func.func @transform_1(%arg0: i32, %arg1: i32) -> (i32, i32) {
    %c0_i32 = arith.constant 0 : i32
    %c0_i32_0 = arith.constant 0 : i32
    %c0_i32_1 = arith.constant 0 : i32
    return %c0_i32, %c0_i32_0 : i32, i32
  }
  func.func @transform_2(%arg0: i32, %arg1: i32) -> (i32, i32) {
    %c0_i32 = arith.constant 0 : i32
    %c0_i32_0 = arith.constant 0 : i32
    %c0_i32_1 = arith.constant 0 : i32
    return %c0_i32, %c0_i32_0 : i32, i32
  }
  func.func @transform_3(%arg0: i32, %arg1: i32) -> (i32, i32) {
    %c0_i32 = arith.constant 0 : i32
    %c0_i32_0 = arith.constant 0 : i32
    %c0_i32_1 = arith.constant 0 : i32
    return %c0_i32, %c0_i32_0 : i32, i32
  }
  func.func @transform_4(%arg0: i32, %arg1: i32) -> (i32, i32, i32) {
    %c0_i32 = arith.constant 0 : i32
    %c0_i32_0 = arith.constant 0 : i32
    %c0_i32_1 = arith.constant 0 : i32
    return %c0_i32, %arg0, %c0_i32_0 : i32, i32, i32
  }
}

</mosaic_0001>

<llo_original>
// kernel: seq2seq_lstm.1
$region0: #{seq2seq_lstm.1}
  #allocation0 [shape = 'u32[]', space=smem, size = 0x4, offset = 0x4, fixed_abs, tag = 'smem constant byte address 0x4 - core index']
  #allocation1 [shape = 'u32[144,128]{1,0:T(1,128)}', space=vmem, size = 0x12000, scoped, tag = 'internal scratch']
  #allocation2 [shape = 'f32[8,128]{1,0:T(8,128)}', space=vmem, size = 0x1000, scoped, tag = 'scratch operand']
  #allocation3 [shape = 'f32[8,128]{1,0:T(8,128)}', space=vmem, size = 0x1000, scoped, tag = 'scratch operand']
  %s0 = inlined_call_operand.vmem [shape: bf16[8,8,512], index: 0, kind: input, shape index: {}]
  %s1 = inlined_call_operand.vmem [shape: bf16[128,512], index: 1, kind: input, shape index: {}]
  %s2 = inlined_call_operand.vmem [shape: bf16[128,512], index: 2, kind: input, shape index: {}]
  %s3 = inlined_call_operand.vmem [shape: f32[1,512], index: 3, kind: input, shape index: {}]
  %s4 = inlined_call_operand.vmem [shape: f32[6,8,128], index: 4, kind: output, shape index: {}]
  %s5 = sld [smem:[#allocation0]]
  $region34: #{seq2seq_lstm.1} parent=0
    _
  %s7 = ssub.s32 1, %s5
  %s8 = scalar_select 0, %s7, %s5
  // Predicated region
  $region2: #{seq2seq_lstm.1} parent=0 // pred_check
    _
  $region3: #{seq2seq_lstm.1} parent=0 // pred_check_branch
    %10 = sbr.rel (0) target = $region5
  $region4: #{seq2seq_lstm.1} parent=0 // pred_region
    _
  $region5: #{seq2seq_lstm.1} parent=0 // pred_fallthru
    _
  // Predicated region
  $region6: #{seq2seq_lstm.1} parent=0 // pred_check
    _
  $region7: #{seq2seq_lstm.1} parent=0 // pred_check_branch
    %12 = sbr.rel (0) target = $region9
  $region8: #{seq2seq_lstm.1} parent=0 // pred_region
    _
  $region9: #{seq2seq_lstm.1} parent=0 // pred_fallthru
    _
  // Predicated region
  $region10: #{seq2seq_lstm.1} parent=0 // pred_check
    _
  $region11: #{seq2seq_lstm.1} parent=0 // pred_check_branch
    %14 = sbr.rel (0) target = $region13
  $region12: #{seq2seq_lstm.1} parent=0 // pred_region
    _
  $region13: #{seq2seq_lstm.1} parent=0 // pred_fallthru
    _
  // Predicated region
  $region14: #{seq2seq_lstm.1} parent=0 // pred_check
    _
  $region15: #{seq2seq_lstm.1} parent=0 // pred_check_branch
    %16 = sbr.rel (0) target = $region17
  $region16: #{seq2seq_lstm.1} parent=0 // pred_region
    _
  $region17: #{seq2seq_lstm.1} parent=0 // pred_fallthru
    _
  %p18 = scmp.eq.s32.totalorder 0, 0
  // Predicated region
  $region18: #{seq2seq_lstm.1} parent=0 // pred_check
    %p19 = pneg %p18
  $region19: #{seq2seq_lstm.1} parent=0 // pred_check_branch
    %21 = sbr.rel (%p19) target = $region21
  $region20: #{seq2seq_lstm.1} parent=0 // pred_region
    %22 = vst [vmem:[#allocation2] sm:$0xff] 0.0
    %23 = vst [vmem:[#allocation3] sm:$0xff] 0.0
  $region21: #{seq2seq_lstm.1} parent=0 // pred_fallthru
    _
  %v24 = vld [vmem:[#allocation2] sm:$0xff]
  %v25 = vld [vmem:[#allocation3] sm:$0xff]
  %v26 = vld [vmem:[%s0] sm:$0xff]
  %v27 = vld [vmem:[%s0 + $0x8] sm:$0xff]
  %v28 = vunpack.c.l.bf16 %v26
  %v29 = vunpack.c.h.bf16 %v26
  %v30 = vunpack.c.l.bf16 %v27
  %v31 = vunpack.c.h.bf16 %v27
  %v32 = vpack.c.bf16 %v24, %v24
  %v33 = vld [vmem:[%s1] sm:$0xff]
  %v34 = vld [vmem:[%s1 + $0x8] sm:$0xff]
  %v35 = vld [vmem:[%s1 + $0x10] sm:$0xff]
  %v36 = vld [vmem:[%s1 + $0x18] sm:$0xff]
  %v37 = vld [vmem:[%s1 + $0x20] sm:$0xff]
  %v38 = vld [vmem:[%s1 + $0x28] sm:$0xff]
  %v39 = vld [vmem:[%s1 + $0x30] sm:$0xff]
  %v40 = vld [vmem:[%s1 + $0x38] sm:$0xff]
  %v41 = vld [vmem:[%s1 + $0x40] sm:$0xff]
  %v42 = vld [vmem:[%s1 + $0x48] sm:$0xff]
  %v43 = vld [vmem:[%s1 + $0x50] sm:$0xff]
  %v44 = vld [vmem:[%s1 + $0x58] sm:$0xff]
  %v45 = vld [vmem:[%s1 + $0x60] sm:$0xff]
  %v46 = vld [vmem:[%s1 + $0x68] sm:$0xff]
  %v47 = vld [vmem:[%s1 + $0x70] sm:$0xff]
  %v48 = vld [vmem:[%s1 + $0x78] sm:$0xff]
  %v49 = vld [vmem:[%s1 + $0x80] sm:$0xff]
  %v50 = vld [vmem:[%s1 + $0x88] sm:$0xff]
  %v51 = vld [vmem:[%s1 + $0x90] sm:$0xff]
  %v52 = vld [vmem:[%s1 + $0x98] sm:$0xff]
  %v53 = vld [vmem:[%s1 + $0xa0] sm:$0xff]
  %v54 = vld [vmem:[%s1 + $0xa8] sm:$0xff]
  %v55 = vld [vmem:[%s1 + $0xb0] sm:$0xff]
  %v56 = vld [vmem:[%s1 + $0xb8] sm:$0xff]
  %v57 = vld [vmem:[%s1 + $0xc0] sm:$0xff]
  %v58 = vld [vmem:[%s1 + $0xc8] sm:$0xff]
  %v59 = vld [vmem:[%s1 + $0xd0] sm:$0xff]
  %v60 = vld [vmem:[%s1 + $0xd8] sm:$0xff]
  %v61 = vld [vmem:[%s1 + $0xe0] sm:$0xff]
  %v62 = vld [vmem:[%s1 + $0xe8] sm:$0xff]
  %v63 = vld [vmem:[%s1 + $0xf0] sm:$0xff]
  %v64 = vld [vmem:[%s1 + $0xf8] sm:$0xff]
  %v97 = vunpack.c.l.b16 %v33
  %v98 = vunpack.c.h.b16 %v33
  %v99 = vunpack.c.l.b16 %v34
  %v100 = vunpack.c.h.b16 %v34
  %v101 = vunpack.c.l.b16 %v35
  %v102 = vunpack.c.h.b16 %v35
  %v103 = vunpack.c.l.b16 %v36
  %v104 = vunpack.c.h.b16 %v36
  %v105 = vunpack.c.l.b16 %v37
  %v106 = vunpack.c.h.b16 %v37
  %v107 = vunpack.c.l.b16 %v38
  %v108 = vunpack.c.h.b16 %v38
  %v109 = vunpack.c.l.b16 %v39
  %v110 = vunpack.c.h.b16 %v39
  %v111 = vunpack.c.l.b16 %v40
  %v112 = vunpack.c.h.b16 %v40
  %v113 = vunpack.c.l.b16 %v41
  %v114 = vunpack.c.h.b16 %v41
  %v115 = vunpack.c.l.b16 %v42
  %v116 = vunpack.c.h.b16 %v42
  %v117 = vunpack.c.l.b16 %v43
  %v118 = vunpack.c.h.b16 %v43
  %v119 = vunpack.c.l.b16 %v44
  %v120 = vunpack.c.h.b16 %v44
  %v121 = vunpack.c.l.b16 %v45
  %v122 = vunpack.c.h.b16 %v45
  %v123 = vunpack.c.l.b16 %v46
  %v124 = vunpack.c.h.b16 %v46
  %v125 = vunpack.c.l.b16 %v47
  %v126 = vunpack.c.h.b16 %v47
  %v127 = vunpack.c.l.b16 %v48
  %v128 = vunpack.c.h.b16 %v48
  %v129 = vunpack.c.l.b16 %v49
  %v130 = vunpack.c.h.b16 %v49
  %v131 = vunpack.c.l.b16 %v50
  %v132 = vunpack.c.h.b16 %v50
  %v133 = vunpack.c.l.b16 %v51
  %v134 = vunpack.c.h.b16 %v51
  %v135 = vunpack.c.l.b16 %v52
  %v136 = vunpack.c.h.b16 %v52
  %v137 = vunpack.c.l.b16 %v53
  %v138 = vunpack.c.h.b16 %v53
  %v139 = vunpack.c.l.b16 %v54
  %v140 = vunpack.c.h.b16 %v54
  %v141 = vunpack.c.l.b16 %v55
  %v142 = vunpack.c.h.b16 %v55
  %v143 = vunpack.c.l.b16 %v56
  %v144 = vunpack.c.h.b16 %v56
  %v145 = vunpack.c.l.b16 %v57
  %v146 = vunpack.c.h.b16 %v57
  %v147 = vunpack.c.l.b16 %v58
  %v148 = vunpack.c.h.b16 %v58
  %v149 = vunpack.c.l.b16 %v59
  %v150 = vunpack.c.h.b16 %v59
  %v151 = vunpack.c.l.b16 %v60
  %v152 = vunpack.c.h.b16 %v60
  %v153 = vunpack.c.l.b16 %v61
  %v154 = vunpack.c.h.b16 %v61
  %v155 = vunpack.c.l.b16 %v62
  %v156 = vunpack.c.h.b16 %v62
  %v157 = vunpack.c.l.b16 %v63
  %v158 = vunpack.c.h.b16 %v63
  %v159 = vunpack.c.l.b16 %v64
  %v160 = vunpack.c.h.b16 %v64
  %v161 = vpack.c.b16 %v101, %v97
  %v162 = vpack.c.b16 %v102, %v98
  %v163 = vpack.c.b16 %v103, %v99
  %v164 = vpack.c.b16 %v104, %v100
  %v165 = vpack.c.b16 %v109, %v105
  %v166 = vpack.c.b16 %v110, %v106
  %v167 = vpack.c.b16 %v111, %v107
  %v168 = vpack.c.b16 %v112, %v108
  %v169 = vpack.c.b16 %v117, %v113
  %v170 = vpack.c.b16 %v118, %v114
  %v171 = vpack.c.b16 %v119, %v115
  %v172 = vpack.c.b16 %v120, %v116
  %v173 = vpack.c.b16 %v125, %v121
  %v174 = vpack.c.b16 %v126, %v122
  %v175 = vpack.c.b16 %v127, %v123
  %v176 = vpack.c.b16 %v128, %v124
  %v177 = vpack.c.b16 %v133, %v129
  %v178 = vpack.c.b16 %v134, %v130
  %v179 = vpack.c.b16 %v135, %v131
  %v180 = vpack.c.b16 %v136, %v132
  %v181 = vpack.c.b16 %v141, %v137
  %v182 = vpack.c.b16 %v142, %v138
  %v183 = vpack.c.b16 %v143, %v139
  %v184 = vpack.c.b16 %v144, %v140
  %v185 = vpack.c.b16 %v149, %v145
  %v186 = vpack.c.b16 %v150, %v146
  %v187 = vpack.c.b16 %v151, %v147
  %v188 = vpack.c.b16 %v152, %v148
  %v189 = vpack.c.b16 %v157, %v153
  %v190 = vpack.c.b16 %v158, %v154
  %v191 = vpack.c.b16 %v159, %v155
  %v192 = vpack.c.b16 %v160, %v156
  %225 = vmatprep.subr.bf16.mxu0 %v190
  %226 = vmatpush1.bf16.msra.mxu0 %v189
  %227 = vmatprep.subr.bf16.mxu0 %v186
  %228 = vmatpush1.bf16.msra.mxu0 %v185
  %229 = vmatprep.subr.bf16.mxu0 %v182
  %230 = vmatpush1.bf16.msra.mxu0 %v181
  %231 = vmatprep.subr.bf16.mxu0 %v178
  %232 = vmatpush1.bf16.msra.mxu0 %v177
  %233 = vmatprep.subr.bf16.mxu0 %v174
  %234 = vmatpush1.bf16.msra.mxu0 %v173
  %235 = vmatprep.subr.bf16.mxu0 %v170
  %236 = vmatpush1.bf16.msra.mxu0 %v169
  %237 = vmatprep.subr.bf16.mxu0 %v166
  %238 = vmatpush1.bf16.msra.mxu0 %v165
  %239 = vmatprep.subr.bf16.mxu0 %v162
  %240 = vmatpush1.bf16.msra.mxu0 %v161
  %241 = vmatprep.subr.bf16.mxu0 0
  %242 = vmatpush2.bf16.msra.mxu0 0
  %243 = vmatprep.subr.bf16.mxu0 0
  %244 = vmatpush2.bf16.msra.mxu0 0
  %245 = vmatprep.subr.bf16.mxu0 0
  %246 = vmatpush2.bf16.msra.mxu0 0
  %247 = vmatprep.subr.bf16.mxu0 0
  %248 = vmatpush2.bf16.msra.mxu0 0
  %249 = vmatprep.subr.bf16.mxu0 0
  %250 = vmatpush2.bf16.msra.mxu0 0
  %251 = vmatprep.subr.bf16.mxu0 0
  %252 = vmatpush2.bf16.msra.mxu0 0
  %253 = vmatprep.subr.bf16.mxu0 0
  %254 = vmatpush2.bf16.msra.mxu0 0
  %255 = vmatprep.subr.bf16.mxu0 0
  %256 = vmatpush2.bf16.msra.mxu0 0
  %257 = vmatprep.mubr.bf16.mxu0 0
  %258 = vmatmul.mubr.bf16.gmra.mxu0 %v32
  %v259 = vpop.f32.mrf.mxu0
  %v260 = vadd.f32 0.0, %v259
  %v261 = vpop.f32.mrf.mxu0
  %v262 = vadd.f32 0.0, %v261
  %v263 = vpop.f32.mrf.mxu0
  %v264 = vpop.f32.mrf.mxu0
  %265 = vdwg.mxu0
  %266 = vmatprep.subr.bf16.mxu0 %v192
  %267 = vmatpush1.bf16.msra.mxu0 %v191
  %268 = vmatprep.subr.bf16.mxu0 %v188
  %269 = vmatpush1.bf16.msra.mxu0 %v187
  %270 = vmatprep.subr.bf16.mxu0 %v184
  %271 = vmatpush1.bf16.msra.mxu0 %v183
  %272 = vmatprep.subr.bf16.mxu0 %v180
  %273 = vmatpush1.bf16.msra.mxu0 %v179
  %274 = vmatprep.subr.bf16.mxu0 %v176
  %275 = vmatpush1.bf16.msra.mxu0 %v175
  %276 = vmatprep.subr.bf16.mxu0 %v172
  %277 = vmatpush1.bf16.msra.mxu0 %v171
  %278 = vmatprep.subr.bf16.mxu0 %v168
  %279 = vmatpush1.bf16.msra.mxu0 %v167
  %280 = vmatprep.subr.bf16.mxu0 %v164
  %281 = vmatpush1.bf16.msra.mxu0 %v163
  %282 = vmatprep.subr.bf16.mxu0 0
  %283 = vmatpush2.bf16.msra.mxu0 0
  %284 = vmatprep.subr.bf16.mxu0 0
  %285 = vmatpush2.bf16.msra.mxu0 0
  %286 = vmatprep.subr.bf16.mxu0 0
  %287 = vmatpush2.bf16.msra.mxu0 0
  %288 = vmatprep.subr.bf16.mxu0 0
  %289 = vmatpush2.bf16.msra.mxu0 0
  %290 = vmatprep.subr.bf16.mxu0 0
  %291 = vmatpush2.bf16.msra.mxu0 0
  %292 = vmatprep.subr.bf16.mxu0 0
  %293 = vmatpush2.bf16.msra.mxu0 0
  %294 = vmatprep.subr.bf16.mxu0 0
  %295 = vmatpush2.bf16.msra.mxu0 0
  %296 = vmatprep.subr.bf16.mxu0 0
  %297 = vmatpush2.bf16.msra.mxu0 0
  %298 = vmatprep.mubr.bf16.mxu0 0
  %299 = vmatmul.mubr.bf16.gmra.mxu0 %v32
  %v300 = vpop.f32.mrf.mxu0
  %v301 = vadd.f32 0.0, %v300
  %v302 = vpop.f32.mrf.mxu0
  %v303 = vadd.f32 0.0, %v302
  %v304 = vpop.f32.mrf.mxu0
  %v305 = vpop.f32.mrf.mxu0
  %306 = vdwg.mxu0
  %v307 = vadd.f32 %v28, %v260
  %v308 = vadd.f32 %v29, %v262
  %v309 = vadd.f32 %v30, %v301
  %v310 = vadd.f32 %v31, %v303
  %v311 = vxor.u32 %v307, 2147483648
  %v312 = vmul.f32 %v311, 1.442695
  %v313 = vpow.pop %v312
  %v314 = vadd.f32 %v313, 1.0
  %v315 = vrcp.pop %v314
  %v316 = vmul.f32 1.0, %v315
  %v317 = vxor.u32 %v308, 2147483648
  %v318 = vmul.f32 %v317, 1.442695
  %v319 = vpow.pop %v318
  %v320 = vadd.f32 %v319, 1.0
  %v321 = vrcp.pop %v320
  %v322 = vmul.f32 1.0, %v321
  %v323 = vtanh.pop %v309
  %v324 = vxor.u32 %v310, 2147483648
  %v325 = vmul.f32 %v324, 1.442695
  %v326 = vpow.pop %v325
  %v327 = vadd.f32 %v326, 1.0
  %v328 = vrcp.pop %v327
  %v329 = vmul.f32 1.0, %v328
  %v330 = vmul.f32 %v322, %v25
  %v331 = vmul.f32 %v316, %v323
  %v332 = vadd.f32 %v330, %v331
  %v333 = vtanh.pop %v332
  %v334 = vmul.f32 %v329, %v333
  %s335 = scalar_lea.vmem %s0, 16
  %v336 = vld [vmem:[%s335] sm:$0xff]
  %v337 = vld [vmem:[%s335 + $0x8] sm:$0xff]
  %v338 = vunpack.c.l.bf16 %v336
  %v339 = vunpack.c.h.bf16 %v336
  %v340 = vunpack.c.l.bf16 %v337
  %v341 = vunpack.c.h.bf16 %v337
  %v342 = vpack.c.bf16 %v334, %v334
  %343 = vmatprep.subr.bf16.mxu0 %v190
  %344 = vmatpush1.bf16.msra.mxu0 %v189
  %345 = vmatprep.subr.bf16.mxu0 %v186
  %346 = vmatpush1.bf16.msra.mxu0 %v185
  %347 = vmatprep.subr.bf16.mxu0 %v182
  %348 = vmatpush1.bf16.msra.mxu0 %v181
  %349 = vmatprep.subr.bf16.mxu0 %v178
  %350 = vmatpush1.bf16.msra.mxu0 %v177
  %351 = vmatprep.subr.bf16.mxu0 %v174
  %352 = vmatpush1.bf16.msra.mxu0 %v173
  %353 = vmatprep.subr.bf16.mxu0 %v170
  %354 = vmatpush1.bf16.msra.mxu0 %v169
  %355 = vmatprep.subr.bf16.mxu0 %v166
  %356 = vmatpush1.bf16.msra.mxu0 %v165
  %357 = vmatprep.subr.bf16.mxu0 %v162
  %358 = vmatpush1.bf16.msra.mxu0 %v161
  %359 = vmatprep.subr.bf16.mxu0 0
  %360 = vmatpush2.bf16.msra.mxu0 0
  %361 = vmatprep.subr.bf16.mxu0 0
  %362 = vmatpush2.bf16.msra.mxu0 0
  %363 = vmatprep.subr.bf16.mxu0 0
  %364 = vmatpush2.bf16.msra.mxu0 0
  %365 = vmatprep.subr.bf16.mxu0 0
  %366 = vmatpush2.bf16.msra.mxu0 0
  %367 = vmatprep.subr.bf16.mxu0 0
  %368 = vmatpush2.bf16.msra.mxu0 0
  %369 = vmatprep.subr.bf16.mxu0 0
  %370 = vmatpush2.bf16.msra.mxu0 0
  %371 = vmatprep.subr.bf16.mxu0 0
  %372 = vmatpush2.bf16.msra.mxu0 0
  %373 = vmatprep.subr.bf16.mxu0 0
  %374 = vmatpush2.bf16.msra.mxu0 0
  %375 = vmatprep.mubr.bf16.mxu0 0
  %376 = vmatmul.mubr.bf16.gmra.mxu0 %v342
  %v377 = vpop.f32.mrf.mxu0
  %v378 = vadd.f32 0.0, %v377
  %v379 = vpop.f32.mrf.mxu0
  %v380 = vadd.f32 0.0, %v379
  %v381 = vpop.f32.mrf.mxu0
  %v382 = vpop.f32.mrf.mxu0
  %383 = vdwg.mxu0
  %384 = vmatprep.subr.bf16.mxu0 %v192
  %385 = vmatpush1.bf16.msra.mxu0 %v191
  %386 = vmatprep.subr.bf16.mxu0 %v188
  %387 = vmatpush1.bf16.msra.mxu0 %v187
  %388 = vmatprep.subr.bf16.mxu0 %v184
  %389 = vmatpush1.bf16.msra.mxu0 %v183
  %390 = vmatprep.subr.bf16.mxu0 %v180
  %391 = vmatpush1.bf16.msra.mxu0 %v179
  %392 = vmatprep.subr.bf16.mxu0 %v176
  %393 = vmatpush1.bf16.msra.mxu0 %v175
  %394 = vmatprep.subr.bf16.mxu0 %v172
  %395 = vmatpush1.bf16.msra.mxu0 %v171
  %396 = vmatprep.subr.bf16.mxu0 %v168
  %397 = vmatpush1.bf16.msra.mxu0 %v167
  %398 = vmatprep.subr.bf16.mxu0 %v164
  %399 = vmatpush1.bf16.msra.mxu0 %v163
  %400 = vmatprep.subr.bf16.mxu0 0
  %401 = vmatpush2.bf16.msra.mxu0 0
  %402 = vmatprep.subr.bf16.mxu0 0
  %403 = vmatpush2.bf16.msra.mxu0 0
  %404 = vmatprep.subr.bf16.mxu0 0
  %405 = vmatpush2.bf16.msra.mxu0 0
  %406 = vmatprep.subr.bf16.mxu0 0
  %407 = vmatpush2.bf16.msra.mxu0 0
  %408 = vmatprep.subr.bf16.mxu0 0
  %409 = vmatpush2.bf16.msra.mxu0 0
  %410 = vmatprep.subr.bf16.mxu0 0
  %411 = vmatpush2.bf16.msra.mxu0 0
  %412 = vmatprep.subr.bf16.mxu0 0
  %413 = vmatpush2.bf16.msra.mxu0 0
  %414 = vmatprep.subr.bf16.mxu0 0
  %415 = vmatpush2.bf16.msra.mxu0 0
  %416 = vmatprep.mubr.bf16.mxu0 0
  %417 = vmatmul.mubr.bf16.gmra.mxu0 %v342
  %v418 = vpop.f32.mrf.mxu0
  %v419 = vadd.f32 0.0, %v418
  %v420 = vpop.f32.mrf.mxu0
  %v421 = vadd.f32 0.0, %v420
  %v422 = vpop.f32.mrf.mxu0
  %v423 = vpop.f32.mrf.mxu0
  %424 = vdwg.mxu0
  %v425 = vadd.f32 %v338, %v378
  %v426 = vadd.f32 %v339, %v380
  %v427 = vadd.f32 %v340, %v419
  %v428 = vadd.f32 %v341, %v421
  %v429 = vxor.u32 %v425, 2147483648
  %v430 = vmul.f32 %v429, 1.442695
  %v431 = vpow.pop %v430
  %v432 = vadd.f32 %v431, 1.0
  %v433 = vrcp.pop %v432
  %v434 = vmul.f32 1.0, %v433
  %v435 = vxor.u32 %v426, 2147483648
  %v436 = vmul.f32 %v435, 1.442695
  %v437 = vpow.pop %v436
  %v438 = vadd.f32 %v437, 1.0
  %v439 = vrcp.pop %v438
  %v440 = vmul.f32 1.0, %v439
  %v441 = vtanh.pop %v427
  %v442 = vxor.u32 %v428, 2147483648
  %v443 = vmul.f32 %v442, 1.442695
  %v444 = vpow.pop %v443
  %v445 = vadd.f32 %v444, 1.0
  %v446 = vrcp.pop %v445
  %v447 = vmul.f32 1.0, %v446
  %v448 = vmul.f32 %v440, %v332
  %v449 = vmul.f32 %v434, %v441
  %v450 = vadd.f32 %v448, %v449
  %v451 = vtanh.pop %v450
  %v452 = vmul.f32 %v447, %v451
  %s453 = scalar_lea.vmem %s0, 32
  %v454 = vld [vmem:[%s453] sm:$0xff]
  %v455 = vld [vmem:[%s453 + $0x8] sm:$0xff]
  %v456 = vunpack.c.l.bf16 %v454
  %v457 = vunpack.c.h.bf16 %v454
  %v458 = vunpack.c.l.bf16 %v455
  %v459 = vunpack.c.h.bf16 %v455
  %v460 = vpack.c.bf16 %v452, %v452
  %461 = vmatprep.subr.bf16.mxu0 %v190
  %462 = vmatpush1.bf16.msra.mxu0 %v189
  %463 = vmatprep.subr.bf16.mxu0 %v186
  %464 = vmatpush1.bf16.msra.mxu0 %v185
  %465 = vmatprep.subr.bf16.mxu0 %v182
  %466 = vmatpush1.bf16.msra.mxu0 %v181
  %467 = vmatprep.subr.bf16.mxu0 %v178
  %468 = vmatpush1.bf16.msra.mxu0 %v177
  %469 = vmatprep.subr.bf16.mxu0 %v174
  %470 = vmatpush1.bf16.msra.mxu0 %v173
  %471 = vmatprep.subr.bf16.mxu0 %v170
  %472 = vmatpush1.bf16.msra.mxu0 %v169
  %473 = vmatprep.subr.bf16.mxu0 %v166
  %474 = vmatpush1.bf16.msra.mxu0 %v165
  %475 = vmatprep.subr.bf16.mxu0 %v162
  %476 = vmatpush1.bf16.msra.mxu0 %v161
  %477 = vmatprep.subr.bf16.mxu0 0
  %478 = vmatpush2.bf16.msra.mxu0 0
  %479 = vmatprep.subr.bf16.mxu0 0
  %480 = vmatpush2.bf16.msra.mxu0 0
  %481 = vmatprep.subr.bf16.mxu0 0
  %482 = vmatpush2.bf16.msra.mxu0 0
  %483 = vmatprep.subr.bf16.mxu0 0
  %484 = vmatpush2.bf16.msra.mxu0 0
  %485 = vmatprep.subr.bf16.mxu0 0
  %486 = vmatpush2.bf16.msra.mxu0 0
  %487 = vmatprep.subr.bf16.mxu0 0
  %488 = vmatpush2.bf16.msra.mxu0 0
  %489 = vmatprep.subr.bf16.mxu0 0
  %490 = vmatpush2.bf16.msra.mxu0 0
  %491 = vmatprep.subr.bf16.mxu0 0
  %492 = vmatpush2.bf16.msra.mxu0 0
  %493 = vmatprep.mubr.bf16.mxu0 0
  %494 = vmatmul.mubr.bf16.gmra.mxu0 %v460
  %v495 = vpop.f32.mrf.mxu0
  %v496 = vadd.f32 0.0, %v495
  %v497 = vpop.f32.mrf.mxu0
  %v498 = vadd.f32 0.0, %v497
  %v499 = vpop.f32.mrf.mxu0
  %v500 = vpop.f32.mrf.mxu0
  %501 = vdwg.mxu0
  %502 = vmatprep.subr.bf16.mxu0 %v192
  %503 = vmatpush1.bf16.msra.mxu0 %v191
  %504 = vmatprep.subr.bf16.mxu0 %v188
  %505 = vmatpush1.bf16.msra.mxu0 %v187
  %506 = vmatprep.subr.bf16.mxu0 %v184
  %507 = vmatpush1.bf16.msra.mxu0 %v183
  %508 = vmatprep.subr.bf16.mxu0 %v180
  %509 = vmatpush1.bf16.msra.mxu0 %v179
  %510 = vmatprep.subr.bf16.mxu0 %v176
  %511 = vmatpush1.bf16.msra.mxu0 %v175
  %512 = vmatprep.subr.bf16.mxu0 %v172
  %513 = vmatpush1.bf16.msra.mxu0 %v171
  %514 = vmatprep.subr.bf16.mxu0 %v168
  %515 = vmatpush1.bf16.msra.mxu0 %v167
  %516 = vmatprep.subr.bf16.mxu0 %v164
  %517 = vmatpush1.bf16.msra.mxu0 %v163
  %518 = vmatprep.subr.bf16.mxu0 0
  %519 = vmatpush2.bf16.msra.mxu0 0
  %520 = vmatprep.subr.bf16.mxu0 0
  %521 = vmatpush2.bf16.msra.mxu0 0
  %522 = vmatprep.subr.bf16.mxu0 0
  %523 = vmatpush2.bf16.msra.mxu0 0
  %524 = vmatprep.subr.bf16.mxu0 0
  %525 = vmatpush2.bf16.msra.mxu0 0
  %526 = vmatprep.subr.bf16.mxu0 0
  %527 = vmatpush2.bf16.msra.mxu0 0
  %528 = vmatprep.subr.bf16.mxu0 0
  %529 = vmatpush2.bf16.msra.mxu0 0
  %530 = vmatprep.subr.bf16.mxu0 0
  %531 = vmatpush2.bf16.msra.mxu0 0
  %532 = vmatprep.subr.bf16.mxu0 0
  %533 = vmatpush2.bf16.msra.mxu0 0
  %534 = vmatprep.mubr.bf16.mxu0 0
  %535 = vmatmul.mubr.bf16.gmra.mxu0 %v460
  %v536 = vpop.f32.mrf.mxu0
  %v537 = vadd.f32 0.0, %v536
  %v538 = vpop.f32.mrf.mxu0
  %v539 = vadd.f32 0.0, %v538
  %v540 = vpop.f32.mrf.mxu0
  %v541 = vpop.f32.mrf.mxu0
  %542 = vdwg.mxu0
  %v543 = vadd.f32 %v456, %v496
  %v544 = vadd.f32 %v457, %v498
  %v545 = vadd.f32 %v458, %v537
  %v546 = vadd.f32 %v459, %v539
  %v547 = vxor.u32 %v543, 2147483648
  %v548 = vmul.f32 %v547, 1.442695
  %v549 = vpow.pop %v548
  %v550 = vadd.f32 %v549, 1.0
  %v551 = vrcp.pop %v550
  %v552 = vmul.f32 1.0, %v551
  %v553 = vxor.u32 %v544, 2147483648
  %v554 = vmul.f32 %v553, 1.442695
  %v555 = vpow.pop %v554
  %v556 = vadd.f32 %v555, 1.0
  %v557 = vrcp.pop %v556
  %v558 = vmul.f32 1.0, %v557
  %v559 = vtanh.pop %v545
  %v560 = vxor.u32 %v546, 2147483648
  %v561 = vmul.f32 %v560, 1.442695
  %v562 = vpow.pop %v561
  %v563 = vadd.f32 %v562, 1.0
  %v564 = vrcp.pop %v563
  %v565 = vmul.f32 1.0, %v564
  %v566 = vmul.f32 %v558, %v450
  %v567 = vmul.f32 %v552, %v559
  %v568 = vadd.f32 %v566, %v567
  %v569 = vtanh.pop %v568
  %v570 = vmul.f32 %v565, %v569
  %s571 = scalar_lea.vmem %s0, 48
  %v572 = vld [vmem:[%s571] sm:$0xff]
  %v573 = vld [vmem:[%s571 + $0x8] sm:$0xff]
  %v574 = vunpack.c.l.bf16 %v572
  %v575 = vunpack.c.h.bf16 %v572
  %v576 = vunpack.c.l.bf16 %v573
  %v577 = vunpack.c.h.bf16 %v573
  %v578 = vpack.c.bf16 %v570, %v570
  %579 = vmatprep.subr.bf16.mxu0 %v190
  %580 = vmatpush1.bf16.msra.mxu0 %v189
  %581 = vmatprep.subr.bf16.mxu0 %v186
  %582 = vmatpush1.bf16.msra.mxu0 %v185
  %583 = vmatprep.subr.bf16.mxu0 %v182
  %584 = vmatpush1.bf16.msra.mxu0 %v181
  %585 = vmatprep.subr.bf16.mxu0 %v178
  %586 = vmatpush1.bf16.msra.mxu0 %v177
  %587 = vmatprep.subr.bf16.mxu0 %v174
  %588 = vmatpush1.bf16.msra.mxu0 %v173
  %589 = vmatprep.subr.bf16.mxu0 %v170
  %590 = vmatpush1.bf16.msra.mxu0 %v169
  %591 = vmatprep.subr.bf16.mxu0 %v166
  %592 = vmatpush1.bf16.msra.mxu0 %v165
  %593 = vmatprep.subr.bf16.mxu0 %v162
  %594 = vmatpush1.bf16.msra.mxu0 %v161
  %595 = vmatprep.subr.bf16.mxu0 0
  %596 = vmatpush2.bf16.msra.mxu0 0
  %597 = vmatprep.subr.bf16.mxu0 0
  %598 = vmatpush2.bf16.msra.mxu0 0
  %599 = vmatprep.subr.bf16.mxu0 0
  %600 = vmatpush2.bf16.msra.mxu0 0
  %601 = vmatprep.subr.bf16.mxu0 0
  %602 = vmatpush2.bf16.msra.mxu0 0
  %603 = vmatprep.subr.bf16.mxu0 0
  %604 = vmatpush2.bf16.msra.mxu0 0
  %605 = vmatprep.subr.bf16.mxu0 0
  %606 = vmatpush2.bf16.msra.mxu0 0
  %607 = vmatprep.subr.bf16.mxu0 0
  %608 = vmatpush2.bf16.msra.mxu0 0
  %609 = vmatprep.subr.bf16.mxu0 0
  %610 = vmatpush2.bf16.msra.mxu0 0
  %611 = vmatprep.mubr.bf16.mxu0 0
  %612 = vmatmul.mubr.bf16.gmra.mxu0 %v578
  %v613 = vpop.f32.mrf.mxu0
  %v614 = vadd.f32 0.0, %v613
  %v615 = vpop.f32.mrf.mxu0
  %v616 = vadd.f32 0.0, %v615
  %v617 = vpop.f32.mrf.mxu0
  %v618 = vpop.f32.mrf.mxu0
  %619 = vdwg.mxu0
  %620 = vmatprep.subr.bf16.mxu0 %v192
  %621 = vmatpush1.bf16.msra.mxu0 %v191
  %622 = vmatprep.subr.bf16.mxu0 %v188
  %623 = vmatpush1.bf16.msra.mxu0 %v187
  %624 = vmatprep.subr.bf16.mxu0 %v184
  %625 = vmatpush1.bf16.msra.mxu0 %v183
  %626 = vmatprep.subr.bf16.mxu0 %v180
  %627 = vmatpush1.bf16.msra.mxu0 %v179
  %628 = vmatprep.subr.bf16.mxu0 %v176
  %629 = vmatpush1.bf16.msra.mxu0 %v175
  %630 = vmatprep.subr.bf16.mxu0 %v172
  %631 = vmatpush1.bf16.msra.mxu0 %v171
  %632 = vmatprep.subr.bf16.mxu0 %v168
  %633 = vmatpush1.bf16.msra.mxu0 %v167
  %634 = vmatprep.subr.bf16.mxu0 %v164
  %635 = vmatpush1.bf16.msra.mxu0 %v163
  %636 = vmatprep.subr.bf16.mxu0 0
  %637 = vmatpush2.bf16.msra.mxu0 0
  %638 = vmatprep.subr.bf16.mxu0 0
  %639 = vmatpush2.bf16.msra.mxu0 0
  %640 = vmatprep.subr.bf16.mxu0 0
  %641 = vmatpush2.bf16.msra.mxu0 0
  %642 = vmatprep.subr.bf16.mxu0 0
  %643 = vmatpush2.bf16.msra.mxu0 0
  %644 = vmatprep.subr.bf16.mxu0 0
  %645 = vmatpush2.bf16.msra.mxu0 0
  %646 = vmatprep.subr.bf16.mxu0 0
  %647 = vmatpush2.bf16.msra.mxu0 0
  %648 = vmatprep.subr.bf16.mxu0 0
  %649 = vmatpush2.bf16.msra.mxu0 0
  %650 = vmatprep.subr.bf16.mxu0 0
  %651 = vmatpush2.bf16.msra.mxu0 0
  %652 = vmatprep.mubr.bf16.mxu0 0
  %653 = vmatmul.mubr.bf16.gmra.mxu0 %v578
  %v654 = vpop.f32.mrf.mxu0
  %v655 = vadd.f32 0.0, %v654
  %v656 = vpop.f32.mrf.mxu0
  %v657 = vadd.f32 0.0, %v656
  %v658 = vpop.f32.mrf.mxu0
  %v659 = vpop.f32.mrf.mxu0
  %660 = vdwg.mxu0
  %v661 = vadd.f32 %v574, %v614
  %v662 = vadd.f32 %v575, %v616
  %v663 = vadd.f32 %v576, %v655
  %v664 = vadd.f32 %v577, %v657
  %v665 = vxor.u32 %v661, 2147483648
  %v666 = vmul.f32 %v665, 1.442695
  %v667 = vpow.pop %v666
  %v668 = vadd.f32 %v667, 1.0
  %v669 = vrcp.pop %v668
  %v670 = vmul.f32 1.0, %v669
  %v671 = vxor.u32 %v662, 2147483648
  %v672 = vmul.f32 %v671, 1.442695
  %v673 = vpow.pop %v672
  %v674 = vadd.f32 %v673, 1.0
  %v675 = vrcp.pop %v674
  %v676 = vmul.f32 1.0, %v675
  %v677 = vtanh.pop %v663
  %v678 = vxor.u32 %v664, 2147483648
  %v679 = vmul.f32 %v678, 1.442695
  %v680 = vpow.pop %v679
  %v681 = vadd.f32 %v680, 1.0
  %v682 = vrcp.pop %v681
  %v683 = vmul.f32 1.0, %v682
  %v684 = vmul.f32 %v676, %v568
  %v685 = vmul.f32 %v670, %v677
  %v686 = vadd.f32 %v684, %v685
  %v687 = vtanh.pop %v686
  %v688 = vmul.f32 %v683, %v687
  %s689 = scalar_lea.vmem %s0, 64
  %v690 = vld [vmem:[%s689] sm:$0xff]
  %v691 = vld [vmem:[%s689 + $0x8] sm:$0xff]
  %v692 = vunpack.c.l.bf16 %v690
  %v693 = vunpack.c.h.bf16 %v690
  %v694 = vunpack.c.l.bf16 %v691
  %v695 = vunpack.c.h.bf16 %v691
  %v696 = vpack.c.bf16 %v688, %v688
  %697 = vmatprep.subr.bf16.mxu0 %v190
  %698 = vmatpush1.bf16.msra.mxu0 %v189
  %699 = vmatprep.subr.bf16.mxu0 %v186
  %700 = vmatpush1.bf16.msra.mxu0 %v185
  %701 = vmatprep.subr.bf16.mxu0 %v182
  %702 = vmatpush1.bf16.msra.mxu0 %v181
  %703 = vmatprep.subr.bf16.mxu0 %v178
  %704 = vmatpush1.bf16.msra.mxu0 %v177
  %705 = vmatprep.subr.bf16.mxu0 %v174
  %706 = vmatpush1.bf16.msra.mxu0 %v173
  %707 = vmatprep.subr.bf16.mxu0 %v170
  %708 = vmatpush1.bf16.msra.mxu0 %v169
  %709 = vmatprep.subr.bf16.mxu0 %v166
  %710 = vmatpush1.bf16.msra.mxu0 %v165
  %711 = vmatprep.subr.bf16.mxu0 %v162
  %712 = vmatpush1.bf16.msra.mxu0 %v161
  %713 = vmatprep.subr.bf16.mxu0 0
  %714 = vmatpush2.bf16.msra.mxu0 0
  %715 = vmatprep.subr.bf16.mxu0 0
  %716 = vmatpush2.bf16.msra.mxu0 0
  %717 = vmatprep.subr.bf16.mxu0 0
  %718 = vmatpush2.bf16.msra.mxu0 0
  %719 = vmatprep.subr.bf16.mxu0 0
  %720 = vmatpush2.bf16.msra.mxu0 0
  %721 = vmatprep.subr.bf16.mxu0 0
  %722 = vmatpush2.bf16.msra.mxu0 0
  %723 = vmatprep.subr.bf16.mxu0 0
  %724 = vmatpush2.bf16.msra.mxu0 0
  %725 = vmatprep.subr.bf16.mxu0 0
  %726 = vmatpush2.bf16.msra.mxu0 0
  %727 = vmatprep.subr.bf16.mxu0 0
  %728 = vmatpush2.bf16.msra.mxu0 0
  %729 = vmatprep.mubr.bf16.mxu0 0
  %730 = vmatmul.mubr.bf16.gmra.mxu0 %v696
  %v731 = vpop.f32.mrf.mxu0
  %v732 = vadd.f32 0.0, %v731
  %v733 = vpop.f32.mrf.mxu0
  %v734 = vadd.f32 0.0, %v733
  %v735 = vpop.f32.mrf.mxu0
  %v736 = vpop.f32.mrf.mxu0
  %737 = vdwg.mxu0
  %738 = vmatprep.subr.bf16.mxu0 %v192
  %739 = vmatpush1.bf16.msra.mxu0 %v191
  %740 = vmatprep.subr.bf16.mxu0 %v188
  %741 = vmatpush1.bf16.msra.mxu0 %v187
  %742 = vmatprep.subr.bf16.mxu0 %v184
  %743 = vmatpush1.bf16.msra.mxu0 %v183
  %744 = vmatprep.subr.bf16.mxu0 %v180
  %745 = vmatpush1.bf16.msra.mxu0 %v179
  %746 = vmatprep.subr.bf16.mxu0 %v176
  %747 = vmatpush1.bf16.msra.mxu0 %v175
  %748 = vmatprep.subr.bf16.mxu0 %v172
  %749 = vmatpush1.bf16.msra.mxu0 %v171
  %750 = vmatprep.subr.bf16.mxu0 %v168
  %751 = vmatpush1.bf16.msra.mxu0 %v167
  %752 = vmatprep.subr.bf16.mxu0 %v164
  %753 = vmatpush1.bf16.msra.mxu0 %v163
  %754 = vmatprep.subr.bf16.mxu0 0
  %755 = vmatpush2.bf16.msra.mxu0 0
  %756 = vmatprep.subr.bf16.mxu0 0
  %757 = vmatpush2.bf16.msra.mxu0 0
  %758 = vmatprep.subr.bf16.mxu0 0
  %759 = vmatpush2.bf16.msra.mxu0 0
  %760 = vmatprep.subr.bf16.mxu0 0
  %761 = vmatpush2.bf16.msra.mxu0 0
  %762 = vmatprep.subr.bf16.mxu0 0
  %763 = vmatpush2.bf16.msra.mxu0 0
  %764 = vmatprep.subr.bf16.mxu0 0
  %765 = vmatpush2.bf16.msra.mxu0 0
  %766 = vmatprep.subr.bf16.mxu0 0
  %767 = vmatpush2.bf16.msra.mxu0 0
  %768 = vmatprep.subr.bf16.mxu0 0
  %769 = vmatpush2.bf16.msra.mxu0 0
  %770 = vmatprep.mubr.bf16.mxu0 0
  %771 = vmatmul.mubr.bf16.gmra.mxu0 %v696
  %v772 = vpop.f32.mrf.mxu0
  %v773 = vadd.f32 0.0, %v772
  %v774 = vpop.f32.mrf.mxu0
  %v775 = vadd.f32 0.0, %v774
  %v776 = vpop.f32.mrf.mxu0
  %v777 = vpop.f32.mrf.mxu0
  %778 = vdwg.mxu0
  %v779 = vadd.f32 %v692, %v732
  %v780 = vadd.f32 %v693, %v734
  %v781 = vadd.f32 %v694, %v773
  %v782 = vadd.f32 %v695, %v775
  %v783 = vxor.u32 %v779, 2147483648
  %v784 = vmul.f32 %v783, 1.442695
  %v785 = vpow.pop %v784
  %v786 = vadd.f32 %v785, 1.0
  %v787 = vrcp.pop %v786
  %v788 = vmul.f32 1.0, %v787
  %v789 = vxor.u32 %v780, 2147483648
  %v790 = vmul.f32 %v789, 1.442695
  %v791 = vpow.pop %v790
  %v792 = vadd.f32 %v791, 1.0
  %v793 = vrcp.pop %v792
  %v794 = vmul.f32 1.0, %v793
  %v795 = vtanh.pop %v781
  %v796 = vxor.u32 %v782, 2147483648
  %v797 = vmul.f32 %v796, 1.442695
  %v798 = vpow.pop %v797
  %v799 = vadd.f32 %v798, 1.0
  %v800 = vrcp.pop %v799
  %v801 = vmul.f32 1.0, %v800
  %v802 = vmul.f32 %v794, %v686
  %v803 = vmul.f32 %v788, %v795
  %v804 = vadd.f32 %v802, %v803
  %v805 = vtanh.pop %v804
  %v806 = vmul.f32 %v801, %v805
  %s807 = scalar_lea.vmem %s0, 80
  %v808 = vld [vmem:[%s807] sm:$0xff]
  %v809 = vld [vmem:[%s807 + $0x8] sm:$0xff]
  %v810 = vunpack.c.l.bf16 %v808
  %v811 = vunpack.c.h.bf16 %v808
  %v812 = vunpack.c.l.bf16 %v809
  %v813 = vunpack.c.h.bf16 %v809
  %v814 = vpack.c.bf16 %v806, %v806
  %815 = vmatprep.subr.bf16.mxu0 %v190
  %816 = vmatpush1.bf16.msra.mxu0 %v189
  %817 = vmatprep.subr.bf16.mxu0 %v186
  %818 = vmatpush1.bf16.msra.mxu0 %v185
  %819 = vmatprep.subr.bf16.mxu0 %v182
  %820 = vmatpush1.bf16.msra.mxu0 %v181
  %821 = vmatprep.subr.bf16.mxu0 %v178
  %822 = vmatpush1.bf16.msra.mxu0 %v177
  %823 = vmatprep.subr.bf16.mxu0 %v174
  %824 = vmatpush1.bf16.msra.mxu0 %v173
  %825 = vmatprep.subr.bf16.mxu0 %v170
  %826 = vmatpush1.bf16.msra.mxu0 %v169
  %827 = vmatprep.subr.bf16.mxu0 %v166
  %828 = vmatpush1.bf16.msra.mxu0 %v165
  %829 = vmatprep.subr.bf16.mxu0 %v162
  %830 = vmatpush1.bf16.msra.mxu0 %v161
  %831 = vmatprep.subr.bf16.mxu0 0
  %832 = vmatpush2.bf16.msra.mxu0 0
  %833 = vmatprep.subr.bf16.mxu0 0
  %834 = vmatpush2.bf16.msra.mxu0 0
  %835 = vmatprep.subr.bf16.mxu0 0
  %836 = vmatpush2.bf16.msra.mxu0 0
  %837 = vmatprep.subr.bf16.mxu0 0
  %838 = vmatpush2.bf16.msra.mxu0 0
  %839 = vmatprep.subr.bf16.mxu0 0
  %840 = vmatpush2.bf16.msra.mxu0 0
  %841 = vmatprep.subr.bf16.mxu0 0
  %842 = vmatpush2.bf16.msra.mxu0 0
  %843 = vmatprep.subr.bf16.mxu0 0
  %844 = vmatpush2.bf16.msra.mxu0 0
  %845 = vmatprep.subr.bf16.mxu0 0
  %846 = vmatpush2.bf16.msra.mxu0 0
  %847 = vmatprep.mubr.bf16.mxu0 0
  %848 = vmatmul.mubr.bf16.gmra.mxu0 %v814
  %v849 = vpop.f32.mrf.mxu0
  %v850 = vadd.f32 0.0, %v849
  %v851 = vpop.f32.mrf.mxu0
  %v852 = vadd.f32 0.0, %v851
  %v853 = vpop.f32.mrf.mxu0
  %v854 = vpop.f32.mrf.mxu0
  %855 = vdwg.mxu0
  %856 = vmatprep.subr.bf16.mxu0 %v192
  %857 = vmatpush1.bf16.msra.mxu0 %v191
  %858 = vmatprep.subr.bf16.mxu0 %v188
  %859 = vmatpush1.bf16.msra.mxu0 %v187
  %860 = vmatprep.subr.bf16.mxu0 %v184
  %861 = vmatpush1.bf16.msra.mxu0 %v183
  %862 = vmatprep.subr.bf16.mxu0 %v180
  %863 = vmatpush1.bf16.msra.mxu0 %v179
  %864 = vmatprep.subr.bf16.mxu0 %v176
  %865 = vmatpush1.bf16.msra.mxu0 %v175
  %866 = vmatprep.subr.bf16.mxu0 %v172
  %867 = vmatpush1.bf16.msra.mxu0 %v171
  %868 = vmatprep.subr.bf16.mxu0 %v168
  %869 = vmatpush1.bf16.msra.mxu0 %v167
  %870 = vmatprep.subr.bf16.mxu0 %v164
  %871 = vmatpush1.bf16.msra.mxu0 %v163
  %872 = vmatprep.subr.bf16.mxu0 0
  %873 = vmatpush2.bf16.msra.mxu0 0
  %874 = vmatprep.subr.bf16.mxu0 0
  %875 = vmatpush2.bf16.msra.mxu0 0
  %876 = vmatprep.subr.bf16.mxu0 0
  %877 = vmatpush2.bf16.msra.mxu0 0
  %878 = vmatprep.subr.bf16.mxu0 0
  %879 = vmatpush2.bf16.msra.mxu0 0
  %880 = vmatprep.subr.bf16.mxu0 0
  %881 = vmatpush2.bf16.msra.mxu0 0
  %882 = vmatprep.subr.bf16.mxu0 0
  %883 = vmatpush2.bf16.msra.mxu0 0
  %884 = vmatprep.subr.bf16.mxu0 0
  %885 = vmatpush2.bf16.msra.mxu0 0
  %886 = vmatprep.subr.bf16.mxu0 0
  %887 = vmatpush2.bf16.msra.mxu0 0
  %888 = vmatprep.mubr.bf16.mxu0 0
  %889 = vmatmul.mubr.bf16.gmra.mxu0 %v814
  %v890 = vpop.f32.mrf.mxu0
  %v891 = vadd.f32 0.0, %v890
  %v892 = vpop.f32.mrf.mxu0
  %v893 = vadd.f32 0.0, %v892
  %v894 = vpop.f32.mrf.mxu0
  %v895 = vpop.f32.mrf.mxu0
  %896 = vdwg.mxu0
  %v897 = vadd.f32 %v810, %v850
  %v898 = vadd.f32 %v811, %v852
  %v899 = vadd.f32 %v812, %v891
  %v900 = vadd.f32 %v813, %v893
  %v901 = vxor.u32 %v897, 2147483648
  %v902 = vmul.f32 %v901, 1.442695
  %v903 = vpow.pop %v902
  %v904 = vadd.f32 %v903, 1.0
  %v905 = vrcp.pop %v904
  %v906 = vmul.f32 1.0, %v905
  %v907 = vxor.u32 %v898, 2147483648
  %v908 = vmul.f32 %v907, 1.442695
  %v909 = vpow.pop %v908
  %v910 = vadd.f32 %v909, 1.0
  %v911 = vrcp.pop %v910
  %v912 = vmul.f32 1.0, %v911
  %v913 = vtanh.pop %v899
  %v914 = vxor.u32 %v900, 2147483648
  %v915 = vmul.f32 %v914, 1.442695
  %v916 = vpow.pop %v915
  %v917 = vadd.f32 %v916, 1.0
  %v918 = vrcp.pop %v917
  %v919 = vmul.f32 1.0, %v918
  %v920 = vmul.f32 %v912, %v804
  %v921 = vmul.f32 %v906, %v913
  %v922 = vadd.f32 %v920, %v921
  %v923 = vtanh.pop %v922
  %v924 = vmul.f32 %v919, %v923
  %s925 = scalar_lea.vmem %s0, 96
  %v926 = vld [vmem:[%s925] sm:$0xff]
  %v927 = vld [vmem:[%s925 + $0x8] sm:$0xff]
  %v928 = vunpack.c.l.bf16 %v926
  %v929 = vunpack.c.h.bf16 %v926
  %v930 = vunpack.c.l.bf16 %v927
  %v931 = vunpack.c.h.bf16 %v927
  %v932 = vpack.c.bf16 %v924, %v924
  %933 = vmatprep.subr.bf16.mxu0 %v190
  %934 = vmatpush1.bf16.msra.mxu0 %v189
  %935 = vmatprep.subr.bf16.mxu0 %v186
  %936 = vmatpush1.bf16.msra.mxu0 %v185
  %937 = vmatprep.subr.bf16.mxu0 %v182
  %938 = vmatpush1.bf16.msra.mxu0 %v181
  %939 = vmatprep.subr.bf16.mxu0 %v178
  %940 = vmatpush1.bf16.msra.mxu0 %v177
  %941 = vmatprep.subr.bf16.mxu0 %v174
  %942 = vmatpush1.bf16.msra.mxu0 %v173
  %943 = vmatprep.subr.bf16.mxu0 %v170
  %944 = vmatpush1.bf16.msra.mxu0 %v169
  %945 = vmatprep.subr.bf16.mxu0 %v166
  %946 = vmatpush1.bf16.msra.mxu0 %v165
  %947 = vmatprep.subr.bf16.mxu0 %v162
  %948 = vmatpush1.bf16.msra.mxu0 %v161
  %949 = vmatprep.subr.bf16.mxu0 0
  %950 = vmatpush2.bf16.msra.mxu0 0
  %951 = vmatprep.subr.bf16.mxu0 0
  %952 = vmatpush2.bf16.msra.mxu0 0
  %953 = vmatprep.subr.bf16.mxu0 0
  %954 = vmatpush2.bf16.msra.mxu0 0
  %955 = vmatprep.subr.bf16.mxu0 0
  %956 = vmatpush2.bf16.msra.mxu0 0
  %957 = vmatprep.subr.bf16.mxu0 0
  %958 = vmatpush2.bf16.msra.mxu0 0
  %959 = vmatprep.subr.bf16.mxu0 0
  %960 = vmatpush2.bf16.msra.mxu0 0
  %961 = vmatprep.subr.bf16.mxu0 0
  %962 = vmatpush2.bf16.msra.mxu0 0
  %963 = vmatprep.subr.bf16.mxu0 0
  %964 = vmatpush2.bf16.msra.mxu0 0
  %965 = vmatprep.mubr.bf16.mxu0 0
  %966 = vmatmul.mubr.bf16.gmra.mxu0 %v932
  %v967 = vpop.f32.mrf.mxu0
  %v968 = vadd.f32 0.0, %v967
  %v969 = vpop.f32.mrf.mxu0
  %v970 = vadd.f32 0.0, %v969
  %v971 = vpop.f32.mrf.mxu0
  %v972 = vpop.f32.mrf.mxu0
  %973 = vdwg.mxu0
  %974 = vmatprep.subr.bf16.mxu0 %v192
  %975 = vmatpush1.bf16.msra.mxu0 %v191
  %976 = vmatprep.subr.bf16.mxu0 %v188
  %977 = vmatpush1.bf16.msra.mxu0 %v187
  %978 = vmatprep.subr.bf16.mxu0 %v184
  %979 = vmatpush1.bf16.msra.mxu0 %v183
  %980 = vmatprep.subr.bf16.mxu0 %v180
  %981 = vmatpush1.bf16.msra.mxu0 %v179
  %982 = vmatprep.subr.bf16.mxu0 %v176
  %983 = vmatpush1.bf16.msra.mxu0 %v175
  %984 = vmatprep.subr.bf16.mxu0 %v172
  %985 = vmatpush1.bf16.msra.mxu0 %v171
  %986 = vmatprep.subr.bf16.mxu0 %v168
  %987 = vmatpush1.bf16.msra.mxu0 %v167
  %988 = vmatprep.subr.bf16.mxu0 %v164
  %989 = vmatpush1.bf16.msra.mxu0 %v163
  %990 = vmatprep.subr.bf16.mxu0 0
  %991 = vmatpush2.bf16.msra.mxu0 0
  %992 = vmatprep.subr.bf16.mxu0 0
  %993 = vmatpush2.bf16.msra.mxu0 0
  %994 = vmatprep.subr.bf16.mxu0 0
  %995 = vmatpush2.bf16.msra.mxu0 0
  %996 = vmatprep.subr.bf16.mxu0 0
  %997 = vmatpush2.bf16.msra.mxu0 0
  %998 = vmatprep.subr.bf16.mxu0 0
  %999 = vmatpush2.bf16.msra.mxu0 0
  %1000 = vmatprep.subr.bf16.mxu0 0
  %1001 = vmatpush2.bf16.msra.mxu0 0
  %1002 = vmatprep.subr.bf16.mxu0 0
  %1003 = vmatpush2.bf16.msra.mxu0 0
  %1004 = vmatprep.subr.bf16.mxu0 0
  %1005 = vmatpush2.bf16.msra.mxu0 0
  %1006 = vmatprep.mubr.bf16.mxu0 0
  %1007 = vmatmul.mubr.bf16.gmra.mxu0 %v932
  %v1008 = vpop.f32.mrf.mxu0
  %v1009 = vadd.f32 0.0, %v1008
  %v1010 = vpop.f32.mrf.mxu0
  %v1011 = vadd.f32 0.0, %v1010
  %v1012 = vpop.f32.mrf.mxu0
  %v1013 = vpop.f32.mrf.mxu0
  %1014 = vdwg.mxu0
  %v1015 = vadd.f32 %v928, %v968
  %v1016 = vadd.f32 %v929, %v970
  %v1017 = vadd.f32 %v930, %v1009
  %v1018 = vadd.f32 %v931, %v1011
  %v1019 = vxor.u32 %v1015, 2147483648
  %v1020 = vmul.f32 %v1019, 1.442695
  %v1021 = vpow.pop %v1020
  %v1022 = vadd.f32 %v1021, 1.0
  %v1023 = vrcp.pop %v1022
  %v1024 = vmul.f32 1.0, %v1023
  %v1025 = vxor.u32 %v1016, 2147483648
  %v1026 = vmul.f32 %v1025, 1.442695
  %v1027 = vpow.pop %v1026
  %v1028 = vadd.f32 %v1027, 1.0
  %v1029 = vrcp.pop %v1028
  %v1030 = vmul.f32 1.0, %v1029
  %v1031 = vtanh.pop %v1017
  %v1032 = vxor.u32 %v1018, 2147483648
  %v1033 = vmul.f32 %v1032, 1.442695
  %v1034 = vpow.pop %v1033
  %v1035 = vadd.f32 %v1034, 1.0
  %v1036 = vrcp.pop %v1035
  %v1037 = vmul.f32 1.0, %v1036
  %v1038 = vmul.f32 %v1030, %v922
  %v1039 = vmul.f32 %v1024, %v1031
  %v1040 = vadd.f32 %v1038, %v1039
  %v1041 = vtanh.pop %v1040
  %v1042 = vmul.f32 %v1037, %v1041
  %s1043 = scalar_lea.vmem %s0, 112
  %v1044 = vld [vmem:[%s1043] sm:$0xff]
  %v1045 = vld [vmem:[%s1043 + $0x8] sm:$0xff]
  %v1046 = vunpack.c.l.bf16 %v1044
  %v1047 = vunpack.c.h.bf16 %v1044
  %v1048 = vunpack.c.l.bf16 %v1045
  %v1049 = vunpack.c.h.bf16 %v1045
  %v1050 = vpack.c.bf16 %v1042, %v1042
  %1051 = vmatprep.subr.bf16.mxu0 %v190
  %1052 = vmatpush1.bf16.msra.mxu0 %v189
  %1053 = vmatprep.subr.bf16.mxu0 %v186
  %1054 = vmatpush1.bf16.msra.mxu0 %v185
  %1055 = vmatprep.subr.bf16.mxu0 %v182
  %1056 = vmatpush1.bf16.msra.mxu0 %v181
  %1057 = vmatprep.subr.bf16.mxu0 %v178
  %1058 = vmatpush1.bf16.msra.mxu0 %v177
  %1059 = vmatprep.subr.bf16.mxu0 %v174
  %1060 = vmatpush1.bf16.msra.mxu0 %v173
  %1061 = vmatprep.subr.bf16.mxu0 %v170
  %1062 = vmatpush1.bf16.msra.mxu0 %v169
  %1063 = vmatprep.subr.bf16.mxu0 %v166
  %1064 = vmatpush1.bf16.msra.mxu0 %v165
  %1065 = vmatprep.subr.bf16.mxu0 %v162
  %1066 = vmatpush1.bf16.msra.mxu0 %v161
  %1067 = vmatprep.subr.bf16.mxu0 0
  %1068 = vmatpush2.bf16.msra.mxu0 0
  %1069 = vmatprep.subr.bf16.mxu0 0
  %1070 = vmatpush2.bf16.msra.mxu0 0
  %1071 = vmatprep.subr.bf16.mxu0 0
  %1072 = vmatpush2.bf16.msra.mxu0 0
  %1073 = vmatprep.subr.bf16.mxu0 0
  %1074 = vmatpush2.bf16.msra.mxu0 0
  %1075 = vmatprep.subr.bf16.mxu0 0
  %1076 = vmatpush2.bf16.msra.mxu0 0
  %1077 = vmatprep.subr.bf16.mxu0 0
  %1078 = vmatpush2.bf16.msra.mxu0 0
  %1079 = vmatprep.subr.bf16.mxu0 0
  %1080 = vmatpush2.bf16.msra.mxu0 0
  %1081 = vmatprep.subr.bf16.mxu0 0
  %1082 = vmatpush2.bf16.msra.mxu0 0
  %1083 = vmatprep.mubr.bf16.mxu0 0
  %1084 = vmatmul.mubr.bf16.gmra.mxu0 %v1050
  %v1085 = vpop.f32.mrf.mxu0
  %v1086 = vadd.f32 0.0, %v1085
  %v1087 = vpop.f32.mrf.mxu0
  %v1088 = vadd.f32 0.0, %v1087
  %v1089 = vpop.f32.mrf.mxu0
  %v1090 = vpop.f32.mrf.mxu0
  %1091 = vdwg.mxu0
  %1092 = vmatprep.subr.bf16.mxu0 %v192
  %1093 = vmatpush1.bf16.msra.mxu0 %v191
  %1094 = vmatprep.subr.bf16.mxu0 %v188
  %1095 = vmatpush1.bf16.msra.mxu0 %v187
  %1096 = vmatprep.subr.bf16.mxu0 %v184
  %1097 = vmatpush1.bf16.msra.mxu0 %v183
  %1098 = vmatprep.subr.bf16.mxu0 %v180
  %1099 = vmatpush1.bf16.msra.mxu0 %v179
  %1100 = vmatprep.subr.bf16.mxu0 %v176
  %1101 = vmatpush1.bf16.msra.mxu0 %v175
  %1102 = vmatprep.subr.bf16.mxu0 %v172
  %1103 = vmatpush1.bf16.msra.mxu0 %v171
  %1104 = vmatprep.subr.bf16.mxu0 %v168
  %1105 = vmatpush1.bf16.msra.mxu0 %v167
  %1106 = vmatprep.subr.bf16.mxu0 %v164
  %1107 = vmatpush1.bf16.msra.mxu0 %v163
  %1108 = vmatprep.subr.bf16.mxu0 0
  %1109 = vmatpush2.bf16.msra.mxu0 0
  %1110 = vmatprep.subr.bf16.mxu0 0
  %1111 = vmatpush2.bf16.msra.mxu0 0
  %1112 = vmatprep.subr.bf16.mxu0 0
  %1113 = vmatpush2.bf16.msra.mxu0 0
  %1114 = vmatprep.subr.bf16.mxu0 0
  %1115 = vmatpush2.bf16.msra.mxu0 0
  %1116 = vmatprep.subr.bf16.mxu0 0
  %1117 = vmatpush2.bf16.msra.mxu0 0
  %1118 = vmatprep.subr.bf16.mxu0 0
  %1119 = vmatpush2.bf16.msra.mxu0 0
  %1120 = vmatprep.subr.bf16.mxu0 0
  %1121 = vmatpush2.bf16.msra.mxu0 0
  %1122 = vmatprep.subr.bf16.mxu0 0
  %1123 = vmatpush2.bf16.msra.mxu0 0
  %1124 = vmatprep.mubr.bf16.mxu0 0
  %1125 = vmatmul.mubr.bf16.gmra.mxu0 %v1050
  %v1126 = vpop.f32.mrf.mxu0
  %v1127 = vadd.f32 0.0, %v1126
  %v1128 = vpop.f32.mrf.mxu0
  %v1129 = vadd.f32 0.0, %v1128
  %v1130 = vpop.f32.mrf.mxu0
  %v1131 = vpop.f32.mrf.mxu0
  %1132 = vdwg.mxu0
  %v1133 = vadd.f32 %v1046, %v1086
  %v1134 = vadd.f32 %v1047, %v1088
  %v1135 = vadd.f32 %v1048, %v1127
  %v1136 = vadd.f32 %v1049, %v1129
  %v1137 = vxor.u32 %v1133, 2147483648
  %v1138 = vmul.f32 %v1137, 1.442695
  %v1139 = vpow.pop %v1138
  %v1140 = vadd.f32 %v1139, 1.0
  %v1141 = vrcp.pop %v1140
  %v1142 = vmul.f32 1.0, %v1141
  %v1143 = vxor.u32 %v1134, 2147483648
  %v1144 = vmul.f32 %v1143, 1.442695
  %v1145 = vpow.pop %v1144
  %v1146 = vadd.f32 %v1145, 1.0
  %v1147 = vrcp.pop %v1146
  %v1148 = vmul.f32 1.0, %v1147
  %v1149 = vtanh.pop %v1135
  %v1150 = vxor.u32 %v1136, 2147483648
  %v1151 = vmul.f32 %v1150, 1.442695
  %v1152 = vpow.pop %v1151
  %v1153 = vadd.f32 %v1152, 1.0
  %v1154 = vrcp.pop %v1153
  %v1155 = vmul.f32 1.0, %v1154
  %v1156 = vmul.f32 %v1148, %v1040
  %v1157 = vmul.f32 %v1142, %v1149
  %v1158 = vadd.f32 %v1156, %v1157
  %v1159 = vtanh.pop %v1158
  %v1160 = vmul.f32 %v1155, %v1159
  %1161 = vst [vmem:[#allocation2] sm:$0xff] %v1160
  %1162 = vst [vmem:[#allocation3] sm:$0xff] %v1158
  // Predicated region
  $region22: #{seq2seq_lstm.1} parent=0 // pred_check
    %p1163 = pneg %p18
  $region23: #{seq2seq_lstm.1} parent=0 // pred_check_branch
    %1165 = sbr.rel (%p1163) target = $region25
  $region24: #{seq2seq_lstm.1} parent=0 // pred_region
    %v1166 = vld [vmem:[%s3] sm:$0xf]
    %v1168 = vlaneseq
    %v1169 = vshrl.u32 %v1168, 7
    %v1170 = vsub.s32 0, %v1169
    %v1171 = vrot.slane %v1166, %v1170
    %v1172 = vlaneseq
    %v1173 = vshrl.u32 %v1172, 7
    %v1174 = vsub.s32 1, %v1173
    %v1175 = vrot.slane %v1166, %v1174
    %v1176 = vlaneseq
    %v1177 = vshrl.u32 %v1176, 7
    %v1178 = vsub.s32 2, %v1177
    %v1179 = vrot.slane %v1166, %v1178
    %v1180 = vlaneseq
    %v1181 = vshrl.u32 %v1180, 7
    %v1182 = vsub.s32 3, %v1181
    %v1183 = vrot.slane %v1166, %v1182
    %v1188 = vpack.c.bf16 %v1160, %v1160
    %v1189 = vld [vmem:[%s2] sm:$0xff]
    %v1190 = vld [vmem:[%s2 + $0x8] sm:$0xff]
    %v1191 = vld [vmem:[%s2 + $0x10] sm:$0xff]
    %v1192 = vld [vmem:[%s2 + $0x18] sm:$0xff]
    %v1193 = vld [vmem:[%s2 + $0x20] sm:$0xff]
    %v1194 = vld [vmem:[%s2 + $0x28] sm:$0xff]
    %v1195 = vld [vmem:[%s2 + $0x30] sm:$0xff]
    %v1196 = vld [vmem:[%s2 + $0x38] sm:$0xff]
    %v1197 = vld [vmem:[%s2 + $0x40] sm:$0xff]
    %v1198 = vld [vmem:[%s2 + $0x48] sm:$0xff]
    %v1199 = vld [vmem:[%s2 + $0x50] sm:$0xff]
    %v1200 = vld [vmem:[%s2 + $0x58] sm:$0xff]
    %v1201 = vld [vmem:[%s2 + $0x60] sm:$0xff]
    %v1202 = vld [vmem:[%s2 + $0x68] sm:$0xff]
    %v1203 = vld [vmem:[%s2 + $0x70] sm:$0xff]
    %v1204 = vld [vmem:[%s2 + $0x78] sm:$0xff]
    %v1205 = vld [vmem:[%s2 + $0x80] sm:$0xff]
    %v1206 = vld [vmem:[%s2 + $0x88] sm:$0xff]
    %v1207 = vld [vmem:[%s2 + $0x90] sm:$0xff]
    %v1208 = vld [vmem:[%s2 + $0x98] sm:$0xff]
    %v1209 = vld [vmem:[%s2 + $0xa0] sm:$0xff]
    %v1210 = vld [vmem:[%s2 + $0xa8] sm:$0xff]
    %v1211 = vld [vmem:[%s2 + $0xb0] sm:$0xff]
    %v1212 = vld [vmem:[%s2 + $0xb8] sm:$0xff]
    %v1213 = vld [vmem:[%s2 + $0xc0] sm:$0xff]
    %v1214 = vld [vmem:[%s2 + $0xc8] sm:$0xff]
    %v1215 = vld [vmem:[%s2 + $0xd0] sm:$0xff]
    %v1216 = vld [vmem:[%s2 + $0xd8] sm:$0xff]
    %v1217 = vld [vmem:[%s2 + $0xe0] sm:$0xff]
    %v1218 = vld [vmem:[%s2 + $0xe8] sm:$0xff]
    %v1219 = vld [vmem:[%s2 + $0xf0] sm:$0xff]
    %v1220 = vld [vmem:[%s2 + $0xf8] sm:$0xff]
    %v1253 = vunpack.c.l.b16 %v1189
    %v1254 = vunpack.c.h.b16 %v1189
    %v1255 = vunpack.c.l.b16 %v1190
    %v1256 = vunpack.c.h.b16 %v1190
    %v1257 = vunpack.c.l.b16 %v1191
    %v1258 = vunpack.c.h.b16 %v1191
    %v1259 = vunpack.c.l.b16 %v1192
    %v1260 = vunpack.c.h.b16 %v1192
    %v1261 = vunpack.c.l.b16 %v1193
    %v1262 = vunpack.c.h.b16 %v1193
    %v1263 = vunpack.c.l.b16 %v1194
    %v1264 = vunpack.c.h.b16 %v1194
    %v1265 = vunpack.c.l.b16 %v1195
    %v1266 = vunpack.c.h.b16 %v1195
    %v1267 = vunpack.c.l.b16 %v1196
    %v1268 = vunpack.c.h.b16 %v1196
    %v1269 = vunpack.c.l.b16 %v1197
    %v1270 = vunpack.c.h.b16 %v1197
    %v1271 = vunpack.c.l.b16 %v1198
    %v1272 = vunpack.c.h.b16 %v1198
    %v1273 = vunpack.c.l.b16 %v1199
    %v1274 = vunpack.c.h.b16 %v1199
    %v1275 = vunpack.c.l.b16 %v1200
    %v1276 = vunpack.c.h.b16 %v1200
    %v1277 = vunpack.c.l.b16 %v1201
    %v1278 = vunpack.c.h.b16 %v1201
    %v1279 = vunpack.c.l.b16 %v1202
    %v1280 = vunpack.c.h.b16 %v1202
    %v1281 = vunpack.c.l.b16 %v1203
    %v1282 = vunpack.c.h.b16 %v1203
    %v1283 = vunpack.c.l.b16 %v1204
    %v1284 = vunpack.c.h.b16 %v1204
    %v1285 = vunpack.c.l.b16 %v1205
    %v1286 = vunpack.c.h.b16 %v1205
    %v1287 = vunpack.c.l.b16 %v1206
    %v1288 = vunpack.c.h.b16 %v1206
    %v1289 = vunpack.c.l.b16 %v1207
    %v1290 = vunpack.c.h.b16 %v1207
    %v1291 = vunpack.c.l.b16 %v1208
    %v1292 = vunpack.c.h.b16 %v1208
    %v1293 = vunpack.c.l.b16 %v1209
    %v1294 = vunpack.c.h.b16 %v1209
    %v1295 = vunpack.c.l.b16 %v1210
    %v1296 = vunpack.c.h.b16 %v1210
    %v1297 = vunpack.c.l.b16 %v1211
    %v1298 = vunpack.c.h.b16 %v1211
    %v1299 = vunpack.c.l.b16 %v1212
    %v1300 = vunpack.c.h.b16 %v1212
    %v1301 = vunpack.c.l.b16 %v1213
    %v1302 = vunpack.c.h.b16 %v1213
    %v1303 = vunpack.c.l.b16 %v1214
    %v1304 = vunpack.c.h.b16 %v1214
    %v1305 = vunpack.c.l.b16 %v1215
    %v1306 = vunpack.c.h.b16 %v1215
    %v1307 = vunpack.c.l.b16 %v1216
    %v1308 = vunpack.c.h.b16 %v1216
    %v1309 = vunpack.c.l.b16 %v1217
    %v1310 = vunpack.c.h.b16 %v1217
    %v1311 = vunpack.c.l.b16 %v1218
    %v1312 = vunpack.c.h.b16 %v1218
    %v1313 = vunpack.c.l.b16 %v1219
    %v1314 = vunpack.c.h.b16 %v1219
    %v1315 = vunpack.c.l.b16 %v1220
    %v1316 = vunpack.c.h.b16 %v1220
    %v1317 = vpack.c.b16 %v1257, %v1253
    %v1318 = vpack.c.b16 %v1258, %v1254
    %v1319 = vpack.c.b16 %v1259, %v1255
    %v1320 = vpack.c.b16 %v1260, %v1256
    %v1321 = vpack.c.b16 %v1265, %v1261
    %v1322 = vpack.c.b16 %v1266, %v1262
    %v1323 = vpack.c.b16 %v1267, %v1263
    %v1324 = vpack.c.b16 %v1268, %v1264
    %v1325 = vpack.c.b16 %v1273, %v1269
    %v1326 = vpack.c.b16 %v1274, %v1270
    %v1327 = vpack.c.b16 %v1275, %v1271
    %v1328 = vpack.c.b16 %v1276, %v1272
    %v1329 = vpack.c.b16 %v1281, %v1277
    %v1330 = vpack.c.b16 %v1282, %v1278
    %v1331 = vpack.c.b16 %v1283, %v1279
    %v1332 = vpack.c.b16 %v1284, %v1280
    %v1333 = vpack.c.b16 %v1289, %v1285
    %v1334 = vpack.c.b16 %v1290, %v1286
    %v1335 = vpack.c.b16 %v1291, %v1287
    %v1336 = vpack.c.b16 %v1292, %v1288
    %v1337 = vpack.c.b16 %v1297, %v1293
    %v1338 = vpack.c.b16 %v1298, %v1294
    %v1339 = vpack.c.b16 %v1299, %v1295
    %v1340 = vpack.c.b16 %v1300, %v1296
    %v1341 = vpack.c.b16 %v1305, %v1301
    %v1342 = vpack.c.b16 %v1306, %v1302
    %v1343 = vpack.c.b16 %v1307, %v1303
    %v1344 = vpack.c.b16 %v1308, %v1304
    %v1345 = vpack.c.b16 %v1313, %v1309
    %v1346 = vpack.c.b16 %v1314, %v1310
    %v1347 = vpack.c.b16 %v1315, %v1311
    %v1348 = vpack.c.b16 %v1316, %v1312
    %1381 = vmatprep.subr.bf16.mxu0 %v1346
    %1382 = vmatpush1.bf16.msra.mxu0 %v1345
    %1383 = vmatprep.subr.bf16.mxu0 %v1342
    %1384 = vmatpush1.bf16.msra.mxu0 %v1341
    %1385 = vmatprep.subr.bf16.mxu0 %v1338
    %1386 = vmatpush1.bf16.msra.mxu0 %v1337
    %1387 = vmatprep.subr.bf16.mxu0 %v1334
    %1388 = vmatpush1.bf16.msra.mxu0 %v1333
    %1389 = vmatprep.subr.bf16.mxu0 %v1330
    %1390 = vmatpush1.bf16.msra.mxu0 %v1329
    %1391 = vmatprep.subr.bf16.mxu0 %v1326
    %1392 = vmatpush1.bf16.msra.mxu0 %v1325
    %1393 = vmatprep.subr.bf16.mxu0 %v1322
    %1394 = vmatpush1.bf16.msra.mxu0 %v1321
    %1395 = vmatprep.subr.bf16.mxu0 %v1318
    %1396 = vmatpush1.bf16.msra.mxu0 %v1317
    %1397 = vmatprep.subr.bf16.mxu0 0
    %1398 = vmatpush2.bf16.msra.mxu0 0
    %1399 = vmatprep.subr.bf16.mxu0 0
    %1400 = vmatpush2.bf16.msra.mxu0 0
    %1401 = vmatprep.subr.bf16.mxu0 0
    %1402 = vmatpush2.bf16.msra.mxu0 0
    %1403 = vmatprep.subr.bf16.mxu0 0
    %1404 = vmatpush2.bf16.msra.mxu0 0
    %1405 = vmatprep.subr.bf16.mxu0 0
    %1406 = vmatpush2.bf16.msra.mxu0 0
    %1407 = vmatprep.subr.bf16.mxu0 0
    %1408 = vmatpush2.bf16.msra.mxu0 0
    %1409 = vmatprep.subr.bf16.mxu0 0
    %1410 = vmatpush2.bf16.msra.mxu0 0
    %1411 = vmatprep.subr.bf16.mxu0 0
    %1412 = vmatpush2.bf16.msra.mxu0 0
    %1413 = vmatprep.mubr.bf16.mxu0 0
    %1414 = vmatmul.mubr.bf16.gmra.mxu0 %v1188
    %v1415 = vpop.f32.mrf.mxu0
    %v1416 = vadd.f32 0.0, %v1415
    %v1417 = vpop.f32.mrf.mxu0
    %v1418 = vadd.f32 0.0, %v1417
    %v1419 = vpop.f32.mrf.mxu0
    %v1420 = vpop.f32.mrf.mxu0
    %1421 = vdwg.mxu0
    %1422 = vmatprep.subr.bf16.mxu0 %v1348
    %1423 = vmatpush1.bf16.msra.mxu0 %v1347
    %1424 = vmatprep.subr.bf16.mxu0 %v1344
    %1425 = vmatpush1.bf16.msra.mxu0 %v1343
    %1426 = vmatprep.subr.bf16.mxu0 %v1340
    %1427 = vmatpush1.bf16.msra.mxu0 %v1339
    %1428 = vmatprep.subr.bf16.mxu0 %v1336
    %1429 = vmatpush1.bf16.msra.mxu0 %v1335
    %1430 = vmatprep.subr.bf16.mxu0 %v1332
    %1431 = vmatpush1.bf16.msra.mxu0 %v1331
    %1432 = vmatprep.subr.bf16.mxu0 %v1328
    %1433 = vmatpush1.bf16.msra.mxu0 %v1327
    %1434 = vmatprep.subr.bf16.mxu0 %v1324
    %1435 = vmatpush1.bf16.msra.mxu0 %v1323
    %1436 = vmatprep.subr.bf16.mxu0 %v1320
    %1437 = vmatpush1.bf16.msra.mxu0 %v1319
    %1438 = vmatprep.subr.bf16.mxu0 0
    %1439 = vmatpush2.bf16.msra.mxu0 0
    %1440 = vmatprep.subr.bf16.mxu0 0
    %1441 = vmatpush2.bf16.msra.mxu0 0
    %1442 = vmatprep.subr.bf16.mxu0 0
    %1443 = vmatpush2.bf16.msra.mxu0 0
    %1444 = vmatprep.subr.bf16.mxu0 0
    %1445 = vmatpush2.bf16.msra.mxu0 0
    %1446 = vmatprep.subr.bf16.mxu0 0
    %1447 = vmatpush2.bf16.msra.mxu0 0
    %1448 = vmatprep.subr.bf16.mxu0 0
    %1449 = vmatpush2.bf16.msra.mxu0 0
    %1450 = vmatprep.subr.bf16.mxu0 0
    %1451 = vmatpush2.bf16.msra.mxu0 0
    %1452 = vmatprep.subr.bf16.mxu0 0
    %1453 = vmatpush2.bf16.msra.mxu0 0
    %1454 = vmatprep.mubr.bf16.mxu0 0
    %1455 = vmatmul.mubr.bf16.gmra.mxu0 %v1188
    %v1456 = vpop.f32.mrf.mxu0
    %v1457 = vadd.f32 0.0, %v1456
    %v1458 = vpop.f32.mrf.mxu0
    %v1459 = vadd.f32 0.0, %v1458
    %v1460 = vpop.f32.mrf.mxu0
    %v1461 = vpop.f32.mrf.mxu0
    %1462 = vdwg.mxu0
    %v1463 = vadd.f32 %v1171, %v1416
    %v1464 = vadd.f32 %v1175, %v1418
    %v1465 = vadd.f32 %v1179, %v1457
    %v1466 = vadd.f32 %v1183, %v1459
    %v1467 = vxor.u32 %v1463, 2147483648
    %v1468 = vmul.f32 %v1467, 1.442695
    %v1469 = vpow.pop %v1468
    %v1470 = vadd.f32 %v1469, 1.0
    %v1471 = vrcp.pop %v1470
    %v1472 = vmul.f32 1.0, %v1471
    %v1473 = vxor.u32 %v1464, 2147483648
    %v1474 = vmul.f32 %v1473, 1.442695
    %v1475 = vpow.pop %v1474
    %v1476 = vadd.f32 %v1475, 1.0
    %v1477 = vrcp.pop %v1476
    %v1478 = vmul.f32 1.0, %v1477
    %v1479 = vtanh.pop %v1465
    %v1480 = vxor.u32 %v1466, 2147483648
    %v1481 = vmul.f32 %v1480, 1.442695
    %v1482 = vpow.pop %v1481
    %v1483 = vadd.f32 %v1482, 1.0
    %v1484 = vrcp.pop %v1483
    %v1485 = vmul.f32 1.0, %v1484
    %v1486 = vmul.f32 %v1478, 0.0
    %v1487 = vmul.f32 %v1472, %v1479
    %v1488 = vadd.f32 %v1486, %v1487
    %v1489 = vtanh.pop %v1488
    %v1490 = vmul.f32 %v1485, %v1489
    %1491 = vst [vmem:[%s4] sm:$0xff] %v1490
    %v1492 = vpack.c.bf16 %v1490, %v1490
    %v1493 = vld [vmem:[%s2] sm:$0xff]
    %v1494 = vld [vmem:[%s2 + $0x8] sm:$0xff]
    %v1495 = vld [vmem:[%s2 + $0x10] sm:$0xff]
    %v1496 = vld [vmem:[%s2 + $0x18] sm:$0xff]
    %v1497 = vld [vmem:[%s2 + $0x20] sm:$0xff]
    %v1498 = vld [vmem:[%s2 + $0x28] sm:$0xff]
    %v1499 = vld [vmem:[%s2 + $0x30] sm:$0xff]
    %v1500 = vld [vmem:[%s2 + $0x38] sm:$0xff]
    %v1501 = vld [vmem:[%s2 + $0x40] sm:$0xff]
    %v1502 = vld [vmem:[%s2 + $0x48] sm:$0xff]
    %v1503 = vld [vmem:[%s2 + $0x50] sm:$0xff]
    %v1504 = vld [vmem:[%s2 + $0x58] sm:$0xff]
    %v1505 = vld [vmem:[%s2 + $0x60] sm:$0xff]
    %v1506 = vld [vmem:[%s2 + $0x68] sm:$0xff]
    %v1507 = vld [vmem:[%s2 + $0x70] sm:$0xff]
    %v1508 = vld [vmem:[%s2 + $0x78] sm:$0xff]
    %v1509 = vld [vmem:[%s2 + $0x80] sm:$0xff]
    %v1510 = vld [vmem:[%s2 + $0x88] sm:$0xff]
    %v1511 = vld [vmem:[%s2 + $0x90] sm:$0xff]
    %v1512 = vld [vmem:[%s2 + $0x98] sm:$0xff]
    %v1513 = vld [vmem:[%s2 + $0xa0] sm:$0xff]
    %v1514 = vld [vmem:[%s2 + $0xa8] sm:$0xff]
    %v1515 = vld [vmem:[%s2 + $0xb0] sm:$0xff]
    %v1516 = vld [vmem:[%s2 + $0xb8] sm:$0xff]
    %v1517 = vld [vmem:[%s2 + $0xc0] sm:$0xff]
    %v1518 = vld [vmem:[%s2 + $0xc8] sm:$0xff]
    %v1519 = vld [vmem:[%s2 + $0xd0] sm:$0xff]
    %v1520 = vld [vmem:[%s2 + $0xd8] sm:$0xff]
    %v1521 = vld [vmem:[%s2 + $0xe0] sm:$0xff]
    %v1522 = vld [vmem:[%s2 + $0xe8] sm:$0xff]
    %v1523 = vld [vmem:[%s2 + $0xf0] sm:$0xff]
    %v1524 = vld [vmem:[%s2 + $0xf8] sm:$0xff]
    %v1557 = vunpack.c.l.b16 %v1493
    %v1558 = vunpack.c.h.b16 %v1493
    %v1559 = vunpack.c.l.b16 %v1494
    %v1560 = vunpack.c.h.b16 %v1494
    %v1561 = vunpack.c.l.b16 %v1495
    %v1562 = vunpack.c.h.b16 %v1495
    %v1563 = vunpack.c.l.b16 %v1496
    %v1564 = vunpack.c.h.b16 %v1496
    %v1565 = vunpack.c.l.b16 %v1497
    %v1566 = vunpack.c.h.b16 %v1497
    %v1567 = vunpack.c.l.b16 %v1498
    %v1568 = vunpack.c.h.b16 %v1498
    %v1569 = vunpack.c.l.b16 %v1499
    %v1570 = vunpack.c.h.b16 %v1499
    %v1571 = vunpack.c.l.b16 %v1500
    %v1572 = vunpack.c.h.b16 %v1500
    %v1573 = vunpack.c.l.b16 %v1501
    %v1574 = vunpack.c.h.b16 %v1501
    %v1575 = vunpack.c.l.b16 %v1502
    %v1576 = vunpack.c.h.b16 %v1502
    %v1577 = vunpack.c.l.b16 %v1503
    %v1578 = vunpack.c.h.b16 %v1503
    %v1579 = vunpack.c.l.b16 %v1504
    %v1580 = vunpack.c.h.b16 %v1504
    %v1581 = vunpack.c.l.b16 %v1505
    %v1582 = vunpack.c.h.b16 %v1505
    %v1583 = vunpack.c.l.b16 %v1506
    %v1584 = vunpack.c.h.b16 %v1506
    %v1585 = vunpack.c.l.b16 %v1507
    %v1586 = vunpack.c.h.b16 %v1507
    %v1587 = vunpack.c.l.b16 %v1508
    %v1588 = vunpack.c.h.b16 %v1508
    %v1589 = vunpack.c.l.b16 %v1509
    %v1590 = vunpack.c.h.b16 %v1509
    %v1591 = vunpack.c.l.b16 %v1510
    %v1592 = vunpack.c.h.b16 %v1510
    %v1593 = vunpack.c.l.b16 %v1511
    %v1594 = vunpack.c.h.b16 %v1511
    %v1595 = vunpack.c.l.b16 %v1512
    %v1596 = vunpack.c.h.b16 %v1512
    %v1597 = vunpack.c.l.b16 %v1513
    %v1598 = vunpack.c.h.b16 %v1513
    %v1599 = vunpack.c.l.b16 %v1514
    %v1600 = vunpack.c.h.b16 %v1514
    %v1601 = vunpack.c.l.b16 %v1515
    %v1602 = vunpack.c.h.b16 %v1515
    %v1603 = vunpack.c.l.b16 %v1516
    %v1604 = vunpack.c.h.b16 %v1516
    %v1605 = vunpack.c.l.b16 %v1517
    %v1606 = vunpack.c.h.b16 %v1517
    %v1607 = vunpack.c.l.b16 %v1518
    %v1608 = vunpack.c.h.b16 %v1518
    %v1609 = vunpack.c.l.b16 %v1519
    %v1610 = vunpack.c.h.b16 %v1519
    %v1611 = vunpack.c.l.b16 %v1520
    %v1612 = vunpack.c.h.b16 %v1520
    %v1613 = vunpack.c.l.b16 %v1521
    %v1614 = vunpack.c.h.b16 %v1521
    %v1615 = vunpack.c.l.b16 %v1522
    %v1616 = vunpack.c.h.b16 %v1522
    %v1617 = vunpack.c.l.b16 %v1523
    %v1618 = vunpack.c.h.b16 %v1523
    %v1619 = vunpack.c.l.b16 %v1524
    %v1620 = vunpack.c.h.b16 %v1524
    %v1621 = vpack.c.b16 %v1561, %v1557
    %v1622 = vpack.c.b16 %v1562, %v1558
    %v1623 = vpack.c.b16 %v1563, %v1559
    %v1624 = vpack.c.b16 %v1564, %v1560
    %v1625 = vpack.c.b16 %v1569, %v1565
    %v1626 = vpack.c.b16 %v1570, %v1566
    %v1627 = vpack.c.b16 %v1571, %v1567
    %v1628 = vpack.c.b16 %v1572, %v1568
    %v1629 = vpack.c.b16 %v1577, %v1573
    %v1630 = vpack.c.b16 %v1578, %v1574
    %v1631 = vpack.c.b16 %v1579, %v1575
    %v1632 = vpack.c.b16 %v1580, %v1576
    %v1633 = vpack.c.b16 %v1585, %v1581
    %v1634 = vpack.c.b16 %v1586, %v1582
    %v1635 = vpack.c.b16 %v1587, %v1583
    %v1636 = vpack.c.b16 %v1588, %v1584
    %v1637 = vpack.c.b16 %v1593, %v1589
    %v1638 = vpack.c.b16 %v1594, %v1590
    %v1639 = vpack.c.b16 %v1595, %v1591
    %v1640 = vpack.c.b16 %v1596, %v1592
    %v1641 = vpack.c.b16 %v1601, %v1597
    %v1642 = vpack.c.b16 %v1602, %v1598
    %v1643 = vpack.c.b16 %v1603, %v1599
    %v1644 = vpack.c.b16 %v1604, %v1600
    %v1645 = vpack.c.b16 %v1609, %v1605
    %v1646 = vpack.c.b16 %v1610, %v1606
    %v1647 = vpack.c.b16 %v1611, %v1607
    %v1648 = vpack.c.b16 %v1612, %v1608
    %v1649 = vpack.c.b16 %v1617, %v1613
    %v1650 = vpack.c.b16 %v1618, %v1614
    %v1651 = vpack.c.b16 %v1619, %v1615
    %v1652 = vpack.c.b16 %v1620, %v1616
    %1685 = vmatprep.subr.bf16.mxu0 %v1650
    %1686 = vmatpush1.bf16.msra.mxu0 %v1649
    %1687 = vmatprep.subr.bf16.mxu0 %v1646
    %1688 = vmatpush1.bf16.msra.mxu0 %v1645
    %1689 = vmatprep.subr.bf16.mxu0 %v1642
    %1690 = vmatpush1.bf16.msra.mxu0 %v1641
    %1691 = vmatprep.subr.bf16.mxu0 %v1638
    %1692 = vmatpush1.bf16.msra.mxu0 %v1637
    %1693 = vmatprep.subr.bf16.mxu0 %v1634
    %1694 = vmatpush1.bf16.msra.mxu0 %v1633
    %1695 = vmatprep.subr.bf16.mxu0 %v1630
    %1696 = vmatpush1.bf16.msra.mxu0 %v1629
    %1697 = vmatprep.subr.bf16.mxu0 %v1626
    %1698 = vmatpush1.bf16.msra.mxu0 %v1625
    %1699 = vmatprep.subr.bf16.mxu0 %v1622
    %1700 = vmatpush1.bf16.msra.mxu0 %v1621
    %1701 = vmatprep.subr.bf16.mxu0 0
    %1702 = vmatpush2.bf16.msra.mxu0 0
    %1703 = vmatprep.subr.bf16.mxu0 0
    %1704 = vmatpush2.bf16.msra.mxu0 0
    %1705 = vmatprep.subr.bf16.mxu0 0
    %1706 = vmatpush2.bf16.msra.mxu0 0
    %1707 = vmatprep.subr.bf16.mxu0 0
    %1708 = vmatpush2.bf16.msra.mxu0 0
    %1709 = vmatprep.subr.bf16.mxu0 0
    %1710 = vmatpush2.bf16.msra.mxu0 0
    %1711 = vmatprep.subr.bf16.mxu0 0
    %1712 = vmatpush2.bf16.msra.mxu0 0
    %1713 = vmatprep.subr.bf16.mxu0 0
    %1714 = vmatpush2.bf16.msra.mxu0 0
    %1715 = vmatprep.subr.bf16.mxu0 0
    %1716 = vmatpush2.bf16.msra.mxu0 0
    %1717 = vmatprep.mubr.bf16.mxu0 0
    %1718 = vmatmul.mubr.bf16.gmra.mxu0 %v1492
    %v1719 = vpop.f32.mrf.mxu0
    %v1720 = vadd.f32 0.0, %v1719
    %v1721 = vpop.f32.mrf.mxu0
    %v1722 = vadd.f32 0.0, %v1721
    %v1723 = vpop.f32.mrf.mxu0
    %v1724 = vpop.f32.mrf.mxu0
    %1725 = vdwg.mxu0
    %1726 = vmatprep.subr.bf16.mxu0 %v1652
    %1727 = vmatpush1.bf16.msra.mxu0 %v1651
    %1728 = vmatprep.subr.bf16.mxu0 %v1648
    %1729 = vmatpush1.bf16.msra.mxu0 %v1647
    %1730 = vmatprep.subr.bf16.mxu0 %v1644
    %1731 = vmatpush1.bf16.msra.mxu0 %v1643
    %1732 = vmatprep.subr.bf16.mxu0 %v1640
    %1733 = vmatpush1.bf16.msra.mxu0 %v1639
    %1734 = vmatprep.subr.bf16.mxu0 %v1636
    %1735 = vmatpush1.bf16.msra.mxu0 %v1635
    %1736 = vmatprep.subr.bf16.mxu0 %v1632
    %1737 = vmatpush1.bf16.msra.mxu0 %v1631
    %1738 = vmatprep.subr.bf16.mxu0 %v1628
    %1739 = vmatpush1.bf16.msra.mxu0 %v1627
    %1740 = vmatprep.subr.bf16.mxu0 %v1624
    %1741 = vmatpush1.bf16.msra.mxu0 %v1623
    %1742 = vmatprep.subr.bf16.mxu0 0
    %1743 = vmatpush2.bf16.msra.mxu0 0
    %1744 = vmatprep.subr.bf16.mxu0 0
    %1745 = vmatpush2.bf16.msra.mxu0 0
    %1746 = vmatprep.subr.bf16.mxu0 0
    %1747 = vmatpush2.bf16.msra.mxu0 0
    %1748 = vmatprep.subr.bf16.mxu0 0
    %1749 = vmatpush2.bf16.msra.mxu0 0
    %1750 = vmatprep.subr.bf16.mxu0 0
    %1751 = vmatpush2.bf16.msra.mxu0 0
    %1752 = vmatprep.subr.bf16.mxu0 0
    %1753 = vmatpush2.bf16.msra.mxu0 0
    %1754 = vmatprep.subr.bf16.mxu0 0
    %1755 = vmatpush2.bf16.msra.mxu0 0
    %1756 = vmatprep.subr.bf16.mxu0 0
    %1757 = vmatpush2.bf16.msra.mxu0 0
    %1758 = vmatprep.mubr.bf16.mxu0 0
    %1759 = vmatmul.mubr.bf16.gmra.mxu0 %v1492
    %v1760 = vpop.f32.mrf.mxu0
    %v1761 = vadd.f32 0.0, %v1760
    %v1762 = vpop.f32.mrf.mxu0
    %v1763 = vadd.f32 0.0, %v1762
    %v1764 = vpop.f32.mrf.mxu0
    %v1765 = vpop.f32.mrf.mxu0
    %1766 = vdwg.mxu0
    %v1767 = vadd.f32 %v1171, %v1720
    %v1768 = vadd.f32 %v1175, %v1722
    %v1769 = vadd.f32 %v1179, %v1761
    %v1770 = vadd.f32 %v1183, %v1763
    %v1771 = vxor.u32 %v1767, 2147483648
    %v1772 = vmul.f32 %v1771, 1.442695
    %v1773 = vpow.pop %v1772
    %v1774 = vadd.f32 %v1773, 1.0
    %v1775 = vrcp.pop %v1774
    %v1776 = vmul.f32 1.0, %v1775
    %v1777 = vxor.u32 %v1768, 2147483648
    %v1778 = vmul.f32 %v1777, 1.442695
    %v1779 = vpow.pop %v1778
    %v1780 = vadd.f32 %v1779, 1.0
    %v1781 = vrcp.pop %v1780
    %v1782 = vmul.f32 1.0, %v1781
    %v1783 = vtanh.pop %v1769
    %v1784 = vxor.u32 %v1770, 2147483648
    %v1785 = vmul.f32 %v1784, 1.442695
    %v1786 = vpow.pop %v1785
    %v1787 = vadd.f32 %v1786, 1.0
    %v1788 = vrcp.pop %v1787
    %v1789 = vmul.f32 1.0, %v1788
    %v1790 = vmul.f32 %v1782, %v1488
    %v1791 = vmul.f32 %v1776, %v1783
    %v1792 = vadd.f32 %v1790, %v1791
    %v1793 = vtanh.pop %v1792
    %v1794 = vmul.f32 %v1789, %v1793
    %s1795 = scalar_lea.vmem %s4, 8
    %1796 = vst [vmem:[%s1795] sm:$0xff] %v1794
    %v1797 = vpack.c.bf16 %v1794, %v1794
    %v1798 = vld [vmem:[%s2] sm:$0xff]
    %v1799 = vld [vmem:[%s2 + $0x8] sm:$0xff]
    %v1800 = vld [vmem:[%s2 + $0x10] sm:$0xff]
    %v1801 = vld [vmem:[%s2 + $0x18] sm:$0xff]
    %v1802 = vld [vmem:[%s2 + $0x20] sm:$0xff]
    %v1803 = vld [vmem:[%s2 + $0x28] sm:$0xff]
    %v1804 = vld [vmem:[%s2 + $0x30] sm:$0xff]
    %v1805 = vld [vmem:[%s2 + $0x38] sm:$0xff]
    %v1806 = vld [vmem:[%s2 + $0x40] sm:$0xff]
    %v1807 = vld [vmem:[%s2 + $0x48] sm:$0xff]
    %v1808 = vld [vmem:[%s2 + $0x50] sm:$0xff]
    %v1809 = vld [vmem:[%s2 + $0x58] sm:$0xff]
    %v1810 = vld [vmem:[%s2 + $0x60] sm:$0xff]
    %v1811 = vld [vmem:[%s2 + $0x68] sm:$0xff]
    %v1812 = vld [vmem:[%s2 + $0x70] sm:$0xff]
    %v1813 = vld [vmem:[%s2 + $0x78] sm:$0xff]
    %v1814 = vld [vmem:[%s2 + $0x80] sm:$0xff]
    %v1815 = vld [vmem:[%s2 + $0x88] sm:$0xff]
    %v1816 = vld [vmem:[%s2 + $0x90] sm:$0xff]
    %v1817 = vld [vmem:[%s2 + $0x98] sm:$0xff]
    %v1818 = vld [vmem:[%s2 + $0xa0] sm:$0xff]
    %v1819 = vld [vmem:[%s2 + $0xa8] sm:$0xff]
    %v1820 = vld [vmem:[%s2 + $0xb0] sm:$0xff]
    %v1821 = vld [vmem:[%s2 + $0xb8] sm:$0xff]
    %v1822 = vld [vmem:[%s2 + $0xc0] sm:$0xff]
    %v1823 = vld [vmem:[%s2 + $0xc8] sm:$0xff]
    %v1824 = vld [vmem:[%s2 + $0xd0] sm:$0xff]
    %v1825 = vld [vmem:[%s2 + $0xd8] sm:$0xff]
    %v1826 = vld [vmem:[%s2 + $0xe0] sm:$0xff]
    %v1827 = vld [vmem:[%s2 + $0xe8] sm:$0xff]
    %v1828 = vld [vmem:[%s2 + $0xf0] sm:$0xff]
    %v1829 = vld [vmem:[%s2 + $0xf8] sm:$0xff]
    %v1862 = vunpack.c.l.b16 %v1798
    %v1863 = vunpack.c.h.b16 %v1798
    %v1864 = vunpack.c.l.b16 %v1799
    %v1865 = vunpack.c.h.b16 %v1799
    %v1866 = vunpack.c.l.b16 %v1800
    %v1867 = vunpack.c.h.b16 %v1800
    %v1868 = vunpack.c.l.b16 %v1801
    %v1869 = vunpack.c.h.b16 %v1801
    %v1870 = vunpack.c.l.b16 %v1802
    %v1871 = vunpack.c.h.b16 %v1802
    %v1872 = vunpack.c.l.b16 %v1803
    %v1873 = vunpack.c.h.b16 %v1803
    %v1874 = vunpack.c.l.b16 %v1804
    %v1875 = vunpack.c.h.b16 %v1804
    %v1876 = vunpack.c.l.b16 %v1805
    %v1877 = vunpack.c.h.b16 %v1805
    %v1878 = vunpack.c.l.b16 %v1806
    %v1879 = vunpack.c.h.b16 %v1806
    %v1880 = vunpack.c.l.b16 %v1807
    %v1881 = vunpack.c.h.b16 %v1807
    %v1882 = vunpack.c.l.b16 %v1808
    %v1883 = vunpack.c.h.b16 %v1808
    %v1884 = vunpack.c.l.b16 %v1809
    %v1885 = vunpack.c.h.b16 %v1809
    %v1886 = vunpack.c.l.b16 %v1810
    %v1887 = vunpack.c.h.b16 %v1810
    %v1888 = vunpack.c.l.b16 %v1811
    %v1889 = vunpack.c.h.b16 %v1811
    %v1890 = vunpack.c.l.b16 %v1812
    %v1891 = vunpack.c.h.b16 %v1812
    %v1892 = vunpack.c.l.b16 %v1813
    %v1893 = vunpack.c.h.b16 %v1813
    %v1894 = vunpack.c.l.b16 %v1814
    %v1895 = vunpack.c.h.b16 %v1814
    %v1896 = vunpack.c.l.b16 %v1815
    %v1897 = vunpack.c.h.b16 %v1815
    %v1898 = vunpack.c.l.b16 %v1816
    %v1899 = vunpack.c.h.b16 %v1816
    %v1900 = vunpack.c.l.b16 %v1817
    %v1901 = vunpack.c.h.b16 %v1817
    %v1902 = vunpack.c.l.b16 %v1818
    %v1903 = vunpack.c.h.b16 %v1818
    %v1904 = vunpack.c.l.b16 %v1819
    %v1905 = vunpack.c.h.b16 %v1819
    %v1906 = vunpack.c.l.b16 %v1820
    %v1907 = vunpack.c.h.b16 %v1820
    %v1908 = vunpack.c.l.b16 %v1821
    %v1909 = vunpack.c.h.b16 %v1821
    %v1910 = vunpack.c.l.b16 %v1822
    %v1911 = vunpack.c.h.b16 %v1822
    %v1912 = vunpack.c.l.b16 %v1823
    %v1913 = vunpack.c.h.b16 %v1823
    %v1914 = vunpack.c.l.b16 %v1824
    %v1915 = vunpack.c.h.b16 %v1824
    %v1916 = vunpack.c.l.b16 %v1825
    %v1917 = vunpack.c.h.b16 %v1825
    %v1918 = vunpack.c.l.b16 %v1826
    %v1919 = vunpack.c.h.b16 %v1826
    %v1920 = vunpack.c.l.b16 %v1827
    %v1921 = vunpack.c.h.b16 %v1827
    %v1922 = vunpack.c.l.b16 %v1828
    %v1923 = vunpack.c.h.b16 %v1828
    %v1924 = vunpack.c.l.b16 %v1829
    %v1925 = vunpack.c.h.b16 %v1829
    %v1926 = vpack.c.b16 %v1866, %v1862
    %v1927 = vpack.c.b16 %v1867, %v1863
    %v1928 = vpack.c.b16 %v1868, %v1864
    %v1929 = vpack.c.b16 %v1869, %v1865
    %v1930 = vpack.c.b16 %v1874, %v1870
    %v1931 = vpack.c.b16 %v1875, %v1871
    %v1932 = vpack.c.b16 %v1876, %v1872
    %v1933 = vpack.c.b16 %v1877, %v1873
    %v1934 = vpack.c.b16 %v1882, %v1878
    %v1935 = vpack.c.b16 %v1883, %v1879
    %v1936 = vpack.c.b16 %v1884, %v1880
    %v1937 = vpack.c.b16 %v1885, %v1881
    %v1938 = vpack.c.b16 %v1890, %v1886
    %v1939 = vpack.c.b16 %v1891, %v1887
    %v1940 = vpack.c.b16 %v1892, %v1888
    %v1941 = vpack.c.b16 %v1893, %v1889
    %v1942 = vpack.c.b16 %v1898, %v1894
    %v1943 = vpack.c.b16 %v1899, %v1895
    %v1944 = vpack.c.b16 %v1900, %v1896
    %v1945 = vpack.c.b16 %v1901, %v1897
    %v1946 = vpack.c.b16 %v1906, %v1902
    %v1947 = vpack.c.b16 %v1907, %v1903
    %v1948 = vpack.c.b16 %v1908, %v1904
    %v1949 = vpack.c.b16 %v1909, %v1905
    %v1950 = vpack.c.b16 %v1914, %v1910
    %v1951 = vpack.c.b16 %v1915, %v1911
    %v1952 = vpack.c.b16 %v1916, %v1912
    %v1953 = vpack.c.b16 %v1917, %v1913
    %v1954 = vpack.c.b16 %v1922, %v1918
    %v1955 = vpack.c.b16 %v1923, %v1919
    %v1956 = vpack.c.b16 %v1924, %v1920
    %v1957 = vpack.c.b16 %v1925, %v1921
    %1990 = vmatprep.subr.bf16.mxu0 %v1955
    %1991 = vmatpush1.bf16.msra.mxu0 %v1954
    %1992 = vmatprep.subr.bf16.mxu0 %v1951
    %1993 = vmatpush1.bf16.msra.mxu0 %v1950
    %1994 = vmatprep.subr.bf16.mxu0 %v1947
    %1995 = vmatpush1.bf16.msra.mxu0 %v1946
    %1996 = vmatprep.subr.bf16.mxu0 %v1943
    %1997 = vmatpush1.bf16.msra.mxu0 %v1942
    %1998 = vmatprep.subr.bf16.mxu0 %v1939
    %1999 = vmatpush1.bf16.msra.mxu0 %v1938
    %2000 = vmatprep.subr.bf16.mxu0 %v1935
    %2001 = vmatpush1.bf16.msra.mxu0 %v1934
    %2002 = vmatprep.subr.bf16.mxu0 %v1931
    %2003 = vmatpush1.bf16.msra.mxu0 %v1930
    %2004 = vmatprep.subr.bf16.mxu0 %v1927
    %2005 = vmatpush1.bf16.msra.mxu0 %v1926
    %2006 = vmatprep.subr.bf16.mxu0 0
    %2007 = vmatpush2.bf16.msra.mxu0 0
    %2008 = vmatprep.subr.bf16.mxu0 0
    %2009 = vmatpush2.bf16.msra.mxu0 0
    %2010 = vmatprep.subr.bf16.mxu0 0
    %2011 = vmatpush2.bf16.msra.mxu0 0
    %2012 = vmatprep.subr.bf16.mxu0 0
    %2013 = vmatpush2.bf16.msra.mxu0 0
    %2014 = vmatprep.subr.bf16.mxu0 0
    %2015 = vmatpush2.bf16.msra.mxu0 0
    %2016 = vmatprep.subr.bf16.mxu0 0
    %2017 = vmatpush2.bf16.msra.mxu0 0
    %2018 = vmatprep.subr.bf16.mxu0 0
    %2019 = vmatpush2.bf16.msra.mxu0 0
    %2020 = vmatprep.subr.bf16.mxu0 0
    %2021 = vmatpush2.bf16.msra.mxu0 0
    %2022 = vmatprep.mubr.bf16.mxu0 0
    %2023 = vmatmul.mubr.bf16.gmra.mxu0 %v1797
    %v2024 = vpop.f32.mrf.mxu0
    %v2025 = vadd.f32 0.0, %v2024
    %v2026 = vpop.f32.mrf.mxu0
    %v2027 = vadd.f32 0.0, %v2026
    %v2028 = vpop.f32.mrf.mxu0
    %v2029 = vpop.f32.mrf.mxu0
    %2030 = vdwg.mxu0
    %2031 = vmatprep.subr.bf16.mxu0 %v1957
    %2032 = vmatpush1.bf16.msra.mxu0 %v1956
    %2033 = vmatprep.subr.bf16.mxu0 %v1953
    %2034 = vmatpush1.bf16.msra.mxu0 %v1952
    %2035 = vmatprep.subr.bf16.mxu0 %v1949
    %2036 = vmatpush1.bf16.msra.mxu0 %v1948
    %2037 = vmatprep.subr.bf16.mxu0 %v1945
    %2038 = vmatpush1.bf16.msra.mxu0 %v1944
    %2039 = vmatprep.subr.bf16.mxu0 %v1941
    %2040 = vmatpush1.bf16.msra.mxu0 %v1940
    %2041 = vmatprep.subr.bf16.mxu0 %v1937
    %2042 = vmatpush1.bf16.msra.mxu0 %v1936
    %2043 = vmatprep.subr.bf16.mxu0 %v1933
    %2044 = vmatpush1.bf16.msra.mxu0 %v1932
    %2045 = vmatprep.subr.bf16.mxu0 %v1929
    %2046 = vmatpush1.bf16.msra.mxu0 %v1928
    %2047 = vmatprep.subr.bf16.mxu0 0
    %2048 = vmatpush2.bf16.msra.mxu0 0
    %2049 = vmatprep.subr.bf16.mxu0 0
    %2050 = vmatpush2.bf16.msra.mxu0 0
    %2051 = vmatprep.subr.bf16.mxu0 0
    %2052 = vmatpush2.bf16.msra.mxu0 0
    %2053 = vmatprep.subr.bf16.mxu0 0
    %2054 = vmatpush2.bf16.msra.mxu0 0
    %2055 = vmatprep.subr.bf16.mxu0 0
    %2056 = vmatpush2.bf16.msra.mxu0 0
    %2057 = vmatprep.subr.bf16.mxu0 0
    %2058 = vmatpush2.bf16.msra.mxu0 0
    %2059 = vmatprep.subr.bf16.mxu0 0
    %2060 = vmatpush2.bf16.msra.mxu0 0
    %2061 = vmatprep.subr.bf16.mxu0 0
    %2062 = vmatpush2.bf16.msra.mxu0 0
    %2063 = vmatprep.mubr.bf16.mxu0 0
    %2064 = vmatmul.mubr.bf16.gmra.mxu0 %v1797
    %v2065 = vpop.f32.mrf.mxu0
    %v2066 = vadd.f32 0.0, %v2065
    %v2067 = vpop.f32.mrf.mxu0
    %v2068 = vadd.f32 0.0, %v2067
    %v2069 = vpop.f32.mrf.mxu0
    %v2070 = vpop.f32.mrf.mxu0
    %2071 = vdwg.mxu0
    %v2072 = vadd.f32 %v1171, %v2025
    %v2073 = vadd.f32 %v1175, %v2027
    %v2074 = vadd.f32 %v1179, %v2066
    %v2075 = vadd.f32 %v1183, %v2068
    %v2076 = vxor.u32 %v2072, 2147483648
    %v2077 = vmul.f32 %v2076, 1.442695
    %v2078 = vpow.pop %v2077
    %v2079 = vadd.f32 %v2078, 1.0
    %v2080 = vrcp.pop %v2079
    %v2081 = vmul.f32 1.0, %v2080
    %v2082 = vxor.u32 %v2073, 2147483648
    %v2083 = vmul.f32 %v2082, 1.442695
    %v2084 = vpow.pop %v2083
    %v2085 = vadd.f32 %v2084, 1.0
    %v2086 = vrcp.pop %v2085
    %v2087 = vmul.f32 1.0, %v2086
    %v2088 = vtanh.pop %v2074
    %v2089 = vxor.u32 %v2075, 2147483648
    %v2090 = vmul.f32 %v2089, 1.442695
    %v2091 = vpow.pop %v2090
    %v2092 = vadd.f32 %v2091, 1.0
    %v2093 = vrcp.pop %v2092
    %v2094 = vmul.f32 1.0, %v2093
    %v2095 = vmul.f32 %v2087, %v1792
    %v2096 = vmul.f32 %v2081, %v2088
    %v2097 = vadd.f32 %v2095, %v2096
    %v2098 = vtanh.pop %v2097
    %v2099 = vmul.f32 %v2094, %v2098
    %s2100 = scalar_lea.vmem %s4, 16
    %2101 = vst [vmem:[%s2100] sm:$0xff] %v2099
    %v2102 = vpack.c.bf16 %v2099, %v2099
    %v2103 = vld [vmem:[%s2] sm:$0xff]
    %v2104 = vld [vmem:[%s2 + $0x8] sm:$0xff]
    %v2105 = vld [vmem:[%s2 + $0x10] sm:$0xff]
    %v2106 = vld [vmem:[%s2 + $0x18] sm:$0xff]
    %v2107 = vld [vmem:[%s2 + $0x20] sm:$0xff]
    %v2108 = vld [vmem:[%s2 + $0x28] sm:$0xff]
    %v2109 = vld [vmem:[%s2 + $0x30] sm:$0xff]
    %v2110 = vld [vmem:[%s2 + $0x38] sm:$0xff]
    %v2111 = vld [vmem:[%s2 + $0x40] sm:$0xff]
    %v2112 = vld [vmem:[%s2 + $0x48] sm:$0xff]
    %v2113 = vld [vmem:[%s2 + $0x50] sm:$0xff]
    %v2114 = vld [vmem:[%s2 + $0x58] sm:$0xff]
    %v2115 = vld [vmem:[%s2 + $0x60] sm:$0xff]
    %v2116 = vld [vmem:[%s2 + $0x68] sm:$0xff]
    %v2117 = vld [vmem:[%s2 + $0x70] sm:$0xff]
    %v2118 = vld [vmem:[%s2 + $0x78] sm:$0xff]
    %v2119 = vld [vmem:[%s2 + $0x80] sm:$0xff]
    %v2120 = vld [vmem:[%s2 + $0x88] sm:$0xff]
    %v2121 = vld [vmem:[%s2 + $0x90] sm:$0xff]
    %v2122 = vld [vmem:[%s2 + $0x98] sm:$0xff]
    %v2123 = vld [vmem:[%s2 + $0xa0] sm:$0xff]
    %v2124 = vld [vmem:[%s2 + $0xa8] sm:$0xff]
    %v2125 = vld [vmem:[%s2 + $0xb0] sm:$0xff]
    %v2126 = vld [vmem:[%s2 + $0xb8] sm:$0xff]
    %v2127 = vld [vmem:[%s2 + $0xc0] sm:$0xff]
    %v2128 = vld [vmem:[%s2 + $0xc8] sm:$0xff]
    %v2129 = vld [vmem:[%s2 + $0xd0] sm:$0xff]
    %v2130 = vld [vmem:[%s2 + $0xd8] sm:$0xff]
    %v2131 = vld [vmem:[%s2 + $0xe0] sm:$0xff]
    %v2132 = vld [vmem:[%s2 + $0xe8] sm:$0xff]
    %v2133 = vld [vmem:[%s2 + $0xf0] sm:$0xff]
    %v2134 = vld [vmem:[%s2 + $0xf8] sm:$0xff]
    %v2167 = vunpack.c.l.b16 %v2103
    %v2168 = vunpack.c.h.b16 %v2103
    %v2169 = vunpack.c.l.b16 %v2104
    %v2170 = vunpack.c.h.b16 %v2104
    %v2171 = vunpack.c.l.b16 %v2105
    %v2172 = vunpack.c.h.b16 %v2105
    %v2173 = vunpack.c.l.b16 %v2106
    %v2174 = vunpack.c.h.b16 %v2106
    %v2175 = vunpack.c.l.b16 %v2107
    %v2176 = vunpack.c.h.b16 %v2107
    %v2177 = vunpack.c.l.b16 %v2108
    %v2178 = vunpack.c.h.b16 %v2108
    %v2179 = vunpack.c.l.b16 %v2109
    %v2180 = vunpack.c.h.b16 %v2109
    %v2181 = vunpack.c.l.b16 %v2110
    %v2182 = vunpack.c.h.b16 %v2110
    %v2183 = vunpack.c.l.b16 %v2111
    %v2184 = vunpack.c.h.b16 %v2111
    %v2185 = vunpack.c.l.b16 %v2112
    %v2186 = vunpack.c.h.b16 %v2112
    %v2187 = vunpack.c.l.b16 %v2113
    %v2188 = vunpack.c.h.b16 %v2113
    %v2189 = vunpack.c.l.b16 %v2114
    %v2190 = vunpack.c.h.b16 %v2114
    %v2191 = vunpack.c.l.b16 %v2115
    %v2192 = vunpack.c.h.b16 %v2115
    %v2193 = vunpack.c.l.b16 %v2116
    %v2194 = vunpack.c.h.b16 %v2116
    %v2195 = vunpack.c.l.b16 %v2117
    %v2196 = vunpack.c.h.b16 %v2117
    %v2197 = vunpack.c.l.b16 %v2118
    %v2198 = vunpack.c.h.b16 %v2118
    %v2199 = vunpack.c.l.b16 %v2119
    %v2200 = vunpack.c.h.b16 %v2119
    %v2201 = vunpack.c.l.b16 %v2120
    %v2202 = vunpack.c.h.b16 %v2120
    %v2203 = vunpack.c.l.b16 %v2121
    %v2204 = vunpack.c.h.b16 %v2121
    %v2205 = vunpack.c.l.b16 %v2122
    %v2206 = vunpack.c.h.b16 %v2122
    %v2207 = vunpack.c.l.b16 %v2123
    %v2208 = vunpack.c.h.b16 %v2123
    %v2209 = vunpack.c.l.b16 %v2124
    %v2210 = vunpack.c.h.b16 %v2124
    %v2211 = vunpack.c.l.b16 %v2125
    %v2212 = vunpack.c.h.b16 %v2125
    %v2213 = vunpack.c.l.b16 %v2126
    %v2214 = vunpack.c.h.b16 %v2126
    %v2215 = vunpack.c.l.b16 %v2127
    %v2216 = vunpack.c.h.b16 %v2127
    %v2217 = vunpack.c.l.b16 %v2128
    %v2218 = vunpack.c.h.b16 %v2128
    %v2219 = vunpack.c.l.b16 %v2129
    %v2220 = vunpack.c.h.b16 %v2129
    %v2221 = vunpack.c.l.b16 %v2130
    %v2222 = vunpack.c.h.b16 %v2130
    %v2223 = vunpack.c.l.b16 %v2131
    %v2224 = vunpack.c.h.b16 %v2131
    %v2225 = vunpack.c.l.b16 %v2132
    %v2226 = vunpack.c.h.b16 %v2132
    %v2227 = vunpack.c.l.b16 %v2133
    %v2228 = vunpack.c.h.b16 %v2133
    %v2229 = vunpack.c.l.b16 %v2134
    %v2230 = vunpack.c.h.b16 %v2134
    %v2231 = vpack.c.b16 %v2171, %v2167
    %v2232 = vpack.c.b16 %v2172, %v2168
    %v2233 = vpack.c.b16 %v2173, %v2169
    %v2234 = vpack.c.b16 %v2174, %v2170
    %v2235 = vpack.c.b16 %v2179, %v2175
    %v2236 = vpack.c.b16 %v2180, %v2176
    %v2237 = vpack.c.b16 %v2181, %v2177
    %v2238 = vpack.c.b16 %v2182, %v2178
    %v2239 = vpack.c.b16 %v2187, %v2183
    %v2240 = vpack.c.b16 %v2188, %v2184
    %v2241 = vpack.c.b16 %v2189, %v2185
    %v2242 = vpack.c.b16 %v2190, %v2186
    %v2243 = vpack.c.b16 %v2195, %v2191
    %v2244 = vpack.c.b16 %v2196, %v2192
    %v2245 = vpack.c.b16 %v2197, %v2193
    %v2246 = vpack.c.b16 %v2198, %v2194
    %v2247 = vpack.c.b16 %v2203, %v2199
    %v2248 = vpack.c.b16 %v2204, %v2200
    %v2249 = vpack.c.b16 %v2205, %v2201
    %v2250 = vpack.c.b16 %v2206, %v2202
    %v2251 = vpack.c.b16 %v2211, %v2207
    %v2252 = vpack.c.b16 %v2212, %v2208
    %v2253 = vpack.c.b16 %v2213, %v2209
    %v2254 = vpack.c.b16 %v2214, %v2210
    %v2255 = vpack.c.b16 %v2219, %v2215
    %v2256 = vpack.c.b16 %v2220, %v2216
    %v2257 = vpack.c.b16 %v2221, %v2217
    %v2258 = vpack.c.b16 %v2222, %v2218
    %v2259 = vpack.c.b16 %v2227, %v2223
    %v2260 = vpack.c.b16 %v2228, %v2224
    %v2261 = vpack.c.b16 %v2229, %v2225
    %v2262 = vpack.c.b16 %v2230, %v2226
    %2295 = vmatprep.subr.bf16.mxu0 %v2260
    %2296 = vmatpush1.bf16.msra.mxu0 %v2259
    %2297 = vmatprep.subr.bf16.mxu0 %v2256
    %2298 = vmatpush1.bf16.msra.mxu0 %v2255
    %2299 = vmatprep.subr.bf16.mxu0 %v2252
    %2300 = vmatpush1.bf16.msra.mxu0 %v2251
    %2301 = vmatprep.subr.bf16.mxu0 %v2248
    %2302 = vmatpush1.bf16.msra.mxu0 %v2247
    %2303 = vmatprep.subr.bf16.mxu0 %v2244
    %2304 = vmatpush1.bf16.msra.mxu0 %v2243
    %2305 = vmatprep.subr.bf16.mxu0 %v2240
    %2306 = vmatpush1.bf16.msra.mxu0 %v2239
    %2307 = vmatprep.subr.bf16.mxu0 %v2236
    %2308 = vmatpush1.bf16.msra.mxu0 %v2235
    %2309 = vmatprep.subr.bf16.mxu0 %v2232
    %2310 = vmatpush1.bf16.msra.mxu0 %v2231
    %2311 = vmatprep.subr.bf16.mxu0 0
    %2312 = vmatpush2.bf16.msra.mxu0 0
    %2313 = vmatprep.subr.bf16.mxu0 0
    %2314 = vmatpush2.bf16.msra.mxu0 0
    %2315 = vmatprep.subr.bf16.mxu0 0
    %2316 = vmatpush2.bf16.msra.mxu0 0
    %2317 = vmatprep.subr.bf16.mxu0 0
    %2318 = vmatpush2.bf16.msra.mxu0 0
    %2319 = vmatprep.subr.bf16.mxu0 0
    %2320 = vmatpush2.bf16.msra.mxu0 0
    %2321 = vmatprep.subr.bf16.mxu0 0
    %2322 = vmatpush2.bf16.msra.mxu0 0
    %2323 = vmatprep.subr.bf16.mxu0 0
    %2324 = vmatpush2.bf16.msra.mxu0 0
    %2325 = vmatprep.subr.bf16.mxu0 0
    %2326 = vmatpush2.bf16.msra.mxu0 0
    %2327 = vmatprep.mubr.bf16.mxu0 0
    %2328 = vmatmul.mubr.bf16.gmra.mxu0 %v2102
    %v2329 = vpop.f32.mrf.mxu0
    %v2330 = vadd.f32 0.0, %v2329
    %v2331 = vpop.f32.mrf.mxu0
    %v2332 = vadd.f32 0.0, %v2331
    %v2333 = vpop.f32.mrf.mxu0
    %v2334 = vpop.f32.mrf.mxu0
    %2335 = vdwg.mxu0
    %2336 = vmatprep.subr.bf16.mxu0 %v2262
    %2337 = vmatpush1.bf16.msra.mxu0 %v2261
    %2338 = vmatprep.subr.bf16.mxu0 %v2258
    %2339 = vmatpush1.bf16.msra.mxu0 %v2257
    %2340 = vmatprep.subr.bf16.mxu0 %v2254
    %2341 = vmatpush1.bf16.msra.mxu0 %v2253
    %2342 = vmatprep.subr.bf16.mxu0 %v2250
    %2343 = vmatpush1.bf16.msra.mxu0 %v2249
    %2344 = vmatprep.subr.bf16.mxu0 %v2246
    %2345 = vmatpush1.bf16.msra.mxu0 %v2245
    %2346 = vmatprep.subr.bf16.mxu0 %v2242
    %2347 = vmatpush1.bf16.msra.mxu0 %v2241
    %2348 = vmatprep.subr.bf16.mxu0 %v2238
    %2349 = vmatpush1.bf16.msra.mxu0 %v2237
    %2350 = vmatprep.subr.bf16.mxu0 %v2234
    %2351 = vmatpush1.bf16.msra.mxu0 %v2233
    %2352 = vmatprep.subr.bf16.mxu0 0
    %2353 = vmatpush2.bf16.msra.mxu0 0
    %2354 = vmatprep.subr.bf16.mxu0 0
    %2355 = vmatpush2.bf16.msra.mxu0 0
    %2356 = vmatprep.subr.bf16.mxu0 0
    %2357 = vmatpush2.bf16.msra.mxu0 0
    %2358 = vmatprep.subr.bf16.mxu0 0
    %2359 = vmatpush2.bf16.msra.mxu0 0
    %2360 = vmatprep.subr.bf16.mxu0 0
    %2361 = vmatpush2.bf16.msra.mxu0 0
    %2362 = vmatprep.subr.bf16.mxu0 0
    %2363 = vmatpush2.bf16.msra.mxu0 0
    %2364 = vmatprep.subr.bf16.mxu0 0
    %2365 = vmatpush2.bf16.msra.mxu0 0
    %2366 = vmatprep.subr.bf16.mxu0 0
    %2367 = vmatpush2.bf16.msra.mxu0 0
    %2368 = vmatprep.mubr.bf16.mxu0 0
    %2369 = vmatmul.mubr.bf16.gmra.mxu0 %v2102
    %v2370 = vpop.f32.mrf.mxu0
    %v2371 = vadd.f32 0.0, %v2370
    %v2372 = vpop.f32.mrf.mxu0
    %v2373 = vadd.f32 0.0, %v2372
    %v2374 = vpop.f32.mrf.mxu0
    %v2375 = vpop.f32.mrf.mxu0
    %2376 = vdwg.mxu0
    %v2377 = vadd.f32 %v1171, %v2330
    %v2378 = vadd.f32 %v1175, %v2332
    %v2379 = vadd.f32 %v1179, %v2371
    %v2380 = vadd.f32 %v1183, %v2373
    %v2381 = vxor.u32 %v2377, 2147483648
    %v2382 = vmul.f32 %v2381, 1.442695
    %v2383 = vpow.pop %v2382
    %v2384 = vadd.f32 %v2383, 1.0
    %v2385 = vrcp.pop %v2384
    %v2386 = vmul.f32 1.0, %v2385
    %v2387 = vxor.u32 %v2378, 2147483648
    %v2388 = vmul.f32 %v2387, 1.442695
    %v2389 = vpow.pop %v2388
    %v2390 = vadd.f32 %v2389, 1.0
    %v2391 = vrcp.pop %v2390
    %v2392 = vmul.f32 1.0, %v2391
    %v2393 = vtanh.pop %v2379
    %v2394 = vxor.u32 %v2380, 2147483648
    %v2395 = vmul.f32 %v2394, 1.442695
    %v2396 = vpow.pop %v2395
    %v2397 = vadd.f32 %v2396, 1.0
    %v2398 = vrcp.pop %v2397
    %v2399 = vmul.f32 1.0, %v2398
    %v2400 = vmul.f32 %v2392, %v2097
    %v2401 = vmul.f32 %v2386, %v2393
    %v2402 = vadd.f32 %v2400, %v2401
    %v2403 = vtanh.pop %v2402
    %v2404 = vmul.f32 %v2399, %v2403
    %s2405 = scalar_lea.vmem %s4, 24
    %2406 = vst [vmem:[%s2405] sm:$0xff] %v2404
    %v2407 = vpack.c.bf16 %v2404, %v2404
    %v2408 = vld [vmem:[%s2] sm:$0xff]
    %v2409 = vld [vmem:[%s2 + $0x8] sm:$0xff]
    %v2410 = vld [vmem:[%s2 + $0x10] sm:$0xff]
    %v2411 = vld [vmem:[%s2 + $0x18] sm:$0xff]
    %v2412 = vld [vmem:[%s2 + $0x20] sm:$0xff]
    %v2413 = vld [vmem:[%s2 + $0x28] sm:$0xff]
    %v2414 = vld [vmem:[%s2 + $0x30] sm:$0xff]
    %v2415 = vld [vmem:[%s2 + $0x38] sm:$0xff]
    %v2416 = vld [vmem:[%s2 + $0x40] sm:$0xff]
    %v2417 = vld [vmem:[%s2 + $0x48] sm:$0xff]
    %v2418 = vld [vmem:[%s2 + $0x50] sm:$0xff]
    %v2419 = vld [vmem:[%s2 + $0x58] sm:$0xff]
    %v2420 = vld [vmem:[%s2 + $0x60] sm:$0xff]
    %v2421 = vld [vmem:[%s2 + $0x68] sm:$0xff]
    %v2422 = vld [vmem:[%s2 + $0x70] sm:$0xff]
    %v2423 = vld [vmem:[%s2 + $0x78] sm:$0xff]
    %v2424 = vld [vmem:[%s2 + $0x80] sm:$0xff]
    %v2425 = vld [vmem:[%s2 + $0x88] sm:$0xff]
    %v2426 = vld [vmem:[%s2 + $0x90] sm:$0xff]
    %v2427 = vld [vmem:[%s2 + $0x98] sm:$0xff]
    %v2428 = vld [vmem:[%s2 + $0xa0] sm:$0xff]
    %v2429 = vld [vmem:[%s2 + $0xa8] sm:$0xff]
    %v2430 = vld [vmem:[%s2 + $0xb0] sm:$0xff]
    %v2431 = vld [vmem:[%s2 + $0xb8] sm:$0xff]
    %v2432 = vld [vmem:[%s2 + $0xc0] sm:$0xff]
    %v2433 = vld [vmem:[%s2 + $0xc8] sm:$0xff]
    %v2434 = vld [vmem:[%s2 + $0xd0] sm:$0xff]
    %v2435 = vld [vmem:[%s2 + $0xd8] sm:$0xff]
    %v2436 = vld [vmem:[%s2 + $0xe0] sm:$0xff]
    %v2437 = vld [vmem:[%s2 + $0xe8] sm:$0xff]
    %v2438 = vld [vmem:[%s2 + $0xf0] sm:$0xff]
    %v2439 = vld [vmem:[%s2 + $0xf8] sm:$0xff]
    %v2472 = vunpack.c.l.b16 %v2408
    %v2473 = vunpack.c.h.b16 %v2408
    %v2474 = vunpack.c.l.b16 %v2409
    %v2475 = vunpack.c.h.b16 %v2409
    %v2476 = vunpack.c.l.b16 %v2410
    %v2477 = vunpack.c.h.b16 %v2410
    %v2478 = vunpack.c.l.b16 %v2411
    %v2479 = vunpack.c.h.b16 %v2411
    %v2480 = vunpack.c.l.b16 %v2412
    %v2481 = vunpack.c.h.b16 %v2412
    %v2482 = vunpack.c.l.b16 %v2413
    %v2483 = vunpack.c.h.b16 %v2413
    %v2484 = vunpack.c.l.b16 %v2414
    %v2485 = vunpack.c.h.b16 %v2414
    %v2486 = vunpack.c.l.b16 %v2415
    %v2487 = vunpack.c.h.b16 %v2415
    %v2488 = vunpack.c.l.b16 %v2416
    %v2489 = vunpack.c.h.b16 %v2416
    %v2490 = vunpack.c.l.b16 %v2417
    %v2491 = vunpack.c.h.b16 %v2417
    %v2492 = vunpack.c.l.b16 %v2418
    %v2493 = vunpack.c.h.b16 %v2418
    %v2494 = vunpack.c.l.b16 %v2419
    %v2495 = vunpack.c.h.b16 %v2419
    %v2496 = vunpack.c.l.b16 %v2420
    %v2497 = vunpack.c.h.b16 %v2420
    %v2498 = vunpack.c.l.b16 %v2421
    %v2499 = vunpack.c.h.b16 %v2421
    %v2500 = vunpack.c.l.b16 %v2422
    %v2501 = vunpack.c.h.b16 %v2422
    %v2502 = vunpack.c.l.b16 %v2423
    %v2503 = vunpack.c.h.b16 %v2423
    %v2504 = vunpack.c.l.b16 %v2424
    %v2505 = vunpack.c.h.b16 %v2424
    %v2506 = vunpack.c.l.b16 %v2425
    %v2507 = vunpack.c.h.b16 %v2425
    %v2508 = vunpack.c.l.b16 %v2426
    %v2509 = vunpack.c.h.b16 %v2426
    %v2510 = vunpack.c.l.b16 %v2427
    %v2511 = vunpack.c.h.b16 %v2427
    %v2512 = vunpack.c.l.b16 %v2428
    %v2513 = vunpack.c.h.b16 %v2428
    %v2514 = vunpack.c.l.b16 %v2429
    %v2515 = vunpack.c.h.b16 %v2429
    %v2516 = vunpack.c.l.b16 %v2430
    %v2517 = vunpack.c.h.b16 %v2430
    %v2518 = vunpack.c.l.b16 %v2431
    %v2519 = vunpack.c.h.b16 %v2431
    %v2520 = vunpack.c.l.b16 %v2432
    %v2521 = vunpack.c.h.b16 %v2432
    %v2522 = vunpack.c.l.b16 %v2433
    %v2523 = vunpack.c.h.b16 %v2433
    %v2524 = vunpack.c.l.b16 %v2434
    %v2525 = vunpack.c.h.b16 %v2434
    %v2526 = vunpack.c.l.b16 %v2435
    %v2527 = vunpack.c.h.b16 %v2435
    %v2528 = vunpack.c.l.b16 %v2436
    %v2529 = vunpack.c.h.b16 %v2436
    %v2530 = vunpack.c.l.b16 %v2437
    %v2531 = vunpack.c.h.b16 %v2437
    %v2532 = vunpack.c.l.b16 %v2438
    %v2533 = vunpack.c.h.b16 %v2438
    %v2534 = vunpack.c.l.b16 %v2439
    %v2535 = vunpack.c.h.b16 %v2439
    %v2536 = vpack.c.b16 %v2476, %v2472
    %v2537 = vpack.c.b16 %v2477, %v2473
    %v2538 = vpack.c.b16 %v2478, %v2474
    %v2539 = vpack.c.b16 %v2479, %v2475
    %v2540 = vpack.c.b16 %v2484, %v2480
    %v2541 = vpack.c.b16 %v2485, %v2481
    %v2542 = vpack.c.b16 %v2486, %v2482
    %v2543 = vpack.c.b16 %v2487, %v2483
    %v2544 = vpack.c.b16 %v2492, %v2488
    %v2545 = vpack.c.b16 %v2493, %v2489
    %v2546 = vpack.c.b16 %v2494, %v2490
    %v2547 = vpack.c.b16 %v2495, %v2491
    %v2548 = vpack.c.b16 %v2500, %v2496
    %v2549 = vpack.c.b16 %v2501, %v2497
    %v2550 = vpack.c.b16 %v2502, %v2498
    %v2551 = vpack.c.b16 %v2503, %v2499
    %v2552 = vpack.c.b16 %v2508, %v2504
    %v2553 = vpack.c.b16 %v2509, %v2505
    %v2554 = vpack.c.b16 %v2510, %v2506
    %v2555 = vpack.c.b16 %v2511, %v2507
    %v2556 = vpack.c.b16 %v2516, %v2512
    %v2557 = vpack.c.b16 %v2517, %v2513
    %v2558 = vpack.c.b16 %v2518, %v2514
    %v2559 = vpack.c.b16 %v2519, %v2515
    %v2560 = vpack.c.b16 %v2524, %v2520
    %v2561 = vpack.c.b16 %v2525, %v2521
    %v2562 = vpack.c.b16 %v2526, %v2522
    %v2563 = vpack.c.b16 %v2527, %v2523
    %v2564 = vpack.c.b16 %v2532, %v2528
    %v2565 = vpack.c.b16 %v2533, %v2529
    %v2566 = vpack.c.b16 %v2534, %v2530
    %v2567 = vpack.c.b16 %v2535, %v2531
    %2600 = vmatprep.subr.bf16.mxu0 %v2565
    %2601 = vmatpush1.bf16.msra.mxu0 %v2564
    %2602 = vmatprep.subr.bf16.mxu0 %v2561
    %2603 = vmatpush1.bf16.msra.mxu0 %v2560
    %2604 = vmatprep.subr.bf16.mxu0 %v2557
    %2605 = vmatpush1.bf16.msra.mxu0 %v2556
    %2606 = vmatprep.subr.bf16.mxu0 %v2553
    %2607 = vmatpush1.bf16.msra.mxu0 %v2552
    %2608 = vmatprep.subr.bf16.mxu0 %v2549
    %2609 = vmatpush1.bf16.msra.mxu0 %v2548
    %2610 = vmatprep.subr.bf16.mxu0 %v2545
    %2611 = vmatpush1.bf16.msra.mxu0 %v2544
    %2612 = vmatprep.subr.bf16.mxu0 %v2541
    %2613 = vmatpush1.bf16.msra.mxu0 %v2540
    %2614 = vmatprep.subr.bf16.mxu0 %v2537
    %2615 = vmatpush1.bf16.msra.mxu0 %v2536
    %2616 = vmatprep.subr.bf16.mxu0 0
    %2617 = vmatpush2.bf16.msra.mxu0 0
    %2618 = vmatprep.subr.bf16.mxu0 0
    %2619 = vmatpush2.bf16.msra.mxu0 0
    %2620 = vmatprep.subr.bf16.mxu0 0
    %2621 = vmatpush2.bf16.msra.mxu0 0
    %2622 = vmatprep.subr.bf16.mxu0 0
    %2623 = vmatpush2.bf16.msra.mxu0 0
    %2624 = vmatprep.subr.bf16.mxu0 0
    %2625 = vmatpush2.bf16.msra.mxu0 0
    %2626 = vmatprep.subr.bf16.mxu0 0
    %2627 = vmatpush2.bf16.msra.mxu0 0
    %2628 = vmatprep.subr.bf16.mxu0 0
    %2629 = vmatpush2.bf16.msra.mxu0 0
    %2630 = vmatprep.subr.bf16.mxu0 0
    %2631 = vmatpush2.bf16.msra.mxu0 0
    %2632 = vmatprep.mubr.bf16.mxu0 0
    %2633 = vmatmul.mubr.bf16.gmra.mxu0 %v2407
    %v2634 = vpop.f32.mrf.mxu0
    %v2635 = vadd.f32 0.0, %v2634
    %v2636 = vpop.f32.mrf.mxu0
    %v2637 = vadd.f32 0.0, %v2636
    %v2638 = vpop.f32.mrf.mxu0
    %v2639 = vpop.f32.mrf.mxu0
    %2640 = vdwg.mxu0
    %2641 = vmatprep.subr.bf16.mxu0 %v2567
    %2642 = vmatpush1.bf16.msra.mxu0 %v2566
    %2643 = vmatprep.subr.bf16.mxu0 %v2563
    %2644 = vmatpush1.bf16.msra.mxu0 %v2562
    %2645 = vmatprep.subr.bf16.mxu0 %v2559
    %2646 = vmatpush1.bf16.msra.mxu0 %v2558
    %2647 = vmatprep.subr.bf16.mxu0 %v2555
    %2648 = vmatpush1.bf16.msra.mxu0 %v2554
    %2649 = vmatprep.subr.bf16.mxu0 %v2551
    %2650 = vmatpush1.bf16.msra.mxu0 %v2550
    %2651 = vmatprep.subr.bf16.mxu0 %v2547
    %2652 = vmatpush1.bf16.msra.mxu0 %v2546
    %2653 = vmatprep.subr.bf16.mxu0 %v2543
    %2654 = vmatpush1.bf16.msra.mxu0 %v2542
    %2655 = vmatprep.subr.bf16.mxu0 %v2539
    %2656 = vmatpush1.bf16.msra.mxu0 %v2538
    %2657 = vmatprep.subr.bf16.mxu0 0
    %2658 = vmatpush2.bf16.msra.mxu0 0
    %2659 = vmatprep.subr.bf16.mxu0 0
    %2660 = vmatpush2.bf16.msra.mxu0 0
    %2661 = vmatprep.subr.bf16.mxu0 0
    %2662 = vmatpush2.bf16.msra.mxu0 0
    %2663 = vmatprep.subr.bf16.mxu0 0
    %2664 = vmatpush2.bf16.msra.mxu0 0
    %2665 = vmatprep.subr.bf16.mxu0 0
    %2666 = vmatpush2.bf16.msra.mxu0 0
    %2667 = vmatprep.subr.bf16.mxu0 0
    %2668 = vmatpush2.bf16.msra.mxu0 0
    %2669 = vmatprep.subr.bf16.mxu0 0
    %2670 = vmatpush2.bf16.msra.mxu0 0
    %2671 = vmatprep.subr.bf16.mxu0 0
    %2672 = vmatpush2.bf16.msra.mxu0 0
    %2673 = vmatprep.mubr.bf16.mxu0 0
    %2674 = vmatmul.mubr.bf16.gmra.mxu0 %v2407
    %v2675 = vpop.f32.mrf.mxu0
    %v2676 = vadd.f32 0.0, %v2675
    %v2677 = vpop.f32.mrf.mxu0
    %v2678 = vadd.f32 0.0, %v2677
    %v2679 = vpop.f32.mrf.mxu0
    %v2680 = vpop.f32.mrf.mxu0
    %2681 = vdwg.mxu0
    %v2682 = vadd.f32 %v1171, %v2635
    %v2683 = vadd.f32 %v1175, %v2637
    %v2684 = vadd.f32 %v1179, %v2676
    %v2685 = vadd.f32 %v1183, %v2678
    %v2686 = vxor.u32 %v2682, 2147483648
    %v2687 = vmul.f32 %v2686, 1.442695
    %v2688 = vpow.pop %v2687
    %v2689 = vadd.f32 %v2688, 1.0
    %v2690 = vrcp.pop %v2689
    %v2691 = vmul.f32 1.0, %v2690
    %v2692 = vxor.u32 %v2683, 2147483648
    %v2693 = vmul.f32 %v2692, 1.442695
    %v2694 = vpow.pop %v2693
    %v2695 = vadd.f32 %v2694, 1.0
    %v2696 = vrcp.pop %v2695
    %v2697 = vmul.f32 1.0, %v2696
    %v2698 = vtanh.pop %v2684
    %v2699 = vxor.u32 %v2685, 2147483648
    %v2700 = vmul.f32 %v2699, 1.442695
    %v2701 = vpow.pop %v2700
    %v2702 = vadd.f32 %v2701, 1.0
    %v2703 = vrcp.pop %v2702
    %v2704 = vmul.f32 1.0, %v2703
    %v2705 = vmul.f32 %v2697, %v2402
    %v2706 = vmul.f32 %v2691, %v2698
    %v2707 = vadd.f32 %v2705, %v2706
    %v2708 = vtanh.pop %v2707
    %v2709 = vmul.f32 %v2704, %v2708
    %s2710 = scalar_lea.vmem %s4, 32
    %2711 = vst [vmem:[%s2710] sm:$0xff] %v2709
    %v2712 = vpack.c.bf16 %v2709, %v2709
    %v2713 = vld [vmem:[%s2] sm:$0xff]
    %v2714 = vld [vmem:[%s2 + $0x8] sm:$0xff]
    %v2715 = vld [vmem:[%s2 + $0x10] sm:$0xff]
    %v2716 = vld [vmem:[%s2 + $0x18] sm:$0xff]
    %v2717 = vld [vmem:[%s2 + $0x20] sm:$0xff]
    %v2718 = vld [vmem:[%s2 + $0x28] sm:$0xff]
    %v2719 = vld [vmem:[%s2 + $0x30] sm:$0xff]
    %v2720 = vld [vmem:[%s2 + $0x38] sm:$0xff]
    %v2721 = vld [vmem:[%s2 + $0x40] sm:$0xff]
    %v2722 = vld [vmem:[%s2 + $0x48] sm:$0xff]
    %v2723 = vld [vmem:[%s2 + $0x50] sm:$0xff]
    %v2724 = vld [vmem:[%s2 + $0x58] sm:$0xff]
    %v2725 = vld [vmem:[%s2 + $0x60] sm:$0xff]
    %v2726 = vld [vmem:[%s2 + $0x68] sm:$0xff]
    %v2727 = vld [vmem:[%s2 + $0x70] sm:$0xff]
    %v2728 = vld [vmem:[%s2 + $0x78] sm:$0xff]
    %v2729 = vld [vmem:[%s2 + $0x80] sm:$0xff]
    %v2730 = vld [vmem:[%s2 + $0x88] sm:$0xff]
    %v2731 = vld [vmem:[%s2 + $0x90] sm:$0xff]
    %v2732 = vld [vmem:[%s2 + $0x98] sm:$0xff]
    %v2733 = vld [vmem:[%s2 + $0xa0] sm:$0xff]
    %v2734 = vld [vmem:[%s2 + $0xa8] sm:$0xff]
    %v2735 = vld [vmem:[%s2 + $0xb0] sm:$0xff]
    %v2736 = vld [vmem:[%s2 + $0xb8] sm:$0xff]
    %v2737 = vld [vmem:[%s2 + $0xc0] sm:$0xff]
    %v2738 = vld [vmem:[%s2 + $0xc8] sm:$0xff]
    %v2739 = vld [vmem:[%s2 + $0xd0] sm:$0xff]
    %v2740 = vld [vmem:[%s2 + $0xd8] sm:$0xff]
    %v2741 = vld [vmem:[%s2 + $0xe0] sm:$0xff]
    %v2742 = vld [vmem:[%s2 + $0xe8] sm:$0xff]
    %v2743 = vld [vmem:[%s2 + $0xf0] sm:$0xff]
    %v2744 = vld [vmem:[%s2 + $0xf8] sm:$0xff]
    %v2777 = vunpack.c.l.b16 %v2713
    %v2778 = vunpack.c.h.b16 %v2713
    %v2779 = vunpack.c.l.b16 %v2714
    %v2780 = vunpack.c.h.b16 %v2714
    %v2781 = vunpack.c.l.b16 %v2715
    %v2782 = vunpack.c.h.b16 %v2715
    %v2783 = vunpack.c.l.b16 %v2716
    %v2784 = vunpack.c.h.b16 %v2716
    %v2785 = vunpack.c.l.b16 %v2717
    %v2786 = vunpack.c.h.b16 %v2717
    %v2787 = vunpack.c.l.b16 %v2718
    %v2788 = vunpack.c.h.b16 %v2718
    %v2789 = vunpack.c.l.b16 %v2719
    %v2790 = vunpack.c.h.b16 %v2719
    %v2791 = vunpack.c.l.b16 %v2720
    %v2792 = vunpack.c.h.b16 %v2720
    %v2793 = vunpack.c.l.b16 %v2721
    %v2794 = vunpack.c.h.b16 %v2721
    %v2795 = vunpack.c.l.b16 %v2722
    %v2796 = vunpack.c.h.b16 %v2722
    %v2797 = vunpack.c.l.b16 %v2723
    %v2798 = vunpack.c.h.b16 %v2723
    %v2799 = vunpack.c.l.b16 %v2724
    %v2800 = vunpack.c.h.b16 %v2724
    %v2801 = vunpack.c.l.b16 %v2725
    %v2802 = vunpack.c.h.b16 %v2725
    %v2803 = vunpack.c.l.b16 %v2726
    %v2804 = vunpack.c.h.b16 %v2726
    %v2805 = vunpack.c.l.b16 %v2727
    %v2806 = vunpack.c.h.b16 %v2727
    %v2807 = vunpack.c.l.b16 %v2728
    %v2808 = vunpack.c.h.b16 %v2728
    %v2809 = vunpack.c.l.b16 %v2729
    %v2810 = vunpack.c.h.b16 %v2729
    %v2811 = vunpack.c.l.b16 %v2730
    %v2812 = vunpack.c.h.b16 %v2730
    %v2813 = vunpack.c.l.b16 %v2731
    %v2814 = vunpack.c.h.b16 %v2731
    %v2815 = vunpack.c.l.b16 %v2732
    %v2816 = vunpack.c.h.b16 %v2732
    %v2817 = vunpack.c.l.b16 %v2733
    %v2818 = vunpack.c.h.b16 %v2733
    %v2819 = vunpack.c.l.b16 %v2734
    %v2820 = vunpack.c.h.b16 %v2734
    %v2821 = vunpack.c.l.b16 %v2735
    %v2822 = vunpack.c.h.b16 %v2735
    %v2823 = vunpack.c.l.b16 %v2736
    %v2824 = vunpack.c.h.b16 %v2736
    %v2825 = vunpack.c.l.b16 %v2737
    %v2826 = vunpack.c.h.b16 %v2737
    %v2827 = vunpack.c.l.b16 %v2738
    %v2828 = vunpack.c.h.b16 %v2738
    %v2829 = vunpack.c.l.b16 %v2739
    %v2830 = vunpack.c.h.b16 %v2739
    %v2831 = vunpack.c.l.b16 %v2740
    %v2832 = vunpack.c.h.b16 %v2740
    %v2833 = vunpack.c.l.b16 %v2741
    %v2834 = vunpack.c.h.b16 %v2741
    %v2835 = vunpack.c.l.b16 %v2742
    %v2836 = vunpack.c.h.b16 %v2742
    %v2837 = vunpack.c.l.b16 %v2743
    %v2838 = vunpack.c.h.b16 %v2743
    %v2839 = vunpack.c.l.b16 %v2744
    %v2840 = vunpack.c.h.b16 %v2744
    %v2841 = vpack.c.b16 %v2781, %v2777
    %v2842 = vpack.c.b16 %v2782, %v2778
    %v2843 = vpack.c.b16 %v2783, %v2779
    %v2844 = vpack.c.b16 %v2784, %v2780
    %v2845 = vpack.c.b16 %v2789, %v2785
    %v2846 = vpack.c.b16 %v2790, %v2786
    %v2847 = vpack.c.b16 %v2791, %v2787
    %v2848 = vpack.c.b16 %v2792, %v2788
    %v2849 = vpack.c.b16 %v2797, %v2793
    %v2850 = vpack.c.b16 %v2798, %v2794
    %v2851 = vpack.c.b16 %v2799, %v2795
    %v2852 = vpack.c.b16 %v2800, %v2796
    %v2853 = vpack.c.b16 %v2805, %v2801
    %v2854 = vpack.c.b16 %v2806, %v2802
    %v2855 = vpack.c.b16 %v2807, %v2803
    %v2856 = vpack.c.b16 %v2808, %v2804
    %v2857 = vpack.c.b16 %v2813, %v2809
    %v2858 = vpack.c.b16 %v2814, %v2810
    %v2859 = vpack.c.b16 %v2815, %v2811
    %v2860 = vpack.c.b16 %v2816, %v2812
    %v2861 = vpack.c.b16 %v2821, %v2817
    %v2862 = vpack.c.b16 %v2822, %v2818
    %v2863 = vpack.c.b16 %v2823, %v2819
    %v2864 = vpack.c.b16 %v2824, %v2820
    %v2865 = vpack.c.b16 %v2829, %v2825
    %v2866 = vpack.c.b16 %v2830, %v2826
    %v2867 = vpack.c.b16 %v2831, %v2827
    %v2868 = vpack.c.b16 %v2832, %v2828
    %v2869 = vpack.c.b16 %v2837, %v2833
    %v2870 = vpack.c.b16 %v2838, %v2834
    %v2871 = vpack.c.b16 %v2839, %v2835
    %v2872 = vpack.c.b16 %v2840, %v2836
    %2905 = vmatprep.subr.bf16.mxu0 %v2870
    %2906 = vmatpush1.bf16.msra.mxu0 %v2869
    %2907 = vmatprep.subr.bf16.mxu0 %v2866
    %2908 = vmatpush1.bf16.msra.mxu0 %v2865
    %2909 = vmatprep.subr.bf16.mxu0 %v2862
    %2910 = vmatpush1.bf16.msra.mxu0 %v2861
    %2911 = vmatprep.subr.bf16.mxu0 %v2858
    %2912 = vmatpush1.bf16.msra.mxu0 %v2857
    %2913 = vmatprep.subr.bf16.mxu0 %v2854
    %2914 = vmatpush1.bf16.msra.mxu0 %v2853
    %2915 = vmatprep.subr.bf16.mxu0 %v2850
    %2916 = vmatpush1.bf16.msra.mxu0 %v2849
    %2917 = vmatprep.subr.bf16.mxu0 %v2846
    %2918 = vmatpush1.bf16.msra.mxu0 %v2845
    %2919 = vmatprep.subr.bf16.mxu0 %v2842
    %2920 = vmatpush1.bf16.msra.mxu0 %v2841
    %2921 = vmatprep.subr.bf16.mxu0 0
    %2922 = vmatpush2.bf16.msra.mxu0 0
    %2923 = vmatprep.subr.bf16.mxu0 0
    %2924 = vmatpush2.bf16.msra.mxu0 0
    %2925 = vmatprep.subr.bf16.mxu0 0
    %2926 = vmatpush2.bf16.msra.mxu0 0
    %2927 = vmatprep.subr.bf16.mxu0 0
    %2928 = vmatpush2.bf16.msra.mxu0 0
    %2929 = vmatprep.subr.bf16.mxu0 0
    %2930 = vmatpush2.bf16.msra.mxu0 0
    %2931 = vmatprep.subr.bf16.mxu0 0
    %2932 = vmatpush2.bf16.msra.mxu0 0
    %2933 = vmatprep.subr.bf16.mxu0 0
    %2934 = vmatpush2.bf16.msra.mxu0 0
    %2935 = vmatprep.subr.bf16.mxu0 0
    %2936 = vmatpush2.bf16.msra.mxu0 0
    %2937 = vmatprep.mubr.bf16.mxu0 0
    %2938 = vmatmul.mubr.bf16.gmra.mxu0 %v2712
    %v2939 = vpop.f32.mrf.mxu0
    %v2940 = vadd.f32 0.0, %v2939
    %v2941 = vpop.f32.mrf.mxu0
    %v2942 = vadd.f32 0.0, %v2941
    %v2943 = vpop.f32.mrf.mxu0
    %v2944 = vpop.f32.mrf.mxu0
    %2945 = vdwg.mxu0
    %2946 = vmatprep.subr.bf16.mxu0 %v2872
    %2947 = vmatpush1.bf16.msra.mxu0 %v2871
    %2948 = vmatprep.subr.bf16.mxu0 %v2868
    %2949 = vmatpush1.bf16.msra.mxu0 %v2867
    %2950 = vmatprep.subr.bf16.mxu0 %v2864
    %2951 = vmatpush1.bf16.msra.mxu0 %v2863
    %2952 = vmatprep.subr.bf16.mxu0 %v2860
    %2953 = vmatpush1.bf16.msra.mxu0 %v2859
    %2954 = vmatprep.subr.bf16.mxu0 %v2856
    %2955 = vmatpush1.bf16.msra.mxu0 %v2855
    %2956 = vmatprep.subr.bf16.mxu0 %v2852
    %2957 = vmatpush1.bf16.msra.mxu0 %v2851
    %2958 = vmatprep.subr.bf16.mxu0 %v2848
    %2959 = vmatpush1.bf16.msra.mxu0 %v2847
    %2960 = vmatprep.subr.bf16.mxu0 %v2844
    %2961 = vmatpush1.bf16.msra.mxu0 %v2843
    %2962 = vmatprep.subr.bf16.mxu0 0
    %2963 = vmatpush2.bf16.msra.mxu0 0
    %2964 = vmatprep.subr.bf16.mxu0 0
    %2965 = vmatpush2.bf16.msra.mxu0 0
    %2966 = vmatprep.subr.bf16.mxu0 0
    %2967 = vmatpush2.bf16.msra.mxu0 0
    %2968 = vmatprep.subr.bf16.mxu0 0
    %2969 = vmatpush2.bf16.msra.mxu0 0
    %2970 = vmatprep.subr.bf16.mxu0 0
    %2971 = vmatpush2.bf16.msra.mxu0 0
    %2972 = vmatprep.subr.bf16.mxu0 0
    %2973 = vmatpush2.bf16.msra.mxu0 0
    %2974 = vmatprep.subr.bf16.mxu0 0
    %2975 = vmatpush2.bf16.msra.mxu0 0
    %2976 = vmatprep.subr.bf16.mxu0 0
    %2977 = vmatpush2.bf16.msra.mxu0 0
    %2978 = vmatprep.mubr.bf16.mxu0 0
    %2979 = vmatmul.mubr.bf16.gmra.mxu0 %v2712
    %v2980 = vpop.f32.mrf.mxu0
    %v2981 = vadd.f32 0.0, %v2980
    %v2982 = vpop.f32.mrf.mxu0
    %v2983 = vadd.f32 0.0, %v2982
    %v2984 = vpop.f32.mrf.mxu0
    %v2985 = vpop.f32.mrf.mxu0
    %2986 = vdwg.mxu0
    %v2987 = vadd.f32 %v1171, %v2940
    %v2988 = vadd.f32 %v1175, %v2942
    %v2989 = vadd.f32 %v1179, %v2981
    %v2990 = vadd.f32 %v1183, %v2983
    %v2991 = vxor.u32 %v2987, 2147483648
    %v2992 = vmul.f32 %v2991, 1.442695
    %v2993 = vpow.pop %v2992
    %v2994 = vadd.f32 %v2993, 1.0
    %v2995 = vrcp.pop %v2994
    %v2996 = vmul.f32 1.0, %v2995
    %v2997 = vxor.u32 %v2988, 2147483648
    %v2998 = vmul.f32 %v2997, 1.442695
    %v2999 = vpow.pop %v2998
    %v3000 = vadd.f32 %v2999, 1.0
    %v3001 = vrcp.pop %v3000
    %v3002 = vmul.f32 1.0, %v3001
    %v3003 = vtanh.pop %v2989
    %v3004 = vxor.u32 %v2990, 2147483648
    %v3005 = vmul.f32 %v3004, 1.442695
    %v3006 = vpow.pop %v3005
    %v3007 = vadd.f32 %v3006, 1.0
    %v3008 = vrcp.pop %v3007
    %v3009 = vmul.f32 1.0, %v3008
    %v3010 = vmul.f32 %v3002, %v2707
    %v3011 = vmul.f32 %v2996, %v3003
    %v3012 = vadd.f32 %v3010, %v3011
    %v3013 = vtanh.pop %v3012
    %v3014 = vmul.f32 %v3009, %v3013
    %s3015 = scalar_lea.vmem %s4, 40
    %3016 = vst [vmem:[%s3015] sm:$0xff] %v3014
  $region25: #{seq2seq_lstm.1} parent=0 // pred_fallthru
    _
  // Predicated region
  $region26: #{seq2seq_lstm.1} parent=0 // pred_check
    _
  $region27: #{seq2seq_lstm.1} parent=0 // pred_check_branch
    %3018 = sbr.rel (0) target = $region29
  $region28: #{seq2seq_lstm.1} parent=0 // pred_region
    _
  $region29: #{seq2seq_lstm.1} parent=0 // pred_fallthru
    _
  // Predicated region
  $region30: #{seq2seq_lstm.1} parent=0 // pred_check
    _
  $region31: #{seq2seq_lstm.1} parent=0 // pred_check_branch
    %3020 = sbr.rel (0) target = $region33
  $region32: #{seq2seq_lstm.1} parent=0 // pred_region
    _
  $region33: #{seq2seq_lstm.1} parent=0 // pred_fallthru
    _

</llo_original>
